<compile_context>
chip_gen: v7x
topology: tpu7x:2x2x1
jax: 0.10.0
libtpu: 0.0.40
codegen_flags: <defaults>
</compile_context>

<pallas_src>
import math

import jax
import jax.numpy as jnp
from jax import lax
from jax.experimental import pallas as pl
from jax.experimental.pallas import tpu as pltpu


# ----------------------------------------------------------------------------- #
# Kernel: one (direction d, time-tile i) grid step of one bidirectional LSTM(P)
# layer.
#   x_ref:   (TT, B, E_in)  input tile (time-major); for d==1 this is tile N-1-i
#   wih_ref: (E_in, 4H)     input->gates weights, gate order [i|f|o|g]
#   whh_ref: (P, 4H)        projected-hidden->gates weights
#   whr_ref: (H, P)         projection weights
#   b_ref:   (1, 4H)        b_ih + b_hh (combined, reordered)
# Outputs:
#   y_ref:   (TT, B, P)     per-timestep projected hidden state for this tile
#   hn_ref:  (B, P)         final projected hidden state (written at last tile)
#   cn_ref:  (B, H)         final cell state               (written at last tile)
# Scratch:
#   h_sc (B,P), c_sc (B,H)  recurrent carry across time tiles
#   xg_sc (TT, B, 4H)       hoisted input-gates for the tile
# ----------------------------------------------------------------------------- #
def bilstm_layer_kernel(x_ref, wih_ref, whh_ref, whr_ref, b_ref,
                        y_ref, hn_ref, cn_ref,
                        h_sc, c_sc, xg_sc):
    d = pl.program_id(0)            # 0 = forward, 1 = reverse
    i = pl.program_id(1)            # time-tile index within this direction
    n_t = pl.num_programs(1)

    TT, B, E_in = x_ref.shape
    H = whr_ref.shape[0]
    P = whr_ref.shape[1]

    # (Re)initialize the recurrent carry at the start of each direction's sweep.
    @pl.when(i == 0)
    def _():
        h_sc[...] = jnp.zeros_like(h_sc)
        c_sc[...] = jnp.zeros_like(c_sc)

    # Hoisted input->gates matmul for the whole tile (one big MXU matmul),
    # bias folded in once per tile instead of once per step.
    x2d = x_ref[...].reshape(TT * B, E_in)
    xg = jnp.dot(x2d, wih_ref[...], preferred_element_type=jnp.float32) + b_ref[...]
    xg_sc[...] = xg.reshape(TT, B, 4 * H)

    # Reverse direction walks the tile backwards (tt = TT-1 .. 0).
    base = d * (TT - 1)
    step_sign = 1 - 2 * d

    w_hh = whh_ref[...]             # (P, 4H)
    w_hr = whr_ref[...]             # (H, P)

    def step(s, carry):
        h, c = carry                # h: (B, P) f32, c: (B, H) f32
        tt = base + s * step_sign
        gates = xg_sc[tt] + jnp.dot(h, w_hh, preferred_element_type=jnp.float32)
        act = jax.nn.sigmoid(gates[:, :3 * H])     # [i|f|o] — one wide sigmoid
        g_g = jnp.tanh(gates[:, 3 * H:])           # g gate
        i_g = act[:, 0 * H:1 * H]
        f_g = act[:, 1 * H:2 * H]
        o_g = act[:, 2 * H:3 * H]
        c_new = f_g * c + i_g * g_g
        h_pre = o_g * jnp.tanh(c_new)              # (B, H)
        h_new = jnp.dot(h_pre, w_hr,
                        preferred_element_type=jnp.float32)   # (B, P) projection
        y_ref[tt] = h_new.astype(y_ref.dtype)
        return h_new, c_new

    unroll = TT if TT <= 16 else 8
    h_T, c_T = lax.fori_loop(0, TT, step, (h_sc[...], c_sc[...]), unroll=unroll)
    h_sc[...] = h_T
    c_sc[...] = c_T

    # Final states: reverse direction ends after processing t == 0, which is the
    # last grid step for that direction — matches PyTorch h_n / c_n semantics.
    @pl.when(i == n_t - 1)
    def _():
        hn_ref[...] = h_T.astype(hn_ref.dtype)
        cn_ref[...] = c_T.astype(cn_ref.dtype)


def _pick_time_tile(T, cap=64):
    tt = min(T, cap)
    while T % tt:
        tt -= 1
    return tt


def bilstm_layer(x_tm, w_ih, w_hh, w_hr, b):
    """One bidirectional LSTM(P) layer.

    x_tm: (T, B, E_in) time-major input.
    Weights stacked over direction (forward=0, reverse=1), pre-transposed,
    gates ordered [i|f|o|g]:
      w_ih (2, E_in, 4H), w_hh (2, P, 4H), w_hr (2, H, P), b (2, 1, 4H)
    Returns: y (2, T, B, P), h_n (2, B, P), c_n (2, B, H)
    """
    T, B, E_in = x_tm.shape
    H = w_hr.shape[1]
    P = w_hr.shape[2]
    H4 = 4 * H
    TT = _pick_time_tile(T)
    N = T // TT

    def t_block(d, i):
        # d == 0 -> i ; d == 1 -> N-1-i   (reverse direction walks tiles backwards)
        return i + d * (N - 1 - 2 * i)

    y, h_n, c_n = pl.pallas_call(
        bilstm_layer_kernel,
        grid=(2, N),
        in_specs=[
            pl.BlockSpec((TT, B, E_in), lambda d, i: (t_block(d, i), 0, 0)),
            pl.BlockSpec((None, E_in, H4), lambda d, i: (d, 0, 0)),
            pl.BlockSpec((None, P, H4), lambda d, i: (d, 0, 0)),
            pl.BlockSpec((None, H, P), lambda d, i: (d, 0, 0)),
            pl.BlockSpec((None, 1, H4), lambda d, i: (d, 0, 0)),
        ],
        out_specs=(
            pl.BlockSpec((None, TT, B, P), lambda d, i: (d, t_block(d, i), 0, 0)),
            pl.BlockSpec((None, B, P), lambda d, i: (d, 0, 0)),
            pl.BlockSpec((None, B, H), lambda d, i: (d, 0, 0)),
        ),
        out_shape=(
            jax.ShapeDtypeStruct((2, T, B, P), jnp.float32),
            jax.ShapeDtypeStruct((2, B, P), jnp.float32),
            jax.ShapeDtypeStruct((2, B, H), jnp.float32),
        ),
        scratch_shapes=[
            pltpu.VMEM((B, P), jnp.float32),        # h carry
            pltpu.VMEM((B, H), jnp.float32),        # c carry
            pltpu.VMEM((TT, B, H4), jnp.float32),   # hoisted input gates
        ],
        compiler_params=pltpu.CompilerParams(
            dimension_semantics=("parallel", "arbitrary"),
            vmem_limit_bytes=32 * 1024 * 1024,
        ),
    )(x_tm, w_ih, w_hh, w_hr, b)
    return y, h_n, c_n


def audio_encoder_forward(x, params):
    """Equivalent of AudioEncoder.forward (eval semantics).

    x: (B, T, E) -> (output (B, T, 2P), (h_n (2L, B, P), c_n (2L, B, H)))
    """
    x_tm = jnp.transpose(x, (1, 0, 2))      # (T, B, E) time-major
    T, B, _ = x_tm.shape
    h_all, c_all = [], []
    layer_in = x_tm
    for p in params:
        y, h_n, c_n = bilstm_layer(layer_in, p["w_ih"], p["w_hh"], p["w_hr"], p["b"])
        P = y.shape[-1]
        # (2, T, B, P) -> (T, B, 2P) == concat([forward, reverse], axis=-1)
        layer_in = jnp.transpose(y, (1, 2, 0, 3)).reshape(T, B, 2 * P)
        h_all.append(h_n)
        c_all.append(c_n)
        # TODO(synk): inter-layer dropout (p=0.1) is a train-mode-only op; eval semantics here.
    out = jnp.transpose(layer_in, (1, 0, 2))        # (B, T, 2P)
    return out, (jnp.concatenate(h_all, axis=0), jnp.concatenate(c_all, axis=0))


def _reorder_gates(w, H):
    # PyTorch gate layout [i|f|g|o] -> kernel layout [i|f|o|g] along axis 0.
    return jnp.concatenate([w[:2 * H], w[3 * H:4 * H], w[2 * H:3 * H]], axis=0)


def init_params(key, embedding_dim, num_layers):
    """Deterministic init matching PyTorch LSTM parameter shapes (proj_size > 0),
    stored pre-transposed / gate-reordered / direction-stacked for the kernel."""
    H = embedding_dim // 4
    P = embedding_dim // 8
    k = 1.0 / math.sqrt(H)
    params = []
    for l in range(num_layers):
        in_dim = embedding_dim if l == 0 else 2 * P
        w_ih, w_hh, w_hr, bias = [], [], [], []
        for _direction in range(2):     # 0 = forward, 1 = reverse
            key, k0, k1, k2, k3, k4 = jax.random.split(key, 6)
            wi = jax.random.uniform(k0, (4 * H, in_dim), jnp.float32, -k, k)
            wh = jax.random.uniform(k1, (4 * H, P), jnp.float32, -k, k)
            wr = jax.random.uniform(k2, (P, H), jnp.float32, -k, k)
            b_ih = jax.random.uniform(k3, (4 * H,), jnp.float32, -k, k)
            b_hh = jax.random.uniform(k4, (4 * H,), jnp.float32, -k, k)
            w_ih.append(_reorder_gates(wi, H).T)                    # (in_dim, 4H)
            w_hh.append(_reorder_gates(wh, H).T)                    # (P, 4H)
            w_hr.append(wr.T)                                       # (H, P)
            bias.append(_reorder_gates(b_ih + b_hh, H).reshape(1, 4 * H))
        params.append({
            "w_ih": jnp.stack(w_ih, axis=0),    # (2, in_dim, 4H)
            "w_hh": jnp.stack(w_hh, axis=0),    # (2, P, 4H)
            "w_hr": jnp.stack(w_hr, axis=0),    # (2, H, P)
            "b":    jnp.stack(bias, axis=0),    # (2, 1, 4H)
        })
    return params


if __name__ == "__main__":
    # Small, module-consistent shapes: embedding_dim=128 -> hidden=32, proj=16.
    EMBED = 128
    NUM_LAYERS = 4
    B, T = 2, 8

    key = jax.random.PRNGKey(0)
    key, kx = jax.random.split(key)
    x = jax.random.normal(kx, (B, T, EMBED), jnp.float32)
    params = init_params(key, EMBED, NUM_LAYERS)

    fwd = jax.jit(audio_encoder_forward)
    out, (h_n, c_n) = fwd(x, params)
    jax.block_until_ready((out, h_n, c_n))

    H = EMBED // 4
    P = EMBED // 8
    assert out.shape == (B, T, 2 * P)
    assert h_n.shape == (2 * NUM_LAYERS, B, P)
    assert c_n.shape == (2 * NUM_LAYERS, B, H)
    assert bool(jnp.all(jnp.isfinite(out)))
    assert bool(jnp.all(jnp.isfinite(h_n))) and bool(jnp.all(jnp.isfinite(c_n)))
    print("KERNEL_OK")
</pallas_src>

<mosaic_0001>
module attributes {stable_mosaic.version = 11 : i64} {
  func.func @bilstm_layer_kernel(%arg0: i32, %arg1: i32, %arg2: memref<8x2x128xf32, #tpu.memory_space<vmem>>, %arg3: memref<1x128x128xf32, #tpu.memory_space<vmem>>, %arg4: memref<1x16x128xf32, #tpu.memory_space<vmem>>, %arg5: memref<1x32x16xf32, #tpu.memory_space<vmem>>, %arg6: memref<1x1x128xf32, #tpu.memory_space<vmem>>, %arg7: memref<1x8x2x16xf32, #tpu.memory_space<vmem>>, %arg8: memref<1x2x16xf32, #tpu.memory_space<vmem>>, %arg9: memref<1x2x32xf32, #tpu.memory_space<vmem>>, %arg10: memref<2x16xf32, #tpu.memory_space<vmem>>, %arg11: memref<2x32xf32, #tpu.memory_space<vmem>>, %arg12: memref<8x2x128xf32, #tpu.memory_space<vmem>>) attributes {dimension_semantics = [#tpu.dimension_semantics<parallel>, #tpu.dimension_semantics<arbitrary>], iteration_bounds = array<i64: 2, 1>, scalar_prefetch = 0 : i64, scratch_operands = 3 : i64, tpu.core_type = #tpu.core_type<tc>, window_params = [{transform_indices = @transform_0, window_bounds = array<i64: 8, 2, 128>}, {transform_indices = @transform_1, window_bounds = array<i64: 1, 128, 128>}, {transform_indices = @transform_2, window_bounds = array<i64: 1, 16, 128>}, {transform_indices = @transform_3, window_bounds = array<i64: 1, 32, 16>}, {transform_indices = @transform_4, window_bounds = array<i64: 1, 1, 128>}, {transform_indices = @transform_5, window_bounds = array<i64: 1, 8, 2, 16>}, {transform_indices = @transform_6, window_bounds = array<i64: 1, 2, 16>}, {transform_indices = @transform_7, window_bounds = array<i64: 1, 2, 32>}]} {
    %c0_i32 = arith.constant 0 : i32
    %0 = arith.cmpi eq, %arg1, %c0_i32 : i32
    %1 = arith.extui %0 : i1 to i32
    %c0_i32_0 = arith.constant 0 : i32
    %2 = arith.cmpi ne, %1, %c0_i32_0 : i32
    scf.if %2 {
      %cst_96 = arith.constant 0.000000e+00 : f32
      %252 = vector.broadcast %cst_96 : f32 to vector<2x16xf32>
      %c0_97 = arith.constant 0 : index
      %c0_98 = arith.constant 0 : index
      %253 = vector.load %arg10[%c0_97, %c0_98] : memref<2x16xf32, #tpu.memory_space<vmem>>, vector<2x16xf32>
      tpu.vector_store %arg10[%c0_97, %c0_98], %252 {strides = array<i32>} : memref<2x16xf32, #tpu.memory_space<vmem>>, vector<2x16xf32>,
      %cst_99 = arith.constant 0.000000e+00 : f32
      %254 = vector.broadcast %cst_99 : f32 to vector<2x32xf32>
      %c0_100 = arith.constant 0 : index
      %c0_101 = arith.constant 0 : index
      %255 = vector.load %arg11[%c0_100, %c0_101] : memref<2x32xf32, #tpu.memory_space<vmem>>, vector<2x32xf32>
      tpu.vector_store %arg11[%c0_100, %c0_101], %254 {strides = array<i32>} : memref<2x32xf32, #tpu.memory_space<vmem>>, vector<2x32xf32>,
    } else {
    }
    %c0 = arith.constant 0 : index
    %c0_1 = arith.constant 0 : index
    %c0_2 = arith.constant 0 : index
    %3 = vector.load %arg2[%c0, %c0_1, %c0_2] : memref<8x2x128xf32, #tpu.memory_space<vmem>>, vector<8x2x128xf32>
    %4 = vector.shape_cast %3 : vector<8x2x128xf32> to vector<16x128xf32>
    %c0_3 = arith.constant 0 : index
    %c0_4 = arith.constant 0 : index
    %c0_5 = arith.constant 0 : index
    %5 = vector.load %arg3[%c0_3, %c0_4, %c0_5] : memref<1x128x128xf32, #tpu.memory_space<vmem>>, vector<1x128x128xf32>
    %6 = vector.shape_cast %5 : vector<1x128x128xf32> to vector<128x128xf32>
    %cst = arith.constant dense<0.000000e+00> : vector<16x128xf32>
    %7 = tpu.matmul %4, %6, %cst {dimension_numbers = #tpu.dot_dimension_numbers<[1], [0], [0], [1], [0, 0, 1, 1], [], []>} : vector<16x128xf32>, vector<128x128xf32>, vector<16x128xf32> -> vector<16x128xf32>
    %c0_6 = arith.constant 0 : index
    %c0_7 = arith.constant 0 : index
    %c0_8 = arith.constant 0 : index
    %8 = vector.load %arg6[%c0_6, %c0_7, %c0_8] : memref<1x1x128xf32, #tpu.memory_space<vmem>>, vector<1x1x128xf32>
    %9 = vector.shape_cast %8 : vector<1x1x128xf32> to vector<1x128xf32>
    %10 = vector.broadcast %9 : vector<1x128xf32> to vector<16x128xf32>
    %11 = arith.addf %7, %10 : vector<16x128xf32>
    %12 = vector.shape_cast %11 : vector<16x128xf32> to vector<8x2x128xf32>
    %c0_9 = arith.constant 0 : index
    %c0_10 = arith.constant 0 : index
    %c0_11 = arith.constant 0 : index
    %13 = vector.load %arg12[%c0_9, %c0_10, %c0_11] : memref<8x2x128xf32, #tpu.memory_space<vmem>>, vector<8x2x128xf32>
    tpu.vector_store %arg12[%c0_9, %c0_10, %c0_11], %12 {strides = array<i32>} : memref<8x2x128xf32, #tpu.memory_space<vmem>>, vector<8x2x128xf32>,
    %c7_i32 = arith.constant 7 : i32
    %14 = arith.muli %arg0, %c7_i32 : i32
    %c2_i32 = arith.constant 2 : i32
    %15 = arith.muli %c2_i32, %arg0 : i32
    %c1_i32 = arith.constant 1 : i32
    %16 = arith.subi %c1_i32, %15 : i32
    %c0_12 = arith.constant 0 : index
    %c0_13 = arith.constant 0 : index
    %c0_14 = arith.constant 0 : index
    %17 = vector.load %arg4[%c0_12, %c0_13, %c0_14] : memref<1x16x128xf32, #tpu.memory_space<vmem>>, vector<1x16x128xf32>
    %18 = vector.shape_cast %17 : vector<1x16x128xf32> to vector<16x128xf32>
    %c0_15 = arith.constant 0 : index
    %c0_16 = arith.constant 0 : index
    %c0_17 = arith.constant 0 : index
    %19 = vector.load %arg5[%c0_15, %c0_16, %c0_17] : memref<1x32x16xf32, #tpu.memory_space<vmem>>, vector<1x32x16xf32>
    %20 = vector.shape_cast %19 : vector<1x32x16xf32> to vector<32x16xf32>
    %c0_18 = arith.constant 0 : index
    %c0_19 = arith.constant 0 : index
    %21 = vector.load %arg10[%c0_18, %c0_19] : memref<2x16xf32, #tpu.memory_space<vmem>>, vector<2x16xf32>
    %c0_20 = arith.constant 0 : index
    %c0_21 = arith.constant 0 : index
    %22 = vector.load %arg11[%c0_20, %c0_21] : memref<2x32xf32, #tpu.memory_space<vmem>>, vector<2x32xf32>
    %c0_i32_22 = arith.constant 0 : i32
    %23 = arith.muli %c0_i32_22, %16 : i32
    %24 = arith.addi %14, %23 : i32
    %25 = arith.index_cast %24 : i32 to index
    %c0_23 = arith.constant 0 : index
    %c0_24 = arith.constant 0 : index
    %26 = vector.load %arg12[%25, %c0_23, %c0_24] : memref<8x2x128xf32, #tpu.memory_space<vmem>>, vector<1x2x128xf32>
    %27 = vector.shape_cast %26 : vector<1x2x128xf32> to vector<2x128xf32>
    %cst_25 = arith.constant dense<0.000000e+00> : vector<2x128xf32>
    %28 = tpu.matmul %21, %18, %cst_25 {dimension_numbers = #tpu.dot_dimension_numbers<[1], [0], [0], [1], [0, 0, 1, 1], [], []>} : vector<2x16xf32>, vector<16x128xf32>, vector<2x128xf32> -> vector<2x128xf32>
    %29 = arith.addf %27, %28 : vector<2x128xf32>
    %30 = vector.extract_strided_slice %29 {offsets = [0, 0], sizes = [2, 96], strides = [1, 1]} : vector<2x128xf32> to vector<2x96xf32>
    %31 = arith.negf %30 : vector<2x96xf32>
    %32 = math.exp %31 : vector<2x96xf32>
    %cst_26 = arith.constant 1.000000e+00 : f32
    %33 = vector.broadcast %cst_26 : f32 to vector<2x96xf32>
    %34 = arith.addf %33, %32 : vector<2x96xf32>
    %35 = arith.divf %33, %34 : vector<2x96xf32>
    %36 = vector.extract_strided_slice %29 {offsets = [0, 96], sizes = [2, 32], strides = [1, 1]} : vector<2x128xf32> to vector<2x32xf32>
    %37 = math.tanh %36 : vector<2x32xf32>
    %38 = vector.extract_strided_slice %35 {offsets = [0, 0], sizes = [2, 32], strides = [1, 1]} : vector<2x96xf32> to vector<2x32xf32>
    %39 = vector.extract_strided_slice %35 {offsets = [0, 32], sizes = [2, 32], strides = [1, 1]} : vector<2x96xf32> to vector<2x32xf32>
    %40 = vector.extract_strided_slice %35 {offsets = [0, 64], sizes = [2, 32], strides = [1, 1]} : vector<2x96xf32> to vector<2x32xf32>
    %41 = arith.mulf %39, %22 : vector<2x32xf32>
    %42 = arith.mulf %38, %37 : vector<2x32xf32>
    %43 = arith.addf %41, %42 : vector<2x32xf32>
    %44 = math.tanh %43 : vector<2x32xf32>
    %45 = arith.mulf %40, %44 : vector<2x32xf32>
    %cst_27 = arith.constant dense<0.000000e+00> : vector<2x16xf32>
    %46 = tpu.matmul %45, %20, %cst_27 {dimension_numbers = #tpu.dot_dimension_numbers<[1], [0], [0], [1], [0, 0, 1, 1], [], []>} : vector<2x32xf32>, vector<32x16xf32>, vector<2x16xf32> -> vector<2x16xf32>
    %c0_28 = arith.constant 0 : index
    %47 = arith.index_cast %24 : i32 to index
    %c0_29 = arith.constant 0 : index
    %c0_30 = arith.constant 0 : index
    %48 = vector.load %arg7[%c0_28, %47, %c0_29, %c0_30] : memref<1x8x2x16xf32, #tpu.memory_space<vmem>>, vector<1x1x2x16xf32>
    %49 = vector.shape_cast %48 : vector<1x1x2x16xf32> to vector<2x16xf32>
    %50 = vector.shape_cast %46 : vector<2x16xf32> to vector<1x1x2x16xf32>
    tpu.vector_store %arg7[%c0_28, %47, %c0_29, %c0_30], %50 {strides = array<i32>} : memref<1x8x2x16xf32, #tpu.memory_space<vmem>>, vector<1x1x2x16xf32>,
    %c1_i32_31 = arith.constant 1 : i32
    %51 = arith.muli %c1_i32_31, %16 : i32
    %52 = arith.addi %14, %51 : i32
    %53 = arith.index_cast %52 : i32 to index
    %c0_32 = arith.constant 0 : index
    %c0_33 = arith.constant 0 : index
    %54 = vector.load %arg12[%53, %c0_32, %c0_33] : memref<8x2x128xf32, #tpu.memory_space<vmem>>, vector<1x2x128xf32>
    %55 = vector.shape_cast %54 : vector<1x2x128xf32> to vector<2x128xf32>
    %cst_34 = arith.constant dense<0.000000e+00> : vector<2x128xf32>
    %56 = tpu.matmul %46, %18, %cst_34 {dimension_numbers = #tpu.dot_dimension_numbers<[1], [0], [0], [1], [0, 0, 1, 1], [], []>} : vector<2x16xf32>, vector<16x128xf32>, vector<2x128xf32> -> vector<2x128xf32>
    %57 = arith.addf %55, %56 : vector<2x128xf32>
    %58 = vector.extract_strided_slice %57 {offsets = [0, 0], sizes = [2, 96], strides = [1, 1]} : vector<2x128xf32> to vector<2x96xf32>
    %59 = arith.negf %58 : vector<2x96xf32>
    %60 = math.exp %59 : vector<2x96xf32>
    %cst_35 = arith.constant 1.000000e+00 : f32
    %61 = vector.broadcast %cst_35 : f32 to vector<2x96xf32>
    %62 = arith.addf %61, %60 : vector<2x96xf32>
    %63 = arith.divf %61, %62 : vector<2x96xf32>
    %64 = vector.extract_strided_slice %57 {offsets = [0, 96], sizes = [2, 32], strides = [1, 1]} : vector<2x128xf32> to vector<2x32xf32>
    %65 = math.tanh %64 : vector<2x32xf32>
    %66 = vector.extract_strided_slice %63 {offsets = [0, 0], sizes = [2, 32], strides = [1, 1]} : vector<2x96xf32> to vector<2x32xf32>
    %67 = vector.extract_strided_slice %63 {offsets = [0, 32], sizes = [2, 32], strides = [1, 1]} : vector<2x96xf32> to vector<2x32xf32>
    %68 = vector.extract_strided_slice %63 {offsets = [0, 64], sizes = [2, 32], strides = [1, 1]} : vector<2x96xf32> to vector<2x32xf32>
    %69 = arith.mulf %67, %43 : vector<2x32xf32>
    %70 = arith.mulf %66, %65 : vector<2x32xf32>
    %71 = arith.addf %69, %70 : vector<2x32xf32>
    %72 = math.tanh %71 : vector<2x32xf32>
    %73 = arith.mulf %68, %72 : vector<2x32xf32>
    %cst_36 = arith.constant dense<0.000000e+00> : vector<2x16xf32>
    %74 = tpu.matmul %73, %20, %cst_36 {dimension_numbers = #tpu.dot_dimension_numbers<[1], [0], [0], [1], [0, 0, 1, 1], [], []>} : vector<2x32xf32>, vector<32x16xf32>, vector<2x16xf32> -> vector<2x16xf32>
    %c0_37 = arith.constant 0 : index
    %75 = arith.index_cast %52 : i32 to index
    %c0_38 = arith.constant 0 : index
    %c0_39 = arith.constant 0 : index
    %76 = vector.load %arg7[%c0_37, %75, %c0_38, %c0_39] : memref<1x8x2x16xf32, #tpu.memory_space<vmem>>, vector<1x1x2x16xf32>
    %77 = vector.shape_cast %76 : vector<1x1x2x16xf32> to vector<2x16xf32>
    %78 = vector.shape_cast %74 : vector<2x16xf32> to vector<1x1x2x16xf32>
    tpu.vector_store %arg7[%c0_37, %75, %c0_38, %c0_39], %78 {strides = array<i32>} : memref<1x8x2x16xf32, #tpu.memory_space<vmem>>, vector<1x1x2x16xf32>,
    %c2_i32_40 = arith.constant 2 : i32
    %79 = arith.muli %c2_i32_40, %16 : i32
    %80 = arith.addi %14, %79 : i32
    %81 = arith.index_cast %80 : i32 to index
    %c0_41 = arith.constant 0 : index
    %c0_42 = arith.constant 0 : index
    %82 = vector.load %arg12[%81, %c0_41, %c0_42] : memref<8x2x128xf32, #tpu.memory_space<vmem>>, vector<1x2x128xf32>
    %83 = vector.shape_cast %82 : vector<1x2x128xf32> to vector<2x128xf32>
    %cst_43 = arith.constant dense<0.000000e+00> : vector<2x128xf32>
    %84 = tpu.matmul %74, %18, %cst_43 {dimension_numbers = #tpu.dot_dimension_numbers<[1], [0], [0], [1], [0, 0, 1, 1], [], []>} : vector<2x16xf32>, vector<16x128xf32>, vector<2x128xf32> -> vector<2x128xf32>
    %85 = arith.addf %83, %84 : vector<2x128xf32>
    %86 = vector.extract_strided_slice %85 {offsets = [0, 0], sizes = [2, 96], strides = [1, 1]} : vector<2x128xf32> to vector<2x96xf32>
    %87 = arith.negf %86 : vector<2x96xf32>
    %88 = math.exp %87 : vector<2x96xf32>
    %cst_44 = arith.constant 1.000000e+00 : f32
    %89 = vector.broadcast %cst_44 : f32 to vector<2x96xf32>
    %90 = arith.addf %89, %88 : vector<2x96xf32>
    %91 = arith.divf %89, %90 : vector<2x96xf32>
    %92 = vector.extract_strided_slice %85 {offsets = [0, 96], sizes = [2, 32], strides = [1, 1]} : vector<2x128xf32> to vector<2x32xf32>
    %93 = math.tanh %92 : vector<2x32xf32>
    %94 = vector.extract_strided_slice %91 {offsets = [0, 0], sizes = [2, 32], strides = [1, 1]} : vector<2x96xf32> to vector<2x32xf32>
    %95 = vector.extract_strided_slice %91 {offsets = [0, 32], sizes = [2, 32], strides = [1, 1]} : vector<2x96xf32> to vector<2x32xf32>
    %96 = vector.extract_strided_slice %91 {offsets = [0, 64], sizes = [2, 32], strides = [1, 1]} : vector<2x96xf32> to vector<2x32xf32>
    %97 = arith.mulf %95, %71 : vector<2x32xf32>
    %98 = arith.mulf %94, %93 : vector<2x32xf32>
    %99 = arith.addf %97, %98 : vector<2x32xf32>
    %100 = math.tanh %99 : vector<2x32xf32>
    %101 = arith.mulf %96, %100 : vector<2x32xf32>
    %cst_45 = arith.constant dense<0.000000e+00> : vector<2x16xf32>
    %102 = tpu.matmul %101, %20, %cst_45 {dimension_numbers = #tpu.dot_dimension_numbers<[1], [0], [0], [1], [0, 0, 1, 1], [], []>} : vector<2x32xf32>, vector<32x16xf32>, vector<2x16xf32> -> vector<2x16xf32>
    %c0_46 = arith.constant 0 : index
    %103 = arith.index_cast %80 : i32 to index
    %c0_47 = arith.constant 0 : index
    %c0_48 = arith.constant 0 : index
    %104 = vector.load %arg7[%c0_46, %103, %c0_47, %c0_48] : memref<1x8x2x16xf32, #tpu.memory_space<vmem>>, vector<1x1x2x16xf32>
    %105 = vector.shape_cast %104 : vector<1x1x2x16xf32> to vector<2x16xf32>
    %106 = vector.shape_cast %102 : vector<2x16xf32> to vector<1x1x2x16xf32>
    tpu.vector_store %arg7[%c0_46, %103, %c0_47, %c0_48], %106 {strides = array<i32>} : memref<1x8x2x16xf32, #tpu.memory_space<vmem>>, vector<1x1x2x16xf32>,
    %c3_i32 = arith.constant 3 : i32
    %107 = arith.muli %c3_i32, %16 : i32
    %108 = arith.addi %14, %107 : i32
    %109 = arith.index_cast %108 : i32 to index
    %c0_49 = arith.constant 0 : index
    %c0_50 = arith.constant 0 : index
    %110 = vector.load %arg12[%109, %c0_49, %c0_50] : memref<8x2x128xf32, #tpu.memory_space<vmem>>, vector<1x2x128xf32>
    %111 = vector.shape_cast %110 : vector<1x2x128xf32> to vector<2x128xf32>
    %cst_51 = arith.constant dense<0.000000e+00> : vector<2x128xf32>
    %112 = tpu.matmul %102, %18, %cst_51 {dimension_numbers = #tpu.dot_dimension_numbers<[1], [0], [0], [1], [0, 0, 1, 1], [], []>} : vector<2x16xf32>, vector<16x128xf32>, vector<2x128xf32> -> vector<2x128xf32>
    %113 = arith.addf %111, %112 : vector<2x128xf32>
    %114 = vector.extract_strided_slice %113 {offsets = [0, 0], sizes = [2, 96], strides = [1, 1]} : vector<2x128xf32> to vector<2x96xf32>
    %115 = arith.negf %114 : vector<2x96xf32>
    %116 = math.exp %115 : vector<2x96xf32>
    %cst_52 = arith.constant 1.000000e+00 : f32
    %117 = vector.broadcast %cst_52 : f32 to vector<2x96xf32>
    %118 = arith.addf %117, %116 : vector<2x96xf32>
    %119 = arith.divf %117, %118 : vector<2x96xf32>
    %120 = vector.extract_strided_slice %113 {offsets = [0, 96], sizes = [2, 32], strides = [1, 1]} : vector<2x128xf32> to vector<2x32xf32>
    %121 = math.tanh %120 : vector<2x32xf32>
    %122 = vector.extract_strided_slice %119 {offsets = [0, 0], sizes = [2, 32], strides = [1, 1]} : vector<2x96xf32> to vector<2x32xf32>
    %123 = vector.extract_strided_slice %119 {offsets = [0, 32], sizes = [2, 32], strides = [1, 1]} : vector<2x96xf32> to vector<2x32xf32>
    %124 = vector.extract_strided_slice %119 {offsets = [0, 64], sizes = [2, 32], strides = [1, 1]} : vector<2x96xf32> to vector<2x32xf32>
    %125 = arith.mulf %123, %99 : vector<2x32xf32>
    %126 = arith.mulf %122, %121 : vector<2x32xf32>
    %127 = arith.addf %125, %126 : vector<2x32xf32>
    %128 = math.tanh %127 : vector<2x32xf32>
    %129 = arith.mulf %124, %128 : vector<2x32xf32>
    %cst_53 = arith.constant dense<0.000000e+00> : vector<2x16xf32>
    %130 = tpu.matmul %129, %20, %cst_53 {dimension_numbers = #tpu.dot_dimension_numbers<[1], [0], [0], [1], [0, 0, 1, 1], [], []>} : vector<2x32xf32>, vector<32x16xf32>, vector<2x16xf32> -> vector<2x16xf32>
    %c0_54 = arith.constant 0 : index
    %131 = arith.index_cast %108 : i32 to index
    %c0_55 = arith.constant 0 : index
    %c0_56 = arith.constant 0 : index
    %132 = vector.load %arg7[%c0_54, %131, %c0_55, %c0_56] : memref<1x8x2x16xf32, #tpu.memory_space<vmem>>, vector<1x1x2x16xf32>
    %133 = vector.shape_cast %132 : vector<1x1x2x16xf32> to vector<2x16xf32>
    %134 = vector.shape_cast %130 : vector<2x16xf32> to vector<1x1x2x16xf32>
    tpu.vector_store %arg7[%c0_54, %131, %c0_55, %c0_56], %134 {strides = array<i32>} : memref<1x8x2x16xf32, #tpu.memory_space<vmem>>, vector<1x1x2x16xf32>,
    %c4_i32 = arith.constant 4 : i32
    %135 = arith.muli %c4_i32, %16 : i32
    %136 = arith.addi %14, %135 : i32
    %137 = arith.index_cast %136 : i32 to index
    %c0_57 = arith.constant 0 : index
    %c0_58 = arith.constant 0 : index
    %138 = vector.load %arg12[%137, %c0_57, %c0_58] : memref<8x2x128xf32, #tpu.memory_space<vmem>>, vector<1x2x128xf32>
    %139 = vector.shape_cast %138 : vector<1x2x128xf32> to vector<2x128xf32>
    %cst_59 = arith.constant dense<0.000000e+00> : vector<2x128xf32>
    %140 = tpu.matmul %130, %18, %cst_59 {dimension_numbers = #tpu.dot_dimension_numbers<[1], [0], [0], [1], [0, 0, 1, 1], [], []>} : vector<2x16xf32>, vector<16x128xf32>, vector<2x128xf32> -> vector<2x128xf32>
    %141 = arith.addf %139, %140 : vector<2x128xf32>
    %142 = vector.extract_strided_slice %141 {offsets = [0, 0], sizes = [2, 96], strides = [1, 1]} : vector<2x128xf32> to vector<2x96xf32>
    %143 = arith.negf %142 : vector<2x96xf32>
    %144 = math.exp %143 : vector<2x96xf32>
    %cst_60 = arith.constant 1.000000e+00 : f32
    %145 = vector.broadcast %cst_60 : f32 to vector<2x96xf32>
    %146 = arith.addf %145, %144 : vector<2x96xf32>
    %147 = arith.divf %145, %146 : vector<2x96xf32>
    %148 = vector.extract_strided_slice %141 {offsets = [0, 96], sizes = [2, 32], strides = [1, 1]} : vector<2x128xf32> to vector<2x32xf32>
    %149 = math.tanh %148 : vector<2x32xf32>
    %150 = vector.extract_strided_slice %147 {offsets = [0, 0], sizes = [2, 32], strides = [1, 1]} : vector<2x96xf32> to vector<2x32xf32>
    %151 = vector.extract_strided_slice %147 {offsets = [0, 32], sizes = [2, 32], strides = [1, 1]} : vector<2x96xf32> to vector<2x32xf32>
    %152 = vector.extract_strided_slice %147 {offsets = [0, 64], sizes = [2, 32], strides = [1, 1]} : vector<2x96xf32> to vector<2x32xf32>
    %153 = arith.mulf %151, %127 : vector<2x32xf32>
    %154 = arith.mulf %150, %149 : vector<2x32xf32>
    %155 = arith.addf %153, %154 : vector<2x32xf32>
    %156 = math.tanh %155 : vector<2x32xf32>
    %157 = arith.mulf %152, %156 : vector<2x32xf32>
    %cst_61 = arith.constant dense<0.000000e+00> : vector<2x16xf32>
    %158 = tpu.matmul %157, %20, %cst_61 {dimension_numbers = #tpu.dot_dimension_numbers<[1], [0], [0], [1], [0, 0, 1, 1], [], []>} : vector<2x32xf32>, vector<32x16xf32>, vector<2x16xf32> -> vector<2x16xf32>
    %c0_62 = arith.constant 0 : index
    %159 = arith.index_cast %136 : i32 to index
    %c0_63 = arith.constant 0 : index
    %c0_64 = arith.constant 0 : index
    %160 = vector.load %arg7[%c0_62, %159, %c0_63, %c0_64] : memref<1x8x2x16xf32, #tpu.memory_space<vmem>>, vector<1x1x2x16xf32>
    %161 = vector.shape_cast %160 : vector<1x1x2x16xf32> to vector<2x16xf32>
    %162 = vector.shape_cast %158 : vector<2x16xf32> to vector<1x1x2x16xf32>
    tpu.vector_store %arg7[%c0_62, %159, %c0_63, %c0_64], %162 {strides = array<i32>} : memref<1x8x2x16xf32, #tpu.memory_space<vmem>>, vector<1x1x2x16xf32>,
    %c5_i32 = arith.constant 5 : i32
    %163 = arith.muli %c5_i32, %16 : i32
    %164 = arith.addi %14, %163 : i32
    %165 = arith.index_cast %164 : i32 to index
    %c0_65 = arith.constant 0 : index
    %c0_66 = arith.constant 0 : index
    %166 = vector.load %arg12[%165, %c0_65, %c0_66] : memref<8x2x128xf32, #tpu.memory_space<vmem>>, vector<1x2x128xf32>
    %167 = vector.shape_cast %166 : vector<1x2x128xf32> to vector<2x128xf32>
    %cst_67 = arith.constant dense<0.000000e+00> : vector<2x128xf32>
    %168 = tpu.matmul %158, %18, %cst_67 {dimension_numbers = #tpu.dot_dimension_numbers<[1], [0], [0], [1], [0, 0, 1, 1], [], []>} : vector<2x16xf32>, vector<16x128xf32>, vector<2x128xf32> -> vector<2x128xf32>
    %169 = arith.addf %167, %168 : vector<2x128xf32>
    %170 = vector.extract_strided_slice %169 {offsets = [0, 0], sizes = [2, 96], strides = [1, 1]} : vector<2x128xf32> to vector<2x96xf32>
    %171 = arith.negf %170 : vector<2x96xf32>
    %172 = math.exp %171 : vector<2x96xf32>
    %cst_68 = arith.constant 1.000000e+00 : f32
    %173 = vector.broadcast %cst_68 : f32 to vector<2x96xf32>
    %174 = arith.addf %173, %172 : vector<2x96xf32>
    %175 = arith.divf %173, %174 : vector<2x96xf32>
    %176 = vector.extract_strided_slice %169 {offsets = [0, 96], sizes = [2, 32], strides = [1, 1]} : vector<2x128xf32> to vector<2x32xf32>
    %177 = math.tanh %176 : vector<2x32xf32>
    %178 = vector.extract_strided_slice %175 {offsets = [0, 0], sizes = [2, 32], strides = [1, 1]} : vector<2x96xf32> to vector<2x32xf32>
    %179 = vector.extract_strided_slice %175 {offsets = [0, 32], sizes = [2, 32], strides = [1, 1]} : vector<2x96xf32> to vector<2x32xf32>
    %180 = vector.extract_strided_slice %175 {offsets = [0, 64], sizes = [2, 32], strides = [1, 1]} : vector<2x96xf32> to vector<2x32xf32>
    %181 = arith.mulf %179, %155 : vector<2x32xf32>
    %182 = arith.mulf %178, %177 : vector<2x32xf32>
    %183 = arith.addf %181, %182 : vector<2x32xf32>
    %184 = math.tanh %183 : vector<2x32xf32>
    %185 = arith.mulf %180, %184 : vector<2x32xf32>
    %cst_69 = arith.constant dense<0.000000e+00> : vector<2x16xf32>
    %186 = tpu.matmul %185, %20, %cst_69 {dimension_numbers = #tpu.dot_dimension_numbers<[1], [0], [0], [1], [0, 0, 1, 1], [], []>} : vector<2x32xf32>, vector<32x16xf32>, vector<2x16xf32> -> vector<2x16xf32>
    %c0_70 = arith.constant 0 : index
    %187 = arith.index_cast %164 : i32 to index
    %c0_71 = arith.constant 0 : index
    %c0_72 = arith.constant 0 : index
    %188 = vector.load %arg7[%c0_70, %187, %c0_71, %c0_72] : memref<1x8x2x16xf32, #tpu.memory_space<vmem>>, vector<1x1x2x16xf32>
    %189 = vector.shape_cast %188 : vector<1x1x2x16xf32> to vector<2x16xf32>
    %190 = vector.shape_cast %186 : vector<2x16xf32> to vector<1x1x2x16xf32>
    tpu.vector_store %arg7[%c0_70, %187, %c0_71, %c0_72], %190 {strides = array<i32>} : memref<1x8x2x16xf32, #tpu.memory_space<vmem>>, vector<1x1x2x16xf32>,
    %c6_i32 = arith.constant 6 : i32
    %191 = arith.muli %c6_i32, %16 : i32
    %192 = arith.addi %14, %191 : i32
    %193 = arith.index_cast %192 : i32 to index
    %c0_73 = arith.constant 0 : index
    %c0_74 = arith.constant 0 : index
    %194 = vector.load %arg12[%193, %c0_73, %c0_74] : memref<8x2x128xf32, #tpu.memory_space<vmem>>, vector<1x2x128xf32>
    %195 = vector.shape_cast %194 : vector<1x2x128xf32> to vector<2x128xf32>
    %cst_75 = arith.constant dense<0.000000e+00> : vector<2x128xf32>
    %196 = tpu.matmul %186, %18, %cst_75 {dimension_numbers = #tpu.dot_dimension_numbers<[1], [0], [0], [1], [0, 0, 1, 1], [], []>} : vector<2x16xf32>, vector<16x128xf32>, vector<2x128xf32> -> vector<2x128xf32>
    %197 = arith.addf %195, %196 : vector<2x128xf32>
    %198 = vector.extract_strided_slice %197 {offsets = [0, 0], sizes = [2, 96], strides = [1, 1]} : vector<2x128xf32> to vector<2x96xf32>
    %199 = arith.negf %198 : vector<2x96xf32>
    %200 = math.exp %199 : vector<2x96xf32>
    %cst_76 = arith.constant 1.000000e+00 : f32
    %201 = vector.broadcast %cst_76 : f32 to vector<2x96xf32>
    %202 = arith.addf %201, %200 : vector<2x96xf32>
    %203 = arith.divf %201, %202 : vector<2x96xf32>
    %204 = vector.extract_strided_slice %197 {offsets = [0, 96], sizes = [2, 32], strides = [1, 1]} : vector<2x128xf32> to vector<2x32xf32>
    %205 = math.tanh %204 : vector<2x32xf32>
    %206 = vector.extract_strided_slice %203 {offsets = [0, 0], sizes = [2, 32], strides = [1, 1]} : vector<2x96xf32> to vector<2x32xf32>
    %207 = vector.extract_strided_slice %203 {offsets = [0, 32], sizes = [2, 32], strides = [1, 1]} : vector<2x96xf32> to vector<2x32xf32>
    %208 = vector.extract_strided_slice %203 {offsets = [0, 64], sizes = [2, 32], strides = [1, 1]} : vector<2x96xf32> to vector<2x32xf32>
    %209 = arith.mulf %207, %183 : vector<2x32xf32>
    %210 = arith.mulf %206, %205 : vector<2x32xf32>
    %211 = arith.addf %209, %210 : vector<2x32xf32>
    %212 = math.tanh %211 : vector<2x32xf32>
    %213 = arith.mulf %208, %212 : vector<2x32xf32>
    %cst_77 = arith.constant dense<0.000000e+00> : vector<2x16xf32>
    %214 = tpu.matmul %213, %20, %cst_77 {dimension_numbers = #tpu.dot_dimension_numbers<[1], [0], [0], [1], [0, 0, 1, 1], [], []>} : vector<2x32xf32>, vector<32x16xf32>, vector<2x16xf32> -> vector<2x16xf32>
    %c0_78 = arith.constant 0 : index
    %215 = arith.index_cast %192 : i32 to index
    %c0_79 = arith.constant 0 : index
    %c0_80 = arith.constant 0 : index
    %216 = vector.load %arg7[%c0_78, %215, %c0_79, %c0_80] : memref<1x8x2x16xf32, #tpu.memory_space<vmem>>, vector<1x1x2x16xf32>
    %217 = vector.shape_cast %216 : vector<1x1x2x16xf32> to vector<2x16xf32>
    %218 = vector.shape_cast %214 : vector<2x16xf32> to vector<1x1x2x16xf32>
    tpu.vector_store %arg7[%c0_78, %215, %c0_79, %c0_80], %218 {strides = array<i32>} : memref<1x8x2x16xf32, #tpu.memory_space<vmem>>, vector<1x1x2x16xf32>,
    %c7_i32_81 = arith.constant 7 : i32
    %219 = arith.muli %c7_i32_81, %16 : i32
    %220 = arith.addi %14, %219 : i32
    %221 = arith.index_cast %220 : i32 to index
    %c0_82 = arith.constant 0 : index
    %c0_83 = arith.constant 0 : index
    %222 = vector.load %arg12[%221, %c0_82, %c0_83] : memref<8x2x128xf32, #tpu.memory_space<vmem>>, vector<1x2x128xf32>
    %223 = vector.shape_cast %222 : vector<1x2x128xf32> to vector<2x128xf32>
    %cst_84 = arith.constant dense<0.000000e+00> : vector<2x128xf32>
    %224 = tpu.matmul %214, %18, %cst_84 {dimension_numbers = #tpu.dot_dimension_numbers<[1], [0], [0], [1], [0, 0, 1, 1], [], []>} : vector<2x16xf32>, vector<16x128xf32>, vector<2x128xf32> -> vector<2x128xf32>
    %225 = arith.addf %223, %224 : vector<2x128xf32>
    %226 = vector.extract_strided_slice %225 {offsets = [0, 0], sizes = [2, 96], strides = [1, 1]} : vector<2x128xf32> to vector<2x96xf32>
    %227 = arith.negf %226 : vector<2x96xf32>
    %228 = math.exp %227 : vector<2x96xf32>
    %cst_85 = arith.constant 1.000000e+00 : f32
    %229 = vector.broadcast %cst_85 : f32 to vector<2x96xf32>
    %230 = arith.addf %229, %228 : vector<2x96xf32>
    %231 = arith.divf %229, %230 : vector<2x96xf32>
    %232 = vector.extract_strided_slice %225 {offsets = [0, 96], sizes = [2, 32], strides = [1, 1]} : vector<2x128xf32> to vector<2x32xf32>
    %233 = math.tanh %232 : vector<2x32xf32>
    %234 = vector.extract_strided_slice %231 {offsets = [0, 0], sizes = [2, 32], strides = [1, 1]} : vector<2x96xf32> to vector<2x32xf32>
    %235 = vector.extract_strided_slice %231 {offsets = [0, 32], sizes = [2, 32], strides = [1, 1]} : vector<2x96xf32> to vector<2x32xf32>
    %236 = vector.extract_strided_slice %231 {offsets = [0, 64], sizes = [2, 32], strides = [1, 1]} : vector<2x96xf32> to vector<2x32xf32>
    %237 = arith.mulf %235, %211 : vector<2x32xf32>
    %238 = arith.mulf %234, %233 : vector<2x32xf32>
    %239 = arith.addf %237, %238 : vector<2x32xf32>
    %240 = math.tanh %239 : vector<2x32xf32>
    %241 = arith.mulf %236, %240 : vector<2x32xf32>
    %cst_86 = arith.constant dense<0.000000e+00> : vector<2x16xf32>
    %242 = tpu.matmul %241, %20, %cst_86 {dimension_numbers = #tpu.dot_dimension_numbers<[1], [0], [0], [1], [0, 0, 1, 1], [], []>} : vector<2x32xf32>, vector<32x16xf32>, vector<2x16xf32> -> vector<2x16xf32>
    %c0_87 = arith.constant 0 : index
    %243 = arith.index_cast %220 : i32 to index
    %c0_88 = arith.constant 0 : index
    %c0_89 = arith.constant 0 : index
    %244 = vector.load %arg7[%c0_87, %243, %c0_88, %c0_89] : memref<1x8x2x16xf32, #tpu.memory_space<vmem>>, vector<1x1x2x16xf32>
    %245 = vector.shape_cast %244 : vector<1x1x2x16xf32> to vector<2x16xf32>
    %246 = vector.shape_cast %242 : vector<2x16xf32> to vector<1x1x2x16xf32>
    tpu.vector_store %arg7[%c0_87, %243, %c0_88, %c0_89], %246 {strides = array<i32>} : memref<1x8x2x16xf32, #tpu.memory_space<vmem>>, vector<1x1x2x16xf32>,
    %c8_i32 = arith.constant 8 : i32
    %c0_90 = arith.constant 0 : index
    %c0_91 = arith.constant 0 : index
    %247 = vector.load %arg10[%c0_90, %c0_91] : memref<2x16xf32, #tpu.memory_space<vmem>>, vector<2x16xf32>
    tpu.vector_store %arg10[%c0_90, %c0_91], %242 {strides = array<i32>} : memref<2x16xf32, #tpu.memory_space<vmem>>, vector<2x16xf32>,
    %c0_92 = arith.constant 0 : index
    %c0_93 = arith.constant 0 : index
    %248 = vector.load %arg11[%c0_92, %c0_93] : memref<2x32xf32, #tpu.memory_space<vmem>>, vector<2x32xf32>
    tpu.vector_store %arg11[%c0_92, %c0_93], %239 {strides = array<i32>} : memref<2x32xf32, #tpu.memory_space<vmem>>, vector<2x32xf32>,
    %c0_i32_94 = arith.constant 0 : i32
    %249 = arith.cmpi eq, %arg1, %c0_i32_94 : i32
    %250 = arith.extui %249 : i1 to i32
    %c0_i32_95 = arith.constant 0 : i32
    %251 = arith.cmpi ne, %250, %c0_i32_95 : i32
    scf.if %251 {
      %c0_96 = arith.constant 0 : index
      %c0_97 = arith.constant 0 : index
      %c0_98 = arith.constant 0 : index
      %252 = vector.load %arg8[%c0_96, %c0_97, %c0_98] : memref<1x2x16xf32, #tpu.memory_space<vmem>>, vector<1x2x16xf32>
      %253 = vector.shape_cast %252 : vector<1x2x16xf32> to vector<2x16xf32>
      %254 = vector.shape_cast %242 : vector<2x16xf32> to vector<1x2x16xf32>
      tpu.vector_store %arg8[%c0_96, %c0_97, %c0_98], %254 {strides = array<i32>} : memref<1x2x16xf32, #tpu.memory_space<vmem>>, vector<1x2x16xf32>,
      %c0_99 = arith.constant 0 : index
      %c0_100 = arith.constant 0 : index
      %c0_101 = arith.constant 0 : index
      %255 = vector.load %arg9[%c0_99, %c0_100, %c0_101] : memref<1x2x32xf32, #tpu.memory_space<vmem>>, vector<1x2x32xf32>
      %256 = vector.shape_cast %255 : vector<1x2x32xf32> to vector<2x32xf32>
      %257 = vector.shape_cast %239 : vector<2x32xf32> to vector<1x2x32xf32>
      tpu.vector_store %arg9[%c0_99, %c0_100, %c0_101], %257 {strides = array<i32>} : memref<1x2x32xf32, #tpu.memory_space<vmem>>, vector<1x2x32xf32>,
    } else {
    }
    return
  }
  func.func @transform_0(%arg0: i32, %arg1: i32) -> (i32, i32, i32) {
    %c2_i32 = arith.constant 2 : i32
    %0 = arith.muli %c2_i32, %arg1 : i32
    %c0_i32 = arith.constant 0 : i32
    %1 = arith.subi %c0_i32, %0 : i32
    %2 = arith.muli %arg0, %1 : i32
    %3 = arith.addi %arg1, %2 : i32
    %c0_i32_0 = arith.constant 0 : i32
    %c0_i32_1 = arith.constant 0 : i32
    %c0_i32_2 = arith.constant 0 : i32
    return %3, %c0_i32_0, %c0_i32_1 : i32, i32, i32
  }
  func.func @transform_1(%arg0: i32, %arg1: i32) -> (i32, i32, i32) {
    %c0_i32 = arith.constant 0 : i32
    %c0_i32_0 = arith.constant 0 : i32
    %c0_i32_1 = arith.constant 0 : i32
    return %arg0, %c0_i32, %c0_i32_0 : i32, i32, i32
  }
  func.func @transform_2(%arg0: i32, %arg1: i32) -> (i32, i32, i32) {
    %c0_i32 = arith.constant 0 : i32
    %c0_i32_0 = arith.constant 0 : i32
    %c0_i32_1 = arith.constant 0 : i32
    return %arg0, %c0_i32, %c0_i32_0 : i32, i32, i32
  }
  func.func @transform_3(%arg0: i32, %arg1: i32) -> (i32, i32, i32) {
    %c0_i32 = arith.constant 0 : i32
    %c0_i32_0 = arith.constant 0 : i32
    %c0_i32_1 = arith.constant 0 : i32
    return %arg0, %c0_i32, %c0_i32_0 : i32, i32, i32
  }
  func.func @transform_4(%arg0: i32, %arg1: i32) -> (i32, i32, i32) {
    %c0_i32 = arith.constant 0 : i32
    %c0_i32_0 = arith.constant 0 : i32
    %c0_i32_1 = arith.constant 0 : i32
    return %arg0, %c0_i32, %c0_i32_0 : i32, i32, i32
  }
  func.func @transform_5(%arg0: i32, %arg1: i32) -> (i32, i32, i32, i32) {
    %c2_i32 = arith.constant 2 : i32
    %0 = arith.muli %c2_i32, %arg1 : i32
    %c0_i32 = arith.constant 0 : i32
    %1 = arith.subi %c0_i32, %0 : i32
    %2 = arith.muli %arg0, %1 : i32
    %3 = arith.addi %arg1, %2 : i32
    %c0_i32_0 = arith.constant 0 : i32
    %c0_i32_1 = arith.constant 0 : i32
    %c0_i32_2 = arith.constant 0 : i32
    return %arg0, %3, %c0_i32_0, %c0_i32_1 : i32, i32, i32, i32
  }
  func.func @transform_6(%arg0: i32, %arg1: i32) -> (i32, i32, i32) {
    %c0_i32 = arith.constant 0 : i32
    %c0_i32_0 = arith.constant 0 : i32
    %c0_i32_1 = arith.constant 0 : i32
    return %arg0, %c0_i32, %c0_i32_0 : i32, i32, i32
  }
  func.func @transform_7(%arg0: i32, %arg1: i32) -> (i32, i32, i32) {
    %c0_i32 = arith.constant 0 : i32
    %c0_i32_0 = arith.constant 0 : i32
    %c0_i32_1 = arith.constant 0 : i32
    return %arg0, %c0_i32, %c0_i32_0 : i32, i32, i32
  }
}

module attributes {stable_mosaic.version = 11 : i64} {
  func.func @bilstm_layer_kernel(%arg0: i32, %arg1: i32, %arg2: memref<8x2x32xf32, #tpu.memory_space<vmem>>, %arg3: memref<1x32x128xf32, #tpu.memory_space<vmem>>, %arg4: memref<1x16x128xf32, #tpu.memory_space<vmem>>, %arg5: memref<1x32x16xf32, #tpu.memory_space<vmem>>, %arg6: memref<1x1x128xf32, #tpu.memory_space<vmem>>, %arg7: memref<1x8x2x16xf32, #tpu.memory_space<vmem>>, %arg8: memref<1x2x16xf32, #tpu.memory_space<vmem>>, %arg9: memref<1x2x32xf32, #tpu.memory_space<vmem>>, %arg10: memref<2x16xf32, #tpu.memory_space<vmem>>, %arg11: memref<2x32xf32, #tpu.memory_space<vmem>>, %arg12: memref<8x2x128xf32, #tpu.memory_space<vmem>>) attributes {dimension_semantics = [#tpu.dimension_semantics<parallel>, #tpu.dimension_semantics<arbitrary>], iteration_bounds = array<i64: 2, 1>, scalar_prefetch = 0 : i64, scratch_operands = 3 : i64, tpu.core_type = #tpu.core_type<tc>, window_params = [{transform_indices = @transform_0, window_bounds = array<i64: 8, 2, 32>}, {transform_indices = @transform_1, window_bounds = array<i64: 1, 32, 128>}, {transform_indices = @transform_2, window_bounds = array<i64: 1, 16, 128>}, {transform_indices = @transform_3, window_bounds = array<i64: 1, 32, 16>}, {transform_indices = @transform_4, window_bounds = array<i64: 1, 1, 128>}, {transform_indices = @transform_5, window_bounds = array<i64: 1, 8, 2, 16>}, {transform_indices = @transform_6, window_bounds = array<i64: 1, 2, 16>}, {transform_indices = @transform_7, window_bounds = array<i64: 1, 2, 32>}]} {
    %c0_i32 = arith.constant 0 : i32
    %0 = arith.cmpi eq, %arg1, %c0_i32 : i32
    %1 = arith.extui %0 : i1 to i32
    %c0_i32_0 = arith.constant 0 : i32
    %2 = arith.cmpi ne, %1, %c0_i32_0 : i32
    scf.if %2 {
      %cst_96 = arith.constant 0.000000e+00 : f32
      %252 = vector.broadcast %cst_96 : f32 to vector<2x16xf32>
      %c0_97 = arith.constant 0 : index
      %c0_98 = arith.constant 0 : index
      %253 = vector.load %arg10[%c0_97, %c0_98] : memref<2x16xf32, #tpu.memory_space<vmem>>, vector<2x16xf32>
      tpu.vector_store %arg10[%c0_97, %c0_98], %252 {strides = array<i32>} : memref<2x16xf32, #tpu.memory_space<vmem>>, vector<2x16xf32>,
      %cst_99 = arith.constant 0.000000e+00 : f32
      %254 = vector.broadcast %cst_99 : f32 to vector<2x32xf32>
      %c0_100 = arith.constant 0 : index
      %c0_101 = arith.constant 0 : index
      %255 = vector.load %arg11[%c0_100, %c0_101] : memref<2x32xf32, #tpu.memory_space<vmem>>, vector<2x32xf32>
      tpu.vector_store %arg11[%c0_100, %c0_101], %254 {strides = array<i32>} : memref<2x32xf32, #tpu.memory_space<vmem>>, vector<2x32xf32>,
    } else {
    }
    %c0 = arith.constant 0 : index
    %c0_1 = arith.constant 0 : index
    %c0_2 = arith.constant 0 : index
    %3 = vector.load %arg2[%c0, %c0_1, %c0_2] : memref<8x2x32xf32, #tpu.memory_space<vmem>>, vector<8x2x32xf32>
    %4 = vector.shape_cast %3 : vector<8x2x32xf32> to vector<16x32xf32>
    %c0_3 = arith.constant 0 : index
    %c0_4 = arith.constant 0 : index
    %c0_5 = arith.constant 0 : index
    %5 = vector.load %arg3[%c0_3, %c0_4, %c0_5] : memref<1x32x128xf32, #tpu.memory_space<vmem>>, vector<1x32x128xf32>
    %6 = vector.shape_cast %5 : vector<1x32x128xf32> to vector<32x128xf32>
    %cst = arith.constant dense<0.000000e+00> : vector<16x128xf32>
    %7 = tpu.matmul %4, %6, %cst {dimension_numbers = #tpu.dot_dimension_numbers<[1], [0], [0], [1], [0, 0, 1, 1], [], []>} : vector<16x32xf32>, vector<32x128xf32>, vector<16x128xf32> -> vector<16x128xf32>
    %c0_6 = arith.constant 0 : index
    %c0_7 = arith.constant 0 : index
    %c0_8 = arith.constant 0 : index
    %8 = vector.load %arg6[%c0_6, %c0_7, %c0_8] : memref<1x1x128xf32, #tpu.memory_space<vmem>>, vector<1x1x128xf32>
    %9 = vector.shape_cast %8 : vector<1x1x128xf32> to vector<1x128xf32>
    %10 = vector.broadcast %9 : vector<1x128xf32> to vector<16x128xf32>
    %11 = arith.addf %7, %10 : vector<16x128xf32>
    %12 = vector.shape_cast %11 : vector<16x128xf32> to vector<8x2x128xf32>
    %c0_9 = arith.constant 0 : index
    %c0_10 = arith.constant 0 : index
    %c0_11 = arith.constant 0 : index
    %13 = vector.load %arg12[%c0_9, %c0_10, %c0_11] : memref<8x2x128xf32, #tpu.memory_space<vmem>>, vector<8x2x128xf32>
    tpu.vector_store %arg12[%c0_9, %c0_10, %c0_11], %12 {strides = array<i32>} : memref<8x2x128xf32, #tpu.memory_space<vmem>>, vector<8x2x128xf32>,
    %c7_i32 = arith.constant 7 : i32
    %14 = arith.muli %arg0, %c7_i32 : i32
    %c2_i32 = arith.constant 2 : i32
    %15 = arith.muli %c2_i32, %arg0 : i32
    %c1_i32 = arith.constant 1 : i32
    %16 = arith.subi %c1_i32, %15 : i32
    %c0_12 = arith.constant 0 : index
    %c0_13 = arith.constant 0 : index
    %c0_14 = arith.constant 0 : index
    %17 = vector.load %arg4[%c0_12, %c0_13, %c0_14] : memref<1x16x128xf32, #tpu.memory_space<vmem>>, vector<1x16x128xf32>
    %18 = vector.shape_cast %17 : vector<1x16x128xf32> to vector<16x128xf32>
    %c0_15 = arith.constant 0 : index
    %c0_16 = arith.constant 0 : index
    %c0_17 = arith.constant 0 : index
    %19 = vector.load %arg5[%c0_15, %c0_16, %c0_17] : memref<1x32x16xf32, #tpu.memory_space<vmem>>, vector<1x32x16xf32>
    %20 = vector.shape_cast %19 : vector<1x32x16xf32> to vector<32x16xf32>
    %c0_18 = arith.constant 0 : index
    %c0_19 = arith.constant 0 : index
    %21 = vector.load %arg10[%c0_18, %c0_19] : memref<2x16xf32, #tpu.memory_space<vmem>>, vector<2x16xf32>
    %c0_20 = arith.constant 0 : index
    %c0_21 = arith.constant 0 : index
    %22 = vector.load %arg11[%c0_20, %c0_21] : memref<2x32xf32, #tpu.memory_space<vmem>>, vector<2x32xf32>
    %c0_i32_22 = arith.constant 0 : i32
    %23 = arith.muli %c0_i32_22, %16 : i32
    %24 = arith.addi %14, %23 : i32
    %25 = arith.index_cast %24 : i32 to index
    %c0_23 = arith.constant 0 : index
    %c0_24 = arith.constant 0 : index
    %26 = vector.load %arg12[%25, %c0_23, %c0_24] : memref<8x2x128xf32, #tpu.memory_space<vmem>>, vector<1x2x128xf32>
    %27 = vector.shape_cast %26 : vector<1x2x128xf32> to vector<2x128xf32>
    %cst_25 = arith.constant dense<0.000000e+00> : vector<2x128xf32>
    %28 = tpu.matmul %21, %18, %cst_25 {dimension_numbers = #tpu.dot_dimension_numbers<[1], [0], [0], [1], [0, 0, 1, 1], [], []>} : vector<2x16xf32>, vector<16x128xf32>, vector<2x128xf32> -> vector<2x128xf32>
    %29 = arith.addf %27, %28 : vector<2x128xf32>
    %30 = vector.extract_strided_slice %29 {offsets = [0, 0], sizes = [2, 96], strides = [1, 1]} : vector<2x128xf32> to vector<2x96xf32>
    %31 = arith.negf %30 : vector<2x96xf32>
    %32 = math.exp %31 : vector<2x96xf32>
    %cst_26 = arith.constant 1.000000e+00 : f32
    %33 = vector.broadcast %cst_26 : f32 to vector<2x96xf32>
    %34 = arith.addf %33, %32 : vector<2x96xf32>
    %35 = arith.divf %33, %34 : vector<2x96xf32>
    %36 = vector.extract_strided_slice %29 {offsets = [0, 96], sizes = [2, 32], strides = [1, 1]} : vector<2x128xf32> to vector<2x32xf32>
    %37 = math.tanh %36 : vector<2x32xf32>
    %38 = vector.extract_strided_slice %35 {offsets = [0, 0], sizes = [2, 32], strides = [1, 1]} : vector<2x96xf32> to vector<2x32xf32>
    %39 = vector.extract_strided_slice %35 {offsets = [0, 32], sizes = [2, 32], strides = [1, 1]} : vector<2x96xf32> to vector<2x32xf32>
    %40 = vector.extract_strided_slice %35 {offsets = [0, 64], sizes = [2, 32], strides = [1, 1]} : vector<2x96xf32> to vector<2x32xf32>
    %41 = arith.mulf %39, %22 : vector<2x32xf32>
    %42 = arith.mulf %38, %37 : vector<2x32xf32>
    %43 = arith.addf %41, %42 : vector<2x32xf32>
    %44 = math.tanh %43 : vector<2x32xf32>
    %45 = arith.mulf %40, %44 : vector<2x32xf32>
    %cst_27 = arith.constant dense<0.000000e+00> : vector<2x16xf32>
    %46 = tpu.matmul %45, %20, %cst_27 {dimension_numbers = #tpu.dot_dimension_numbers<[1], [0], [0], [1], [0, 0, 1, 1], [], []>} : vector<2x32xf32>, vector<32x16xf32>, vector<2x16xf32> -> vector<2x16xf32>
    %c0_28 = arith.constant 0 : index
    %47 = arith.index_cast %24 : i32 to index
    %c0_29 = arith.constant 0 : index
    %c0_30 = arith.constant 0 : index
    %48 = vector.load %arg7[%c0_28, %47, %c0_29, %c0_30] : memref<1x8x2x16xf32, #tpu.memory_space<vmem>>, vector<1x1x2x16xf32>
    %49 = vector.shape_cast %48 : vector<1x1x2x16xf32> to vector<2x16xf32>
    %50 = vector.shape_cast %46 : vector<2x16xf32> to vector<1x1x2x16xf32>
    tpu.vector_store %arg7[%c0_28, %47, %c0_29, %c0_30], %50 {strides = array<i32>} : memref<1x8x2x16xf32, #tpu.memory_space<vmem>>, vector<1x1x2x16xf32>,
    %c1_i32_31 = arith.constant 1 : i32
    %51 = arith.muli %c1_i32_31, %16 : i32
    %52 = arith.addi %14, %51 : i32
    %53 = arith.index_cast %52 : i32 to index
    %c0_32 = arith.constant 0 : index
    %c0_33 = arith.constant 0 : index
    %54 = vector.load %arg12[%53, %c0_32, %c0_33] : memref<8x2x128xf32, #tpu.memory_space<vmem>>, vector<1x2x128xf32>
    %55 = vector.shape_cast %54 : vector<1x2x128xf32> to vector<2x128xf32>
    %cst_34 = arith.constant dense<0.000000e+00> : vector<2x128xf32>
    %56 = tpu.matmul %46, %18, %cst_34 {dimension_numbers = #tpu.dot_dimension_numbers<[1], [0], [0], [1], [0, 0, 1, 1], [], []>} : vector<2x16xf32>, vector<16x128xf32>, vector<2x128xf32> -> vector<2x128xf32>
    %57 = arith.addf %55, %56 : vector<2x128xf32>
    %58 = vector.extract_strided_slice %57 {offsets = [0, 0], sizes = [2, 96], strides = [1, 1]} : vector<2x128xf32> to vector<2x96xf32>
    %59 = arith.negf %58 : vector<2x96xf32>
    %60 = math.exp %59 : vector<2x96xf32>
    %cst_35 = arith.constant 1.000000e+00 : f32
    %61 = vector.broadcast %cst_35 : f32 to vector<2x96xf32>
    %62 = arith.addf %61, %60 : vector<2x96xf32>
    %63 = arith.divf %61, %62 : vector<2x96xf32>
    %64 = vector.extract_strided_slice %57 {offsets = [0, 96], sizes = [2, 32], strides = [1, 1]} : vector<2x128xf32> to vector<2x32xf32>
    %65 = math.tanh %64 : vector<2x32xf32>
    %66 = vector.extract_strided_slice %63 {offsets = [0, 0], sizes = [2, 32], strides = [1, 1]} : vector<2x96xf32> to vector<2x32xf32>
    %67 = vector.extract_strided_slice %63 {offsets = [0, 32], sizes = [2, 32], strides = [1, 1]} : vector<2x96xf32> to vector<2x32xf32>
    %68 = vector.extract_strided_slice %63 {offsets = [0, 64], sizes = [2, 32], strides = [1, 1]} : vector<2x96xf32> to vector<2x32xf32>
    %69 = arith.mulf %67, %43 : vector<2x32xf32>
    %70 = arith.mulf %66, %65 : vector<2x32xf32>
    %71 = arith.addf %69, %70 : vector<2x32xf32>
    %72 = math.tanh %71 : vector<2x32xf32>
    %73 = arith.mulf %68, %72 : vector<2x32xf32>
    %cst_36 = arith.constant dense<0.000000e+00> : vector<2x16xf32>
    %74 = tpu.matmul %73, %20, %cst_36 {dimension_numbers = #tpu.dot_dimension_numbers<[1], [0], [0], [1], [0, 0, 1, 1], [], []>} : vector<2x32xf32>, vector<32x16xf32>, vector<2x16xf32> -> vector<2x16xf32>
    %c0_37 = arith.constant 0 : index
    %75 = arith.index_cast %52 : i32 to index
    %c0_38 = arith.constant 0 : index
    %c0_39 = arith.constant 0 : index
    %76 = vector.load %arg7[%c0_37, %75, %c0_38, %c0_39] : memref<1x8x2x16xf32, #tpu.memory_space<vmem>>, vector<1x1x2x16xf32>
    %77 = vector.shape_cast %76 : vector<1x1x2x16xf32> to vector<2x16xf32>
    %78 = vector.shape_cast %74 : vector<2x16xf32> to vector<1x1x2x16xf32>
    tpu.vector_store %arg7[%c0_37, %75, %c0_38, %c0_39], %78 {strides = array<i32>} : memref<1x8x2x16xf32, #tpu.memory_space<vmem>>, vector<1x1x2x16xf32>,
    %c2_i32_40 = arith.constant 2 : i32
    %79 = arith.muli %c2_i32_40, %16 : i32
    %80 = arith.addi %14, %79 : i32
    %81 = arith.index_cast %80 : i32 to index
    %c0_41 = arith.constant 0 : index
    %c0_42 = arith.constant 0 : index
    %82 = vector.load %arg12[%81, %c0_41, %c0_42] : memref<8x2x128xf32, #tpu.memory_space<vmem>>, vector<1x2x128xf32>
    %83 = vector.shape_cast %82 : vector<1x2x128xf32> to vector<2x128xf32>
    %cst_43 = arith.constant dense<0.000000e+00> : vector<2x128xf32>
    %84 = tpu.matmul %74, %18, %cst_43 {dimension_numbers = #tpu.dot_dimension_numbers<[1], [0], [0], [1], [0, 0, 1, 1], [], []>} : vector<2x16xf32>, vector<16x128xf32>, vector<2x128xf32> -> vector<2x128xf32>
    %85 = arith.addf %83, %84 : vector<2x128xf32>
    %86 = vector.extract_strided_slice %85 {offsets = [0, 0], sizes = [2, 96], strides = [1, 1]} : vector<2x128xf32> to vector<2x96xf32>
    %87 = arith.negf %86 : vector<2x96xf32>
    %88 = math.exp %87 : vector<2x96xf32>
    %cst_44 = arith.constant 1.000000e+00 : f32
    %89 = vector.broadcast %cst_44 : f32 to vector<2x96xf32>
    %90 = arith.addf %89, %88 : vector<2x96xf32>
    %91 = arith.divf %89, %90 : vector<2x96xf32>
    %92 = vector.extract_strided_slice %85 {offsets = [0, 96], sizes = [2, 32], strides = [1, 1]} : vector<2x128xf32> to vector<2x32xf32>
    %93 = math.tanh %92 : vector<2x32xf32>
    %94 = vector.extract_strided_slice %91 {offsets = [0, 0], sizes = [2, 32], strides = [1, 1]} : vector<2x96xf32> to vector<2x32xf32>
    %95 = vector.extract_strided_slice %91 {offsets = [0, 32], sizes = [2, 32], strides = [1, 1]} : vector<2x96xf32> to vector<2x32xf32>
    %96 = vector.extract_strided_slice %91 {offsets = [0, 64], sizes = [2, 32], strides = [1, 1]} : vector<2x96xf32> to vector<2x32xf32>
    %97 = arith.mulf %95, %71 : vector<2x32xf32>
    %98 = arith.mulf %94, %93 : vector<2x32xf32>
    %99 = arith.addf %97, %98 : vector<2x32xf32>
    %100 = math.tanh %99 : vector<2x32xf32>
    %101 = arith.mulf %96, %100 : vector<2x32xf32>
    %cst_45 = arith.constant dense<0.000000e+00> : vector<2x16xf32>
    %102 = tpu.matmul %101, %20, %cst_45 {dimension_numbers = #tpu.dot_dimension_numbers<[1], [0], [0], [1], [0, 0, 1, 1], [], []>} : vector<2x32xf32>, vector<32x16xf32>, vector<2x16xf32> -> vector<2x16xf32>
    %c0_46 = arith.constant 0 : index
    %103 = arith.index_cast %80 : i32 to index
    %c0_47 = arith.constant 0 : index
    %c0_48 = arith.constant 0 : index
    %104 = vector.load %arg7[%c0_46, %103, %c0_47, %c0_48] : memref<1x8x2x16xf32, #tpu.memory_space<vmem>>, vector<1x1x2x16xf32>
    %105 = vector.shape_cast %104 : vector<1x1x2x16xf32> to vector<2x16xf32>
    %106 = vector.shape_cast %102 : vector<2x16xf32> to vector<1x1x2x16xf32>
    tpu.vector_store %arg7[%c0_46, %103, %c0_47, %c0_48], %106 {strides = array<i32>} : memref<1x8x2x16xf32, #tpu.memory_space<vmem>>, vector<1x1x2x16xf32>,
    %c3_i32 = arith.constant 3 : i32
    %107 = arith.muli %c3_i32, %16 : i32
    %108 = arith.addi %14, %107 : i32
    %109 = arith.index_cast %108 : i32 to index
    %c0_49 = arith.constant 0 : index
    %c0_50 = arith.constant 0 : index
    %110 = vector.load %arg12[%109, %c0_49, %c0_50] : memref<8x2x128xf32, #tpu.memory_space<vmem>>, vector<1x2x128xf32>
    %111 = vector.shape_cast %110 : vector<1x2x128xf32> to vector<2x128xf32>
    %cst_51 = arith.constant dense<0.000000e+00> : vector<2x128xf32>
    %112 = tpu.matmul %102, %18, %cst_51 {dimension_numbers = #tpu.dot_dimension_numbers<[1], [0], [0], [1], [0, 0, 1, 1], [], []>} : vector<2x16xf32>, vector<16x128xf32>, vector<2x128xf32> -> vector<2x128xf32>
    %113 = arith.addf %111, %112 : vector<2x128xf32>
    %114 = vector.extract_strided_slice %113 {offsets = [0, 0], sizes = [2, 96], strides = [1, 1]} : vector<2x128xf32> to vector<2x96xf32>
    %115 = arith.negf %114 : vector<2x96xf32>
    %116 = math.exp %115 : vector<2x96xf32>
    %cst_52 = arith.constant 1.000000e+00 : f32
    %117 = vector.broadcast %cst_52 : f32 to vector<2x96xf32>
    %118 = arith.addf %117, %116 : vector<2x96xf32>
    %119 = arith.divf %117, %118 : vector<2x96xf32>
    %120 = vector.extract_strided_slice %113 {offsets = [0, 96], sizes = [2, 32], strides = [1, 1]} : vector<2x128xf32> to vector<2x32xf32>
    %121 = math.tanh %120 : vector<2x32xf32>
    %122 = vector.extract_strided_slice %119 {offsets = [0, 0], sizes = [2, 32], strides = [1, 1]} : vector<2x96xf32> to vector<2x32xf32>
    %123 = vector.extract_strided_slice %119 {offsets = [0, 32], sizes = [2, 32], strides = [1, 1]} : vector<2x96xf32> to vector<2x32xf32>
    %124 = vector.extract_strided_slice %119 {offsets = [0, 64], sizes = [2, 32], strides = [1, 1]} : vector<2x96xf32> to vector<2x32xf32>
    %125 = arith.mulf %123, %99 : vector<2x32xf32>
    %126 = arith.mulf %122, %121 : vector<2x32xf32>
    %127 = arith.addf %125, %126 : vector<2x32xf32>
    %128 = math.tanh %127 : vector<2x32xf32>
    %129 = arith.mulf %124, %128 : vector<2x32xf32>
    %cst_53 = arith.constant dense<0.000000e+00> : vector<2x16xf32>
    %130 = tpu.matmul %129, %20, %cst_53 {dimension_numbers = #tpu.dot_dimension_numbers<[1], [0], [0], [1], [0, 0, 1, 1], [], []>} : vector<2x32xf32>, vector<32x16xf32>, vector<2x16xf32> -> vector<2x16xf32>
    %c0_54 = arith.constant 0 : index
    %131 = arith.index_cast %108 : i32 to index
    %c0_55 = arith.constant 0 : index
    %c0_56 = arith.constant 0 : index
    %132 = vector.load %arg7[%c0_54, %131, %c0_55, %c0_56] : memref<1x8x2x16xf32, #tpu.memory_space<vmem>>, vector<1x1x2x16xf32>
    %133 = vector.shape_cast %132 : vector<1x1x2x16xf32> to vector<2x16xf32>
    %134 = vector.shape_cast %130 : vector<2x16xf32> to vector<1x1x2x16xf32>
    tpu.vector_store %arg7[%c0_54, %131, %c0_55, %c0_56], %134 {strides = array<i32>} : memref<1x8x2x16xf32, #tpu.memory_space<vmem>>, vector<1x1x2x16xf32>,
    %c4_i32 = arith.constant 4 : i32
    %135 = arith.muli %c4_i32, %16 : i32
    %136 = arith.addi %14, %135 : i32
    %137 = arith.index_cast %136 : i32 to index
    %c0_57 = arith.constant 0 : index
    %c0_58 = arith.constant 0 : index
    %138 = vector.load %arg12[%137, %c0_57, %c0_58] : memref<8x2x128xf32, #tpu.memory_space<vmem>>, vector<1x2x128xf32>
    %139 = vector.shape_cast %138 : vector<1x2x128xf32> to vector<2x128xf32>
    %cst_59 = arith.constant dense<0.000000e+00> : vector<2x128xf32>
    %140 = tpu.matmul %130, %18, %cst_59 {dimension_numbers = #tpu.dot_dimension_numbers<[1], [0], [0], [1], [0, 0, 1, 1], [], []>} : vector<2x16xf32>, vector<16x128xf32>, vector<2x128xf32> -> vector<2x128xf32>
    %141 = arith.addf %139, %140 : vector<2x128xf32>
    %142 = vector.extract_strided_slice %141 {offsets = [0, 0], sizes = [2, 96], strides = [1, 1]} : vector<2x128xf32> to vector<2x96xf32>
    %143 = arith.negf %142 : vector<2x96xf32>
    %144 = math.exp %143 : vector<2x96xf32>
    %cst_60 = arith.constant 1.000000e+00 : f32
    %145 = vector.broadcast %cst_60 : f32 to vector<2x96xf32>
    %146 = arith.addf %145, %144 : vector<2x96xf32>
    %147 = arith.divf %145, %146 : vector<2x96xf32>
    %148 = vector.extract_strided_slice %141 {offsets = [0, 96], sizes = [2, 32], strides = [1, 1]} : vector<2x128xf32> to vector<2x32xf32>
    %149 = math.tanh %148 : vector<2x32xf32>
    %150 = vector.extract_strided_slice %147 {offsets = [0, 0], sizes = [2, 32], strides = [1, 1]} : vector<2x96xf32> to vector<2x32xf32>
    %151 = vector.extract_strided_slice %147 {offsets = [0, 32], sizes = [2, 32], strides = [1, 1]} : vector<2x96xf32> to vector<2x32xf32>
    %152 = vector.extract_strided_slice %147 {offsets = [0, 64], sizes = [2, 32], strides = [1, 1]} : vector<2x96xf32> to vector<2x32xf32>
    %153 = arith.mulf %151, %127 : vector<2x32xf32>
    %154 = arith.mulf %150, %149 : vector<2x32xf32>
    %155 = arith.addf %153, %154 : vector<2x32xf32>
    %156 = math.tanh %155 : vector<2x32xf32>
    %157 = arith.mulf %152, %156 : vector<2x32xf32>
    %cst_61 = arith.constant dense<0.000000e+00> : vector<2x16xf32>
    %158 = tpu.matmul %157, %20, %cst_61 {dimension_numbers = #tpu.dot_dimension_numbers<[1], [0], [0], [1], [0, 0, 1, 1], [], []>} : vector<2x32xf32>, vector<32x16xf32>, vector<2x16xf32> -> vector<2x16xf32>
    %c0_62 = arith.constant 0 : index
    %159 = arith.index_cast %136 : i32 to index
    %c0_63 = arith.constant 0 : index
    %c0_64 = arith.constant 0 : index
    %160 = vector.load %arg7[%c0_62, %159, %c0_63, %c0_64] : memref<1x8x2x16xf32, #tpu.memory_space<vmem>>, vector<1x1x2x16xf32>
    %161 = vector.shape_cast %160 : vector<1x1x2x16xf32> to vector<2x16xf32>
    %162 = vector.shape_cast %158 : vector<2x16xf32> to vector<1x1x2x16xf32>
    tpu.vector_store %arg7[%c0_62, %159, %c0_63, %c0_64], %162 {strides = array<i32>} : memref<1x8x2x16xf32, #tpu.memory_space<vmem>>, vector<1x1x2x16xf32>,
    %c5_i32 = arith.constant 5 : i32
    %163 = arith.muli %c5_i32, %16 : i32
    %164 = arith.addi %14, %163 : i32
    %165 = arith.index_cast %164 : i32 to index
    %c0_65 = arith.constant 0 : index
    %c0_66 = arith.constant 0 : index
    %166 = vector.load %arg12[%165, %c0_65, %c0_66] : memref<8x2x128xf32, #tpu.memory_space<vmem>>, vector<1x2x128xf32>
    %167 = vector.shape_cast %166 : vector<1x2x128xf32> to vector<2x128xf32>
    %cst_67 = arith.constant dense<0.000000e+00> : vector<2x128xf32>
    %168 = tpu.matmul %158, %18, %cst_67 {dimension_numbers = #tpu.dot_dimension_numbers<[1], [0], [0], [1], [0, 0, 1, 1], [], []>} : vector<2x16xf32>, vector<16x128xf32>, vector<2x128xf32> -> vector<2x128xf32>
    %169 = arith.addf %167, %168 : vector<2x128xf32>
    %170 = vector.extract_strided_slice %169 {offsets = [0, 0], sizes = [2, 96], strides = [1, 1]} : vector<2x128xf32> to vector<2x96xf32>
    %171 = arith.negf %170 : vector<2x96xf32>
    %172 = math.exp %171 : vector<2x96xf32>
    %cst_68 = arith.constant 1.000000e+00 : f32
    %173 = vector.broadcast %cst_68 : f32 to vector<2x96xf32>
    %174 = arith.addf %173, %172 : vector<2x96xf32>
    %175 = arith.divf %173, %174 : vector<2x96xf32>
    %176 = vector.extract_strided_slice %169 {offsets = [0, 96], sizes = [2, 32], strides = [1, 1]} : vector<2x128xf32> to vector<2x32xf32>
    %177 = math.tanh %176 : vector<2x32xf32>
    %178 = vector.extract_strided_slice %175 {offsets = [0, 0], sizes = [2, 32], strides = [1, 1]} : vector<2x96xf32> to vector<2x32xf32>
    %179 = vector.extract_strided_slice %175 {offsets = [0, 32], sizes = [2, 32], strides = [1, 1]} : vector<2x96xf32> to vector<2x32xf32>
    %180 = vector.extract_strided_slice %175 {offsets = [0, 64], sizes = [2, 32], strides = [1, 1]} : vector<2x96xf32> to vector<2x32xf32>
    %181 = arith.mulf %179, %155 : vector<2x32xf32>
    %182 = arith.mulf %178, %177 : vector<2x32xf32>
    %183 = arith.addf %181, %182 : vector<2x32xf32>
    %184 = math.tanh %183 : vector<2x32xf32>
    %185 = arith.mulf %180, %184 : vector<2x32xf32>
    %cst_69 = arith.constant dense<0.000000e+00> : vector<2x16xf32>
    %186 = tpu.matmul %185, %20, %cst_69 {dimension_numbers = #tpu.dot_dimension_numbers<[1], [0], [0], [1], [0, 0, 1, 1], [], []>} : vector<2x32xf32>, vector<32x16xf32>, vector<2x16xf32> -> vector<2x16xf32>
    %c0_70 = arith.constant 0 : index
    %187 = arith.index_cast %164 : i32 to index
    %c0_71 = arith.constant 0 : index
    %c0_72 = arith.constant 0 : index
    %188 = vector.load %arg7[%c0_70, %187, %c0_71, %c0_72] : memref<1x8x2x16xf32, #tpu.memory_space<vmem>>, vector<1x1x2x16xf32>
    %189 = vector.shape_cast %188 : vector<1x1x2x16xf32> to vector<2x16xf32>
    %190 = vector.shape_cast %186 : vector<2x16xf32> to vector<1x1x2x16xf32>
    tpu.vector_store %arg7[%c0_70, %187, %c0_71, %c0_72], %190 {strides = array<i32>} : memref<1x8x2x16xf32, #tpu.memory_space<vmem>>, vector<1x1x2x16xf32>,
    %c6_i32 = arith.constant 6 : i32
    %191 = arith.muli %c6_i32, %16 : i32
    %192 = arith.addi %14, %191 : i32
    %193 = arith.index_cast %192 : i32 to index
    %c0_73 = arith.constant 0 : index
    %c0_74 = arith.constant 0 : index
    %194 = vector.load %arg12[%193, %c0_73, %c0_74] : memref<8x2x128xf32, #tpu.memory_space<vmem>>, vector<1x2x128xf32>
    %195 = vector.shape_cast %194 : vector<1x2x128xf32> to vector<2x128xf32>
    %cst_75 = arith.constant dense<0.000000e+00> : vector<2x128xf32>
    %196 = tpu.matmul %186, %18, %cst_75 {dimension_numbers = #tpu.dot_dimension_numbers<[1], [0], [0], [1], [0, 0, 1, 1], [], []>} : vector<2x16xf32>, vector<16x128xf32>, vector<2x128xf32> -> vector<2x128xf32>
    %197 = arith.addf %195, %196 : vector<2x128xf32>
    %198 = vector.extract_strided_slice %197 {offsets = [0, 0], sizes = [2, 96], strides = [1, 1]} : vector<2x128xf32> to vector<2x96xf32>
    %199 = arith.negf %198 : vector<2x96xf32>
    %200 = math.exp %199 : vector<2x96xf32>
    %cst_76 = arith.constant 1.000000e+00 : f32
    %201 = vector.broadcast %cst_76 : f32 to vector<2x96xf32>
    %202 = arith.addf %201, %200 : vector<2x96xf32>
    %203 = arith.divf %201, %202 : vector<2x96xf32>
    %204 = vector.extract_strided_slice %197 {offsets = [0, 96], sizes = [2, 32], strides = [1, 1]} : vector<2x128xf32> to vector<2x32xf32>
    %205 = math.tanh %204 : vector<2x32xf32>
    %206 = vector.extract_strided_slice %203 {offsets = [0, 0], sizes = [2, 32], strides = [1, 1]} : vector<2x96xf32> to vector<2x32xf32>
    %207 = vector.extract_strided_slice %203 {offsets = [0, 32], sizes = [2, 32], strides = [1, 1]} : vector<2x96xf32> to vector<2x32xf32>
    %208 = vector.extract_strided_slice %203 {offsets = [0, 64], sizes = [2, 32], strides = [1, 1]} : vector<2x96xf32> to vector<2x32xf32>
    %209 = arith.mulf %207, %183 : vector<2x32xf32>
    %210 = arith.mulf %206, %205 : vector<2x32xf32>
    %211 = arith.addf %209, %210 : vector<2x32xf32>
    %212 = math.tanh %211 : vector<2x32xf32>
    %213 = arith.mulf %208, %212 : vector<2x32xf32>
    %cst_77 = arith.constant dense<0.000000e+00> : vector<2x16xf32>
    %214 = tpu.matmul %213, %20, %cst_77 {dimension_numbers = #tpu.dot_dimension_numbers<[1], [0], [0], [1], [0, 0, 1, 1], [], []>} : vector<2x32xf32>, vector<32x16xf32>, vector<2x16xf32> -> vector<2x16xf32>
    %c0_78 = arith.constant 0 : index
    %215 = arith.index_cast %192 : i32 to index
    %c0_79 = arith.constant 0 : index
    %c0_80 = arith.constant 0 : index
    %216 = vector.load %arg7[%c0_78, %215, %c0_79, %c0_80] : memref<1x8x2x16xf32, #tpu.memory_space<vmem>>, vector<1x1x2x16xf32>
    %217 = vector.shape_cast %216 : vector<1x1x2x16xf32> to vector<2x16xf32>
    %218 = vector.shape_cast %214 : vector<2x16xf32> to vector<1x1x2x16xf32>
    tpu.vector_store %arg7[%c0_78, %215, %c0_79, %c0_80], %218 {strides = array<i32>} : memref<1x8x2x16xf32, #tpu.memory_space<vmem>>, vector<1x1x2x16xf32>,
    %c7_i32_81 = arith.constant 7 : i32
    %219 = arith.muli %c7_i32_81, %16 : i32
    %220 = arith.addi %14, %219 : i32
    %221 = arith.index_cast %220 : i32 to index
    %c0_82 = arith.constant 0 : index
    %c0_83 = arith.constant 0 : index
    %222 = vector.load %arg12[%221, %c0_82, %c0_83] : memref<8x2x128xf32, #tpu.memory_space<vmem>>, vector<1x2x128xf32>
    %223 = vector.shape_cast %222 : vector<1x2x128xf32> to vector<2x128xf32>
    %cst_84 = arith.constant dense<0.000000e+00> : vector<2x128xf32>
    %224 = tpu.matmul %214, %18, %cst_84 {dimension_numbers = #tpu.dot_dimension_numbers<[1], [0], [0], [1], [0, 0, 1, 1], [], []>} : vector<2x16xf32>, vector<16x128xf32>, vector<2x128xf32> -> vector<2x128xf32>
    %225 = arith.addf %223, %224 : vector<2x128xf32>
    %226 = vector.extract_strided_slice %225 {offsets = [0, 0], sizes = [2, 96], strides = [1, 1]} : vector<2x128xf32> to vector<2x96xf32>
    %227 = arith.negf %226 : vector<2x96xf32>
    %228 = math.exp %227 : vector<2x96xf32>
    %cst_85 = arith.constant 1.000000e+00 : f32
    %229 = vector.broadcast %cst_85 : f32 to vector<2x96xf32>
    %230 = arith.addf %229, %228 : vector<2x96xf32>
    %231 = arith.divf %229, %230 : vector<2x96xf32>
    %232 = vector.extract_strided_slice %225 {offsets = [0, 96], sizes = [2, 32], strides = [1, 1]} : vector<2x128xf32> to vector<2x32xf32>
    %233 = math.tanh %232 : vector<2x32xf32>
    %234 = vector.extract_strided_slice %231 {offsets = [0, 0], sizes = [2, 32], strides = [1, 1]} : vector<2x96xf32> to vector<2x32xf32>
    %235 = vector.extract_strided_slice %231 {offsets = [0, 32], sizes = [2, 32], strides = [1, 1]} : vector<2x96xf32> to vector<2x32xf32>
    %236 = vector.extract_strided_slice %231 {offsets = [0, 64], sizes = [2, 32], strides = [1, 1]} : vector<2x96xf32> to vector<2x32xf32>
    %237 = arith.mulf %235, %211 : vector<2x32xf32>
    %238 = arith.mulf %234, %233 : vector<2x32xf32>
    %239 = arith.addf %237, %238 : vector<2x32xf32>
    %240 = math.tanh %239 : vector<2x32xf32>
    %241 = arith.mulf %236, %240 : vector<2x32xf32>
    %cst_86 = arith.constant dense<0.000000e+00> : vector<2x16xf32>
    %242 = tpu.matmul %241, %20, %cst_86 {dimension_numbers = #tpu.dot_dimension_numbers<[1], [0], [0], [1], [0, 0, 1, 1], [], []>} : vector<2x32xf32>, vector<32x16xf32>, vector<2x16xf32> -> vector<2x16xf32>
    %c0_87 = arith.constant 0 : index
    %243 = arith.index_cast %220 : i32 to index
    %c0_88 = arith.constant 0 : index
    %c0_89 = arith.constant 0 : index
    %244 = vector.load %arg7[%c0_87, %243, %c0_88, %c0_89] : memref<1x8x2x16xf32, #tpu.memory_space<vmem>>, vector<1x1x2x16xf32>
    %245 = vector.shape_cast %244 : vector<1x1x2x16xf32> to vector<2x16xf32>
    %246 = vector.shape_cast %242 : vector<2x16xf32> to vector<1x1x2x16xf32>
    tpu.vector_store %arg7[%c0_87, %243, %c0_88, %c0_89], %246 {strides = array<i32>} : memref<1x8x2x16xf32, #tpu.memory_space<vmem>>, vector<1x1x2x16xf32>,
    %c8_i32 = arith.constant 8 : i32
    %c0_90 = arith.constant 0 : index
    %c0_91 = arith.constant 0 : index
    %247 = vector.load %arg10[%c0_90, %c0_91] : memref<2x16xf32, #tpu.memory_space<vmem>>, vector<2x16xf32>
    tpu.vector_store %arg10[%c0_90, %c0_91], %242 {strides = array<i32>} : memref<2x16xf32, #tpu.memory_space<vmem>>, vector<2x16xf32>,
    %c0_92 = arith.constant 0 : index
    %c0_93 = arith.constant 0 : index
    %248 = vector.load %arg11[%c0_92, %c0_93] : memref<2x32xf32, #tpu.memory_space<vmem>>, vector<2x32xf32>
    tpu.vector_store %arg11[%c0_92, %c0_93], %239 {strides = array<i32>} : memref<2x32xf32, #tpu.memory_space<vmem>>, vector<2x32xf32>,
    %c0_i32_94 = arith.constant 0 : i32
    %249 = arith.cmpi eq, %arg1, %c0_i32_94 : i32
    %250 = arith.extui %249 : i1 to i32
    %c0_i32_95 = arith.constant 0 : i32
    %251 = arith.cmpi ne, %250, %c0_i32_95 : i32
    scf.if %251 {
      %c0_96 = arith.constant 0 : index
      %c0_97 = arith.constant 0 : index
      %c0_98 = arith.constant 0 : index
      %252 = vector.load %arg8[%c0_96, %c0_97, %c0_98] : memref<1x2x16xf32, #tpu.memory_space<vmem>>, vector<1x2x16xf32>
      %253 = vector.shape_cast %252 : vector<1x2x16xf32> to vector<2x16xf32>
      %254 = vector.shape_cast %242 : vector<2x16xf32> to vector<1x2x16xf32>
      tpu.vector_store %arg8[%c0_96, %c0_97, %c0_98], %254 {strides = array<i32>} : memref<1x2x16xf32, #tpu.memory_space<vmem>>, vector<1x2x16xf32>,
      %c0_99 = arith.constant 0 : index
      %c0_100 = arith.constant 0 : index
      %c0_101 = arith.constant 0 : index
      %255 = vector.load %arg9[%c0_99, %c0_100, %c0_101] : memref<1x2x32xf32, #tpu.memory_space<vmem>>, vector<1x2x32xf32>
      %256 = vector.shape_cast %255 : vector<1x2x32xf32> to vector<2x32xf32>
      %257 = vector.shape_cast %239 : vector<2x32xf32> to vector<1x2x32xf32>
      tpu.vector_store %arg9[%c0_99, %c0_100, %c0_101], %257 {strides = array<i32>} : memref<1x2x32xf32, #tpu.memory_space<vmem>>, vector<1x2x32xf32>,
    } else {
    }
    return
  }
  func.func @transform_0(%arg0: i32, %arg1: i32) -> (i32, i32, i32) {
    %c2_i32 = arith.constant 2 : i32
    %0 = arith.muli %c2_i32, %arg1 : i32
    %c0_i32 = arith.constant 0 : i32
    %1 = arith.subi %c0_i32, %0 : i32
    %2 = arith.muli %arg0, %1 : i32
    %3 = arith.addi %arg1, %2 : i32
    %c0_i32_0 = arith.constant 0 : i32
    %c0_i32_1 = arith.constant 0 : i32
    %c0_i32_2 = arith.constant 0 : i32
    return %3, %c0_i32_0, %c0_i32_1 : i32, i32, i32
  }
  func.func @transform_1(%arg0: i32, %arg1: i32) -> (i32, i32, i32) {
    %c0_i32 = arith.constant 0 : i32
    %c0_i32_0 = arith.constant 0 : i32
    %c0_i32_1 = arith.constant 0 : i32
    return %arg0, %c0_i32, %c0_i32_0 : i32, i32, i32
  }
  func.func @transform_2(%arg0: i32, %arg1: i32) -> (i32, i32, i32) {
    %c0_i32 = arith.constant 0 : i32
    %c0_i32_0 = arith.constant 0 : i32
    %c0_i32_1 = arith.constant 0 : i32
    return %arg0, %c0_i32, %c0_i32_0 : i32, i32, i32
  }
  func.func @transform_3(%arg0: i32, %arg1: i32) -> (i32, i32, i32) {
    %c0_i32 = arith.constant 0 : i32
    %c0_i32_0 = arith.constant 0 : i32
    %c0_i32_1 = arith.constant 0 : i32
    return %arg0, %c0_i32, %c0_i32_0 : i32, i32, i32
  }
  func.func @transform_4(%arg0: i32, %arg1: i32) -> (i32, i32, i32) {
    %c0_i32 = arith.constant 0 : i32
    %c0_i32_0 = arith.constant 0 : i32
    %c0_i32_1 = arith.constant 0 : i32
    return %arg0, %c0_i32, %c0_i32_0 : i32, i32, i32
  }
  func.func @transform_5(%arg0: i32, %arg1: i32) -> (i32, i32, i32, i32) {
    %c2_i32 = arith.constant 2 : i32
    %0 = arith.muli %c2_i32, %arg1 : i32
    %c0_i32 = arith.constant 0 : i32
    %1 = arith.subi %c0_i32, %0 : i32
    %2 = arith.muli %arg0, %1 : i32
    %3 = arith.addi %arg1, %2 : i32
    %c0_i32_0 = arith.constant 0 : i32
    %c0_i32_1 = arith.constant 0 : i32
    %c0_i32_2 = arith.constant 0 : i32
    return %arg0, %3, %c0_i32_0, %c0_i32_1 : i32, i32, i32, i32
  }
  func.func @transform_6(%arg0: i32, %arg1: i32) -> (i32, i32, i32) {
    %c0_i32 = arith.constant 0 : i32
    %c0_i32_0 = arith.constant 0 : i32
    %c0_i32_1 = arith.constant 0 : i32
    return %arg0, %c0_i32, %c0_i32_0 : i32, i32, i32
  }
  func.func @transform_7(%arg0: i32, %arg1: i32) -> (i32, i32, i32) {
    %c0_i32 = arith.constant 0 : i32
    %c0_i32_0 = arith.constant 0 : i32
    %c0_i32_1 = arith.constant 0 : i32
    return %arg0, %c0_i32, %c0_i32_0 : i32, i32, i32
  }
}

</mosaic_0001>

<llo_original>
// kernel: audio_encoder_forward.4
$region0: #{audio_encoder_forward.4}
  #allocation0 [shape = 'u32[]', space=smem, size = 0x4, offset = 0x4, fixed_abs, tag = 'smem constant byte address 0x4 - core index']
  #allocation1 [shape = 'u32[144,128]{1,0:T(1,128)}', space=vmem, size = 0x12000, scoped, tag = 'internal scratch']
  #allocation2 [shape = 'f32[2,16]{1,0:T(2,128)}', space=vmem, size = 0x400, scoped, tag = 'scratch operand']
  #allocation3 [shape = 'f32[2,32]{1,0:T(2,128)}', space=vmem, size = 0x400, scoped, tag = 'scratch operand']
  #allocation4 [shape = 'f32[8,2,128]{2,1,0:T(2,128)}', space=vmem, size = 0x2000, scoped, tag = 'scratch operand']
  %s0 = inlined_call_operand.vmem [shape: f32[8,2,128], index: 0, kind: input, shape index: {}]
  %s1 = inlined_call_operand.hbm [shape: f32[2,128,128], index: 1, kind: input, shape index: {}]
  %s2 = inlined_call_operand.vmem [shape: f32[2,16,128], index: 2, kind: input, shape index: {}]
  %s3 = inlined_call_operand.vmem [shape: f32[2,32,16], index: 3, kind: input, shape index: {}]
  %s4 = inlined_call_operand.vmem [shape: f32[2,1,128], index: 4, kind: input, shape index: {}]
  %s5 = inlined_call_operand.vmem [shape: f32[2,8,2,16], index: 5, kind: output, shape index: {0}]
  %s6 = inlined_call_operand.vmem [shape: f32[2,2,16], index: 6, kind: output, shape index: {1}]
  %s7 = inlined_call_operand.vmem [shape: f32[2,2,32], index: 7, kind: output, shape index: {2}]
  %8 = xla_tuple %s5, %s6, %s7
  %s9 = sld [smem:[#allocation0]]
  $region81: #{audio_encoder_forward.4} parent=0
    _
  %s11 = ssub.s32 1, %s9
  %s12 = scalar_select 0, %s11, %s9
  $region1: #{audio_encoder_forward.4} parent=0
    #allocation5 [shape = 'u8[131072]{0}', space=vmem, size = 0x20000, scoped, tag = 'input window, operand 1']
    #allocation6 [shape = 's32[2]{0}', space=sflag, size = 0x8, scoped, tag = 'scoped memory for audio_encoder_forward.4']
    %13 = vsyncpa [#allocation6], 0
    %s14 = scalar_lea.sflag [#allocation6], 1
    %15 = vsyncpa %s14, 0
    loop: start=0, step=1, limit=4
    $region2: #{audio_encoder_forward.4} parent=1 // loop_pre_header
      _
    $region3: #{audio_encoder_forward.4} parent=1 // loop_header
      %s17 = sphi 0, %s21
      %p18 = scmp.ge.s32.totalorder %s17, 4
      %s24 = sphi 0, %s36
      %s25 = sphi 0, %s32
      %s26 = sphi 0, %s24
      %s27 = sphi 0, %s25
      %s28 = sphi 0, %s26
      %s29 = sphi 0, %s27
      %s47 = sphi 0, %s49
      %s50 = sphi 0, %s47
      %s51 = sphi 0, %s50
      %s67 = sphi 0, %s51
      %s73 = sphi 0, %s75
      %s76 = sphi 0, %s73
      %s77 = sphi 0, %s76
      %s93 = sphi 0, %s77
      %s99 = sphi 0, %s101
      %s102 = sphi 0, %s99
      %s103 = sphi 0, %s102
      %s119 = sphi 0, %s103
      %s125 = sphi 0, %s127
      %s128 = sphi 0, %s125
      %s129 = sphi 0, %s128
      %s145 = sphi 0, %s129
      %s151 = sphi 0, %s153
      %s154 = sphi 0, %s151
      %s155 = sphi 0, %s154
      %s171 = sphi 0, %s155
      %s187 = sphi 0, %s189
      %s190 = sphi 0, %s187
      %s191 = sphi 0, %s190
      %s207 = sphi 0, %s191
      %s213 = sphi 0, %s215
      %s216 = sphi 0, %s213
      %s217 = sphi 0, %s216
      %s233 = sphi 0, %s217
      %s239 = sphi 0, %s241
      %s242 = sphi 0, %s239
      %s243 = sphi 0, %s242
      %s259 = sphi 0, %s243
    $region4: #{audio_encoder_forward.4} parent=1 // loop_header_branch
      %20 = sbr.rel (%p18) target = $region8
    $region5: #{audio_encoder_forward.4} parent=1 // loop_body
      %s22 = ssub.s32 %s17, 1
      %s23 = ssub.s32 %s17, 2
      %s30 = sadd.s32 1, %s25
      %p31 = scmp.ge.s32.totalorder %s30, 1
      %s32 = scalar_select %p31, 0, %s30
      %s33 = sadd.s32 1, %s24
      %s34 = scalar_select %p31, %s33, %s24
      %p35 = scmp.ge.s32.totalorder %s34, 2
      %s36 = scalar_select %p35, 0, %s34
      %s37 = smul.u32 %s25, 2
      %s38 = ssub.s32 0, %s37
      %s39 = smul.u32 %s24, %s38
      %s40 = sadd.s32 %s25, %s39
      %s41 = smul.u32 %s32, 2
      %s42 = ssub.s32 0, %s41
      %s43 = smul.u32 %s36, %s42
      %s44 = sadd.s32 %s32, %s43
      %s45 = ssub.s32 %s40, %s44
      %p46 = scmp.eq.s32.totalorder %s45, 0
      %s48 = sadd.s32 %s47, 1
      %s49 = scalar_select %p46, %s47, %s48
      %p52 = pneg %p46
      %p53 = scmp.eq.s32.totalorder %s17, 1
      %p54 = por %p52, %p53
      %p55 = scmp.ne.s32.totalorder %s47, %s50
      %p56 = scmp.eq.s32.totalorder %s17, 0
      %p57 = por %p55, %p56
      %p58 = scmp.ne.s32.totalorder %s47, %s50
      %p59 = scmp.eq.s32.totalorder %s22, 1
      %p60 = por %p58, %p59
      %p61 = scmp.ne.s32.totalorder %s50, %s51
      %p62 = scmp.eq.s32.totalorder %s22, 0
      %p63 = por %p61, %p62
      %p64 = scmp.ne.s32.totalorder %s50, %s51
      %p65 = scmp.eq.s32.totalorder %s23, 1
      %p66 = por %p64, %p65
      %p68 = scmp.ne.s32.totalorder %s51, %s67
      %p69 = scmp.eq.s32.totalorder %s23, 0
      %p70 = por %p68, %p69
      %s71 = ssub.s32 %s24, %s36
      %p72 = scmp.eq.s32.totalorder %s71, 0
      %s74 = sadd.s32 %s73, 1
      %s75 = scalar_select %p72, %s73, %s74
      %p78 = pneg %p72
      %p79 = scmp.eq.s32.totalorder %s17, 1
      %p80 = por %p78, %p79
      %p81 = scmp.ne.s32.totalorder %s73, %s76
      %p82 = scmp.eq.s32.totalorder %s17, 0
      %p83 = por %p81, %p82
      %p84 = scmp.ne.s32.totalorder %s73, %s76
      %p85 = scmp.eq.s32.totalorder %s22, 1
      %p86 = por %p84, %p85
      %p87 = scmp.ne.s32.totalorder %s76, %s77
      %p88 = scmp.eq.s32.totalorder %s22, 0
      %p89 = por %p87, %p88
      %p90 = scmp.ne.s32.totalorder %s76, %s77
      %p91 = scmp.eq.s32.totalorder %s23, 1
      %p92 = por %p90, %p91
      %p94 = scmp.ne.s32.totalorder %s77, %s93
      %p95 = scmp.eq.s32.totalorder %s23, 0
      %p96 = por %p94, %p95
      %s97 = ssub.s32 %s24, %s36
      %p98 = scmp.eq.s32.totalorder %s97, 0
      %s100 = sadd.s32 %s99, 1
      %s101 = scalar_select %p98, %s99, %s100
      %p104 = pneg %p98
      %p105 = scmp.eq.s32.totalorder %s17, 1
      %p106 = por %p104, %p105
      %p107 = scmp.ne.s32.totalorder %s99, %s102
      %p108 = scmp.eq.s32.totalorder %s17, 0
      %p109 = por %p107, %p108
      %p110 = scmp.ne.s32.totalorder %s99, %s102
      %p111 = scmp.eq.s32.totalorder %s22, 1
      %p112 = por %p110, %p111
      %p113 = scmp.ne.s32.totalorder %s102, %s103
      %p114 = scmp.eq.s32.totalorder %s22, 0
      %p115 = por %p113, %p114
      %p116 = scmp.ne.s32.totalorder %s102, %s103
      %p117 = scmp.eq.s32.totalorder %s23, 1
      %p118 = por %p116, %p117
      %p120 = scmp.ne.s32.totalorder %s103, %s119
      %p121 = scmp.eq.s32.totalorder %s23, 0
      %p122 = por %p120, %p121
      %s123 = ssub.s32 %s24, %s36
      %p124 = scmp.eq.s32.totalorder %s123, 0
      %s126 = sadd.s32 %s125, 1
      %s127 = scalar_select %p124, %s125, %s126
      %p130 = pneg %p124
      %p131 = scmp.eq.s32.totalorder %s17, 1
      %p132 = por %p130, %p131
      %p133 = scmp.ne.s32.totalorder %s125, %s128
      %p134 = scmp.eq.s32.totalorder %s17, 0
      %p135 = por %p133, %p134
      %p136 = scmp.ne.s32.totalorder %s125, %s128
      %p137 = scmp.eq.s32.totalorder %s22, 1
      %p138 = por %p136, %p137
      %p139 = scmp.ne.s32.totalorder %s128, %s129
      %p140 = scmp.eq.s32.totalorder %s22, 0
      %p141 = por %p139, %p140
      %p142 = scmp.ne.s32.totalorder %s128, %s129
      %p143 = scmp.eq.s32.totalorder %s23, 1
      %p144 = por %p142, %p143
      %p146 = scmp.ne.s32.totalorder %s129, %s145
      %p147 = scmp.eq.s32.totalorder %s23, 0
      %p148 = por %p146, %p147
      %s149 = ssub.s32 %s24, %s36
      %p150 = scmp.eq.s32.totalorder %s149, 0
      %s152 = sadd.s32 %s151, 1
      %s153 = scalar_select %p150, %s151, %s152
      %p156 = pneg %p150
      %p157 = scmp.eq.s32.totalorder %s17, 1
      %p158 = por %p156, %p157
      %p159 = scmp.ne.s32.totalorder %s151, %s154
      %p160 = scmp.eq.s32.totalorder %s17, 0
      %p161 = por %p159, %p160
      %p162 = scmp.ne.s32.totalorder %s151, %s154
      %p163 = scmp.eq.s32.totalorder %s22, 1
      %p164 = por %p162, %p163
      %p165 = scmp.ne.s32.totalorder %s154, %s155
      %p166 = scmp.eq.s32.totalorder %s22, 0
      %p167 = por %p165, %p166
      %p168 = scmp.ne.s32.totalorder %s154, %s155
      %p169 = scmp.eq.s32.totalorder %s23, 1
      %p170 = por %p168, %p169
      %p172 = scmp.ne.s32.totalorder %s155, %s171
      %p173 = scmp.eq.s32.totalorder %s23, 0
      %p174 = por %p172, %p173
      %s175 = smul.u32 %s25, 2
      %s176 = ssub.s32 0, %s175
      %s177 = smul.u32 %s24, %s176
      %s178 = sadd.s32 %s25, %s177
      %s179 = smul.u32 %s32, 2
      %s180 = ssub.s32 0, %s179
      %s181 = smul.u32 %s36, %s180
      %s182 = sadd.s32 %s32, %s181
      %s183 = ssub.s32 %s24, %s36
      %s184 = ssub.s32 %s178, %s182
      %s185 = sor.u32 %s183, %s184
      %p186 = scmp.eq.s32.totalorder %s185, 0
      %s188 = sadd.s32 %s187, 1
      %s189 = scalar_select %p186, %s187, %s188
      %p192 = pneg %p186
      %p193 = scmp.eq.s32.totalorder %s17, 1
      %p194 = por %p192, %p193
      %p195 = scmp.ne.s32.totalorder %s187, %s190
      %p196 = scmp.eq.s32.totalorder %s17, 0
      %p197 = por %p195, %p196
      %p198 = scmp.ne.s32.totalorder %s187, %s190
      %p199 = scmp.eq.s32.totalorder %s22, 1
      %p200 = por %p198, %p199
      %p201 = scmp.ne.s32.totalorder %s190, %s191
      %p202 = scmp.eq.s32.totalorder %s22, 0
      %p203 = por %p201, %p202
      %p204 = scmp.ne.s32.totalorder %s190, %s191
      %p205 = scmp.eq.s32.totalorder %s23, 1
      %p206 = por %p204, %p205
      %p208 = scmp.ne.s32.totalorder %s191, %s207
      %p209 = scmp.eq.s32.totalorder %s23, 0
      %p210 = por %p208, %p209
      %s211 = ssub.s32 %s24, %s36
      %p212 = scmp.eq.s32.totalorder %s211, 0
      %s214 = sadd.s32 %s213, 1
      %s215 = scalar_select %p212, %s213, %s214
      %p218 = pneg %p212
      %p219 = scmp.eq.s32.totalorder %s17, 1
      %p220 = por %p218, %p219
      %p221 = scmp.ne.s32.totalorder %s213, %s216
      %p222 = scmp.eq.s32.totalorder %s17, 0
      %p223 = por %p221, %p222
      %p224 = scmp.ne.s32.totalorder %s213, %s216
      %p225 = scmp.eq.s32.totalorder %s22, 1
      %p226 = por %p224, %p225
      %p227 = scmp.ne.s32.totalorder %s216, %s217
      %p228 = scmp.eq.s32.totalorder %s22, 0
      %p229 = por %p227, %p228
      %p230 = scmp.ne.s32.totalorder %s216, %s217
      %p231 = scmp.eq.s32.totalorder %s23, 1
      %p232 = por %p230, %p231
      %p234 = scmp.ne.s32.totalorder %s217, %s233
      %p235 = scmp.eq.s32.totalorder %s23, 0
      %p236 = por %p234, %p235
      %s237 = ssub.s32 %s24, %s36
      %p238 = scmp.eq.s32.totalorder %s237, 0
      %s240 = sadd.s32 %s239, 1
      %s241 = scalar_select %p238, %s239, %s240
      %p244 = pneg %p238
      %p245 = scmp.eq.s32.totalorder %s17, 1
      %p246 = por %p244, %p245
      %p247 = scmp.ne.s32.totalorder %s239, %s242
      %p248 = scmp.eq.s32.totalorder %s17, 0
      %p249 = por %p247, %p248
      %p250 = scmp.ne.s32.totalorder %s239, %s242
      %p251 = scmp.eq.s32.totalorder %s22, 1
      %p252 = por %p250, %p251
      %p253 = scmp.ne.s32.totalorder %s242, %s243
      %p254 = scmp.eq.s32.totalorder %s22, 0
      %p255 = por %p253, %p254
      %p256 = scmp.ne.s32.totalorder %s242, %s243
      %p257 = scmp.eq.s32.totalorder %s23, 1
      %p258 = por %p256, %p257
      %p260 = scmp.ne.s32.totalorder %s243, %s259
      %p261 = scmp.eq.s32.totalorder %s23, 0
      %p262 = por %p260, %p261
      %p263 = scmp.le.s32.totalorder 1, %s17
      %p264 = scmp.lt.s32.totalorder %s17, 3
      %p265 = pnand %p263, %p264
      %p266 = pneg %p265
      // Predicated region
      $region9: #{audio_encoder_forward.4} parent=5 // pred_check
        _
      $region10: #{audio_encoder_forward.4} parent=5 // pred_check_branch
        %268 = sbr.rel (%p265) target = $region12
      $region11: #{audio_encoder_forward.4} parent=5 // pred_region
        %s269 = ssub.s32 %s17, 1
      $region12: #{audio_encoder_forward.4} parent=5 // pred_fallthru
        _
      %p270 = scmp.lt.s32.totalorder %s17, 2
      // Predicated region
      $region13: #{audio_encoder_forward.4} parent=5 // pred_check
        %p271 = pneg %p270
      $region14: #{audio_encoder_forward.4} parent=5 // pred_check_branch
        %273 = sbr.rel (%p271) target = $region16
      $region15: #{audio_encoder_forward.4} parent=5 // pred_region
        // Predicated region
        $region17: #{audio_encoder_forward.4} parent=15 // pred_check
          %p274 = pneg %p57
        $region18: #{audio_encoder_forward.4} parent=15 // pred_check_branch
          %276 = sbr.rel (%p274) target = $region20
        $region19: #{audio_encoder_forward.4} parent=15 // pred_region
          %s277 = smul.u32 %s25, 2
          %s278 = ssub.s32 0, %s277
          %s279 = smul.u32 %s24, %s278
          %s280 = sadd.s32 %s25, %s279
          %s281 = smul.u32 8, %s280
          %p282 = scmp.lt.s32.totalorder %s281, 7
          %s283 = scalar_select %p282, %s281, 7
          %s284 = smul.addr %s283, 2
          %s285 = scalar_lea.vmem %s0, %s284
          %s286 = smul.u32 %s25, 2
          %s287 = ssub.s32 0, %s286
          %s288 = smul.u32 %s24, %s287
          %s289 = sadd.s32 %s25, %s288
          %s290 = smul.u32 8, %s289
        $region20: #{audio_encoder_forward.4} parent=15 // pred_fallthru
          _
        // Predicated region
        $region21: #{audio_encoder_forward.4} parent=15 // pred_check
          %p291 = pneg %p83
        $region22: #{audio_encoder_forward.4} parent=15 // pred_check_branch
          %293 = sbr.rel (%p291) target = $region24
        $region23: #{audio_encoder_forward.4} parent=15 // pred_region
          %s294 = sand.u32 %s73, 1
          %s295 = scalar_lea.sflag [#allocation6], %s294
          %s296 = sand.u32 %s73, 1
          %s297 = smul.addr %s296, 128
          %s298 = scalar_lea.vmem [#allocation5], %s297
          %s300 = ssub.s32 2048, 2048
          %301 = vsyncadd %s295, %s300
          %s302 = smul.addr %s24, 16
          %s303 = smul.addr %s302, 128
          %s304 = scalar_lea.hbm %s1, %s303
          %s305 = sshll.u32 %s298, 4
          %s306 = int_to_ptr.vmem [resolvable:$true] %s305
          %311 = dma.hbm_to_vmem [thread:$0]  %s304, 2048, %s306, %s295, 128, 128, 8
        $region24: #{audio_encoder_forward.4} parent=15 // pred_fallthru
          _
        // Predicated region
        $region25: #{audio_encoder_forward.4} parent=15 // pred_check
          %p312 = pneg %p109
        $region26: #{audio_encoder_forward.4} parent=15 // pred_check_branch
          %314 = sbr.rel (%p312) target = $region28
        $region27: #{audio_encoder_forward.4} parent=15 // pred_region
          %p315 = scmp.lt.s32.totalorder %s24, 1
          %s316 = scalar_select %p315, %s24, 1
          %s317 = smul.addr %s316, 2
          %s318 = smul.addr %s317, 8
          %s319 = scalar_lea.vmem %s2, %s318
        $region28: #{audio_encoder_forward.4} parent=15 // pred_fallthru
          _
        // Predicated region
        $region29: #{audio_encoder_forward.4} parent=15 // pred_check
          %p320 = pneg %p135
        $region30: #{audio_encoder_forward.4} parent=15 // pred_check_branch
          %322 = sbr.rel (%p320) target = $region32
        $region31: #{audio_encoder_forward.4} parent=15 // pred_region
          %p323 = scmp.lt.s32.totalorder %s24, 1
          %s324 = scalar_select %p323, %s24, 1
          %s325 = smul.addr %s324, 4
          %s326 = smul.addr %s325, 8
          %s327 = scalar_lea.vmem %s3, %s326
        $region32: #{audio_encoder_forward.4} parent=15 // pred_fallthru
          _
        // Predicated region
        $region33: #{audio_encoder_forward.4} parent=15 // pred_check
          %p328 = pneg %p161
        $region34: #{audio_encoder_forward.4} parent=15 // pred_check_branch
          %330 = sbr.rel (%p328) target = $region36
        $region35: #{audio_encoder_forward.4} parent=15 // pred_region
          %p331 = scmp.lt.s32.totalorder %s24, 1
          %s332 = scalar_select %p331, %s24, 1
          %s333 = scalar_lea.vmem %s4, %s332
        $region36: #{audio_encoder_forward.4} parent=15 // pred_fallthru
          _
      $region16: #{audio_encoder_forward.4} parent=5 // pred_fallthru
        _
      %p334 = scmp.le.s32.totalorder 1, %s17
      %p335 = scmp.lt.s32.totalorder %s17, 3
      %p336 = pnand %p334, %p335
      %p337 = pneg %p336
      // Predicated region
      $region37: #{audio_encoder_forward.4} parent=5 // pred_check
        _
      $region38: #{audio_encoder_forward.4} parent=5 // pred_check_branch
        %339 = sbr.rel (%p336) target = $region40
      $region39: #{audio_encoder_forward.4} parent=5 // pred_region
        %s340 = ssub.s32 %s17, 1
        %s341 = sand.u32 %s76, 1
        %s342 = scalar_lea.sflag [#allocation6], %s341
        %s343 = sand.u32 %s76, 1
        %s344 = smul.addr %s343, 128
        %s345 = scalar_lea.vmem [#allocation5], %s344
        // Predicated region
        $region41: #{audio_encoder_forward.4} parent=39 // pred_check
          %p346 = pneg %p89
        $region42: #{audio_encoder_forward.4} parent=39 // pred_check_branch
          %348 = sbr.rel (%p346) target = $region44
        $region43: #{audio_encoder_forward.4} parent=39 // pred_region
          %349 = dma.done %s342, 2048
        $region44: #{audio_encoder_forward.4} parent=39 // pred_fallthru
          _
        %s350 = smul.u32 %s27, 2
        %s351 = ssub.s32 0, %s350
        %s352 = smul.u32 %s26, %s351
        %s353 = sadd.s32 %s27, %s352
        %s354 = smul.u32 8, %s353
        %p355 = scmp.lt.s32.totalorder %s354, 7
        %s356 = scalar_select %p355, %s354, 7
        %s357 = smul.addr %s356, 2
        %s358 = scalar_lea.vmem %s0, %s357
        %p359 = pneg %p63
        %p360 = pneg %p60
        %s361 = sand.u32 %s76, 1
        %s362 = scalar_lea.sflag [#allocation6], %s361
        %s363 = sand.u32 %s76, 1
        %s364 = smul.addr %s363, 128
        %s365 = scalar_lea.vmem [#allocation5], %s364
        %p366 = pneg %p89
        %p367 = pneg %p86
        %p368 = scmp.lt.s32.totalorder %s26, 1
        %s369 = scalar_select %p368, %s26, 1
        %s370 = smul.addr %s369, 2
        %s371 = smul.addr %s370, 8
        %s372 = scalar_lea.vmem %s2, %s371
        %p373 = pneg %p115
        %p374 = pneg %p112
        %p375 = scmp.lt.s32.totalorder %s26, 1
        %s376 = scalar_select %p375, %s26, 1
        %s377 = smul.addr %s376, 4
        %s378 = smul.addr %s377, 8
        %s379 = scalar_lea.vmem %s3, %s378
        %p380 = pneg %p141
        %p381 = pneg %p138
        %p382 = scmp.lt.s32.totalorder %s26, 1
        %s383 = scalar_select %p382, %s26, 1
        %s384 = scalar_lea.vmem %s4, %s383
        %p385 = pneg %p167
        %p386 = pneg %p164
        %p387 = pneg %p203
        %p388 = pneg %p200
        %s389 = smul.u32 %s27, 2
        %s390 = ssub.s32 0, %s389
        %s391 = smul.u32 %s26, %s390
        %s392 = sadd.s32 %s27, %s391
        %s393 = smul.u32 8, %s392
        %p394 = scmp.lt.s32.totalorder %s26, 1
        %s395 = scalar_select %p394, %s26, 1
        %p396 = scmp.lt.s32.totalorder %s393, 7
        %s397 = scalar_select %p396, %s393, 7
        %s398 = smul.addr %s395, 8
        %s399 = sadd.s32 %s397, %s398
        %s400 = smul.addr %s399, 2
        %s401 = scalar_lea.vmem %s5, %s400
        %p402 = pneg %p229
        %p403 = pneg %p226
        %p404 = scmp.lt.s32.totalorder %s26, 1
        %s405 = scalar_select %p404, %s26, 1
        %s406 = smul.addr %s405, 2
        %s407 = scalar_lea.vmem %s6, %s406
        %p408 = pneg %p255
        %p409 = pneg %p252
        %p410 = scmp.lt.s32.totalorder %s26, 1
        %s411 = scalar_select %p410, %s26, 1
        %s412 = smul.addr %s411, 2
        %s413 = scalar_lea.vmem %s7, %s412
        %s414 = smul.u32 %s27, 2
        %s415 = ssub.s32 0, %s414
        %s416 = smul.u32 %s26, %s415
        %s417 = sadd.s32 %s27, %s416
        %s418 = smul.u32 8, %s417
        %p419 = scmp.lt.s32.totalorder %s418, 7
        %s420 = scalar_select %p419, %s418, 7
        %s421 = smul.addr %s420, 2
        %s422 = scalar_lea.vmem %s0, %s421
        %s423 = smul.u32 %s27, 2
        %s424 = ssub.s32 0, %s423
        %s425 = smul.u32 %s26, %s424
        %s426 = sadd.s32 %s27, %s425
        %s427 = smul.u32 8, %s426
        %p428 = scmp.lt.s32.totalorder %s26, 1
        %s429 = scalar_select %p428, %s26, 1
        %s430 = smul.addr %s429, 2
        %s431 = smul.addr %s430, 8
        %s432 = scalar_lea.vmem %s2, %s431
        %p433 = scmp.lt.s32.totalorder %s26, 1
        %s434 = scalar_select %p433, %s26, 1
        %s435 = smul.addr %s434, 4
        %s436 = smul.addr %s435, 8
        %s437 = scalar_lea.vmem %s3, %s436
        %p438 = scmp.lt.s32.totalorder %s26, 1
        %s439 = scalar_select %p438, %s26, 1
        %s440 = scalar_lea.vmem %s4, %s439
        %s441 = smul.u32 %s27, 2
        %s442 = ssub.s32 0, %s441
        %s443 = smul.u32 %s26, %s442
        %s444 = sadd.s32 %s27, %s443
        %s445 = smul.u32 8, %s444
        %p446 = scmp.lt.s32.totalorder %s26, 1
        %s447 = scalar_select %p446, %s26, 1
        %p448 = scmp.lt.s32.totalorder %s445, 7
        %s449 = scalar_select %p448, %s445, 7
        %s450 = smul.addr %s447, 8
        %s451 = sadd.s32 %s449, %s450
        %s452 = smul.addr %s451, 2
        %s453 = scalar_lea.vmem %s5, %s452
        %s454 = smul.u32 %s27, 2
        %s455 = ssub.s32 0, %s454
        %s456 = smul.u32 %s26, %s455
        %s457 = sadd.s32 %s27, %s456
        %s458 = smul.u32 8, %s457
        %p459 = scmp.lt.s32.totalorder %s26, 1
        %s460 = scalar_select %p459, %s26, 1
        %s461 = smul.addr %s460, 2
        %s462 = scalar_lea.vmem %s6, %s461
        %p463 = scmp.lt.s32.totalorder %s26, 1
        %s464 = scalar_select %p463, %s26, 1
        %s465 = smul.addr %s464, 2
        %s466 = scalar_lea.vmem %s7, %s465
        %p467 = scmp.eq.s32.totalorder %s27, 0
        // Predicated region
        $region45: #{audio_encoder_forward.4} parent=39 // pred_check
          %p468 = pneg %p467
        $region46: #{audio_encoder_forward.4} parent=39 // pred_check_branch
          %470 = sbr.rel (%p468) target = $region48
        $region47: #{audio_encoder_forward.4} parent=39 // pred_region
          %vm471 = vcmask 123904
          %472 = vst.msk [vmem:[#allocation2] sm:$0x3] %vm471, 0.0
          %vm473 = vcmask 254976
          %474 = vst.msk [vmem:[#allocation3] sm:$0x3] %vm473, 0.0
        $region48: #{audio_encoder_forward.4} parent=39 // pred_fallthru
          _
        %v475 = vld [vmem:[%s422] sm:$0x3]
        %v476 = vld [vmem:[%s422 + $0x2] sm:$0x3]
        %v477 = vld [vmem:[%s422 + $0x4] sm:$0x3]
        %v478 = vld [vmem:[%s422 + $0x6] sm:$0x3]
        %v479 = vld [vmem:[%s422 + $0x8] sm:$0x3]
        %v480 = vld [vmem:[%s422 + $0xa] sm:$0x3]
        %v481 = vld [vmem:[%s422 + $0xc] sm:$0x3]
        %v482 = vld [vmem:[%s422 + $0xe] sm:$0x3]
        %v483 = vld [vmem:[%s345] sm:$0xff]
        %v484 = vld [vmem:[%s345 + $0x8] sm:$0xff]
        %v485 = vld [vmem:[%s345 + $0x10] sm:$0xff]
        %v486 = vld [vmem:[%s345 + $0x18] sm:$0xff]
        %v487 = vld [vmem:[%s345 + $0x20] sm:$0xff]
        %v488 = vld [vmem:[%s345 + $0x28] sm:$0xff]
        %v489 = vld [vmem:[%s345 + $0x30] sm:$0xff]
        %v490 = vld [vmem:[%s345 + $0x38] sm:$0xff]
        %v491 = vld [vmem:[%s345 + $0x40] sm:$0xff]
        %v492 = vld [vmem:[%s345 + $0x48] sm:$0xff]
        %v493 = vld [vmem:[%s345 + $0x50] sm:$0xff]
        %v494 = vld [vmem:[%s345 + $0x58] sm:$0xff]
        %v495 = vld [vmem:[%s345 + $0x60] sm:$0xff]
        %v496 = vld [vmem:[%s345 + $0x68] sm:$0xff]
        %v497 = vld [vmem:[%s345 + $0x70] sm:$0xff]
        %v498 = vld [vmem:[%s345 + $0x78] sm:$0xff]
        %v499 = vld [vmem:[%s440] sm:$0x1]
        %v501 = vlaneseq
        %v502 = vshrl.u32 %v501, 7
        %v503 = vsub.s32 0, %v502
        %v504 = vrot.slane %v499, %v503
        %v514 = vcombine.low %v475, %v476
        %v515 = vcombine.low %v477, %v478
        %v517 = vunpack.c.l.s4 1983009808
        %v518 = vunpack.c.0.s8 %v517
        %v519 = vlaneseq
        %v520 = vshrl.u32 %v519, 7
        %v521 = vsub.s32 %v518, %v520
        %v522 = vrot.slane %v514, %v521
        %v524 = vunpack.c.l.s4 1983009808
        %v525 = vunpack.c.0.s8 %v524
        %v526 = vlaneseq
        %v527 = vshrl.u32 %v526, 7
        %v528 = vsub.s32 %v525, %v527
        %v529 = vrot.slane %v515, %v528
        %v530 = vcombine.low %v522, %v529
        %v531 = vcombine.low %v479, %v480
        %v532 = vcombine.low %v481, %v482
        %v534 = vunpack.c.l.s4 1983009808
        %v535 = vunpack.c.0.s8 %v534
        %v536 = vlaneseq
        %v537 = vshrl.u32 %v536, 7
        %v538 = vsub.s32 %v535, %v537
        %v539 = vrot.slane %v531, %v538
        %v541 = vunpack.c.l.s4 1983009808
        %v542 = vunpack.c.0.s8 %v541
        %v543 = vlaneseq
        %v544 = vshrl.u32 %v543, 7
        %v545 = vsub.s32 %v542, %v544
        %v546 = vrot.slane %v532, %v545
        %v547 = vcombine.low %v539, %v546
        %550 = vmatprep.subr.mxu0 0.0
        %551 = vmatpush1.msra.mxu0 %v483
        %552 = vmatprep.subr.mxu0 0.0
        %553 = vmatpush1.msra.mxu0 %v484
        %554 = vmatprep.subr.mxu0 0.0
        %555 = vmatpush1.msra.mxu0 %v485
        %556 = vmatprep.subr.mxu0 0.0
        %557 = vmatpush1.msra.mxu0 %v486
        %558 = vmatprep.subr.mxu0 0.0
        %559 = vmatpush1.msra.mxu0 %v487
        %560 = vmatprep.subr.mxu0 0.0
        %561 = vmatpush1.msra.mxu0 %v488
        %562 = vmatprep.subr.mxu0 0.0
        %563 = vmatpush1.msra.mxu0 %v489
        %564 = vmatprep.subr.mxu0 0.0
        %565 = vmatpush1.msra.mxu0 %v490
        %566 = vmatprep.subr.mxu0 0.0
        %567 = vmatpush1.msra.mxu0 %v491
        %568 = vmatprep.subr.mxu0 0.0
        %569 = vmatpush1.msra.mxu0 %v492
        %570 = vmatprep.subr.mxu0 0.0
        %571 = vmatpush1.msra.mxu0 %v493
        %572 = vmatprep.subr.mxu0 0.0
        %573 = vmatpush1.msra.mxu0 %v494
        %574 = vmatprep.subr.mxu0 0.0
        %575 = vmatpush1.msra.mxu0 %v495
        %576 = vmatprep.subr.mxu0 0.0
        %577 = vmatpush1.msra.mxu0 %v496
        %578 = vmatprep.subr.mxu0 0.0
        %579 = vmatpush1.msra.mxu0 %v497
        %580 = vmatprep.subr.mxu0 0.0
        %581 = vmatpush1.msra.mxu0 %v498
        %582 = vmatprep.subr.mxu0 0.0
        %583 = vmatpush1.msra.mxu0 0.0
        %584 = vmatprep.subr.mxu0 0.0
        %585 = vmatpush1.msra.mxu0 0.0
        %586 = vmatprep.subr.mxu0 0.0
        %587 = vmatpush1.msra.mxu0 0.0
        %588 = vmatprep.subr.mxu0 0.0
        %589 = vmatpush1.msra.mxu0 0.0
        %590 = vmatprep.subr.mxu0 0.0
        %591 = vmatpush1.msra.mxu0 0.0
        %592 = vmatprep.subr.mxu0 0.0
        %593 = vmatpush1.msra.mxu0 0.0
        %594 = vmatprep.subr.mxu0 0.0
        %595 = vmatpush1.msra.mxu0 0.0
        %596 = vmatprep.subr.mxu0 0.0
        %597 = vmatpush1.msra.mxu0 0.0
        %598 = vmatprep.subr.mxu0 0.0
        %599 = vmatpush1.msra.mxu0 0.0
        %600 = vmatprep.subr.mxu0 0.0
        %601 = vmatpush1.msra.mxu0 0.0
        %602 = vmatprep.subr.mxu0 0.0
        %603 = vmatpush1.msra.mxu0 0.0
        %604 = vmatprep.subr.mxu0 0.0
        %605 = vmatpush1.msra.mxu0 0.0
        %606 = vmatprep.subr.mxu0 0.0
        %607 = vmatpush1.msra.mxu0 0.0
        %608 = vmatprep.subr.mxu0 0.0
        %609 = vmatpush1.msra.mxu0 0.0
        %610 = vmatprep.subr.mxu0 0.0
        %611 = vmatpush1.msra.mxu0 0.0
        %612 = vmatprep.subr.mxu0 0.0
        %613 = vmatpush1.msra.mxu0 0.0
        %614 = vmatprep.mubr.f32.mxu0 0.0
        %615 = vmatmul.mubr.f32.gmra.mrb[0].mxu0 %v530
        %v616 = vpop.f32.mrb[0].mxu0
        %v617 = vadd.f32 %v504, %v616
        %v618 = vpop.f32.mrb[0].mxu0
        %619 = vmatprep.mubr.f32.mxu0 0.0
        %620 = vmatmul.mubr.f32.gmra.mrb[0].mxu0 %v547
        %v621 = vpop.f32.mrb[0].mxu0
        %v622 = vadd.f32 %v504, %v621
        %v623 = vpop.f32.mrb[0].mxu0
        %624 = vdwg.mxu0
        %v627 = vcombine.high %v617, %v617
        %v629 = vunpack.c.l.s4 1983009808
        %v630 = vunpack.c.0.s8 %v629
        %v631 = vlaneseq
        %v632 = vshrl.u32 %v631, 7
        %v633 = vsub.s32 %v630, %v632
        %v634 = vrot.slane %v617, %v633
        %v636 = vunpack.c.l.s4 1983009808
        %v637 = vunpack.c.0.s8 %v636
        %v638 = vlaneseq
        %v639 = vshrl.u32 %v638, 7
        %v640 = vsub.s32 %v637, %v639
        %v641 = vrot.slane %v627, %v640
        %v642 = vcombine.high %v634, %v634
        %v643 = vcombine.high %v641, %v641
        %v644 = vcombine.high %v622, %v622
        %v646 = vunpack.c.l.s4 1983009808
        %v647 = vunpack.c.0.s8 %v646
        %v648 = vlaneseq
        %v649 = vshrl.u32 %v648, 7
        %v650 = vsub.s32 %v647, %v649
        %v651 = vrot.slane %v622, %v650
        %v653 = vunpack.c.l.s4 1983009808
        %v654 = vunpack.c.0.s8 %v653
        %v655 = vlaneseq
        %v656 = vshrl.u32 %v655, 7
        %v657 = vsub.s32 %v654, %v656
        %v658 = vrot.slane %v644, %v657
        %v659 = vcombine.high %v651, %v651
        %v660 = vcombine.high %v658, %v658
        %669 = vst [vmem:[#allocation4] sm:$0x3] %v634
        %670 = vst [vmem:[#allocation4 + $0x2] sm:$0x3] %v642
        %671 = vst [vmem:[#allocation4 + $0x4] sm:$0x3] %v641
        %672 = vst [vmem:[#allocation4 + $0x6] sm:$0x3] %v643
        %673 = vst [vmem:[#allocation4 + $0x8] sm:$0x3] %v651
        %674 = vst [vmem:[#allocation4 + $0xa] sm:$0x3] %v659
        %675 = vst [vmem:[#allocation4 + $0xc] sm:$0x3] %v658
        %676 = vst [vmem:[#allocation4 + $0xe] sm:$0x3] %v660
        %s677 = smul.u32 %s26, 7
        %s678 = smul.u32 %s26, 2
        %s679 = ssub.s32 1, %s678
        %v680 = vld [vmem:[%s432] sm:$0xff]
        %v681 = vld [vmem:[%s432 + $0x8] sm:$0xff]
        %v682 = vld [vmem:[%s437] sm:$0xff]
        %v683 = vld [vmem:[%s437 + $0x8] sm:$0xff]
        %v684 = vld [vmem:[%s437 + $0x10] sm:$0xff]
        %v685 = vld [vmem:[%s437 + $0x18] sm:$0xff]
        %v686 = vld [vmem:[#allocation2] sm:$0x3]
        %v687 = vld [vmem:[#allocation3] sm:$0x3]
        %s688 = smul.u32 %s677, 2
        %s689 = scalar_lea.vmem [#allocation4], %s688
        %v690 = vld [vmem:[%s689] sm:$0x3]
        %vm691 = vcmask 130048
        %v693 = vsel %vm691, %v686, 0
        %695 = vmatprep.subr.mxu0 0.0
        %696 = vmatpush1.msra.mxu0 %v680
        %697 = vmatprep.subr.mxu0 0.0
        %698 = vmatpush1.msra.mxu0 %v681
        %699 = vmatprep.subr.mxu0 0.0
        %700 = vmatpush1.msra.mxu0 0.0
        %701 = vmatprep.subr.mxu0 0.0
        %702 = vmatpush1.msra.mxu0 0.0
        %703 = vmatprep.subr.mxu0 0.0
        %704 = vmatpush1.msra.mxu0 0.0
        %705 = vmatprep.subr.mxu0 0.0
        %706 = vmatpush1.msra.mxu0 0.0
        %707 = vmatprep.subr.mxu0 0.0
        %708 = vmatpush1.msra.mxu0 0.0
        %709 = vmatprep.subr.mxu0 0.0
        %710 = vmatpush1.msra.mxu0 0.0
        %711 = vmatprep.subr.mxu0 0.0
        %712 = vmatpush1.msra.mxu0 0.0
        %713 = vmatprep.subr.mxu0 0.0
        %714 = vmatpush1.msra.mxu0 0.0
        %715 = vmatprep.subr.mxu0 0.0
        %716 = vmatpush1.msra.mxu0 0.0
        %717 = vmatprep.subr.mxu0 0.0
        %718 = vmatpush1.msra.mxu0 0.0
        %719 = vmatprep.subr.mxu0 0.0
        %720 = vmatpush1.msra.mxu0 0.0
        %721 = vmatprep.subr.mxu0 0.0
        %722 = vmatpush1.msra.mxu0 0.0
        %723 = vmatprep.subr.mxu0 0.0
        %724 = vmatpush1.msra.mxu0 0.0
        %725 = vmatprep.subr.mxu0 0.0
        %726 = vmatpush1.msra.mxu0 0.0
        %727 = vmatprep.subr.mxu0 0.0
        %728 = vmatpush1.msra.mxu0 0.0
        %729 = vmatprep.subr.mxu0 0.0
        %730 = vmatpush1.msra.mxu0 0.0
        %731 = vmatprep.subr.mxu0 0.0
        %732 = vmatpush1.msra.mxu0 0.0
        %733 = vmatprep.subr.mxu0 0.0
        %734 = vmatpush1.msra.mxu0 0.0
        %735 = vmatprep.subr.mxu0 0.0
        %736 = vmatpush1.msra.mxu0 0.0
        %737 = vmatprep.subr.mxu0 0.0
        %738 = vmatpush1.msra.mxu0 0.0
        %739 = vmatprep.subr.mxu0 0.0
        %740 = vmatpush1.msra.mxu0 0.0
        %741 = vmatprep.subr.mxu0 0.0
        %742 = vmatpush1.msra.mxu0 0.0
        %743 = vmatprep.subr.mxu0 0.0
        %744 = vmatpush1.msra.mxu0 0.0
        %745 = vmatprep.subr.mxu0 0.0
        %746 = vmatpush1.msra.mxu0 0.0
        %747 = vmatprep.subr.mxu0 0.0
        %748 = vmatpush1.msra.mxu0 0.0
        %749 = vmatprep.subr.mxu0 0.0
        %750 = vmatpush1.msra.mxu0 0.0
        %751 = vmatprep.subr.mxu0 0.0
        %752 = vmatpush1.msra.mxu0 0.0
        %753 = vmatprep.subr.mxu0 0.0
        %754 = vmatpush1.msra.mxu0 0.0
        %755 = vmatprep.subr.mxu0 0.0
        %756 = vmatpush1.msra.mxu0 0.0
        %757 = vmatprep.subr.mxu0 0.0
        %758 = vmatpush1.msra.mxu0 0.0
        %759 = vmatprep.mubr.f32.mxu0 0.0
        %760 = vmatmul.mubr.f32.gmra.mrb[0].mxu0 %v693
        %v761 = vpop.f32.mrb[0].mxu0
        %v762 = vadd.f32 0.0, %v761
        %v763 = vpop.f32.mrb[0].mxu0
        %764 = vdwg.mxu0
        %v765 = vadd.f32 %v690, %v762
        %v766 = vxor.u32 %v765, 2147483648
        %v767 = vmul.f32 %v766, 1.442695
        %v768 = vpow.pop %v767
        %v769 = vadd.f32 %v768, 1.0
        %v770 = vrcp.pop %v769
        %v771 = vmul.f32 1.0, %v770
        %v772 = vtanh.pop %v765
        %774 = vrot.lane.b32.xlu0 %v687, 32
        %v775 = vpop.permute.xlu0 %774
        %v777 = vmul.f32 %v771, %v775
        %779 = vrot.lane.b32.xlu0 %v772, 32
        %v780 = vpop.permute.xlu0 %779
        %v782 = vmul.f32 %v771, %v780
        %784 = vrot.lane.b32.xlu0 %v782, 32
        %v785 = vpop.permute.xlu0 %784
        %v787 = vadd.f32 %v777, %v785
        %v788 = vtanh.pop %v787
        %790 = vrot.lane.b32.xlu0 %v788, 32
        %v791 = vpop.permute.xlu0 %790
        %v793 = vmul.f32 %v771, %v791
        %795 = vrot.lane.b32.xlu0 %v793, 64
        %v796 = vpop.permute.xlu0 %795
        %vm797 = vcmask 261120
        %v798 = vsel %vm797, %v796, 0
        %800 = vmatprep.subr.mxu0 0.0
        %801 = vmatpush1.msra.mxu0 %v682
        %802 = vmatprep.subr.mxu0 0.0
        %803 = vmatpush1.msra.mxu0 %v683
        %804 = vmatprep.subr.mxu0 0.0
        %805 = vmatpush1.msra.mxu0 %v684
        %806 = vmatprep.subr.mxu0 0.0
        %807 = vmatpush1.msra.mxu0 %v685
        %808 = vmatprep.subr.mxu0 0.0
        %809 = vmatpush1.msra.mxu0 0.0
        %810 = vmatprep.subr.mxu0 0.0
        %811 = vmatpush1.msra.mxu0 0.0
        %812 = vmatprep.subr.mxu0 0.0
        %813 = vmatpush1.msra.mxu0 0.0
        %814 = vmatprep.subr.mxu0 0.0
        %815 = vmatpush1.msra.mxu0 0.0
        %816 = vmatprep.subr.mxu0 0.0
        %817 = vmatpush1.msra.mxu0 0.0
        %818 = vmatprep.subr.mxu0 0.0
        %819 = vmatpush1.msra.mxu0 0.0
        %820 = vmatprep.subr.mxu0 0.0
        %821 = vmatpush1.msra.mxu0 0.0
        %822 = vmatprep.subr.mxu0 0.0
        %823 = vmatpush1.msra.mxu0 0.0
        %824 = vmatprep.subr.mxu0 0.0
        %825 = vmatpush1.msra.mxu0 0.0
        %826 = vmatprep.subr.mxu0 0.0
        %827 = vmatpush1.msra.mxu0 0.0
        %828 = vmatprep.subr.mxu0 0.0
        %829 = vmatpush1.msra.mxu0 0.0
        %830 = vmatprep.subr.mxu0 0.0
        %831 = vmatpush1.msra.mxu0 0.0
        %832 = vmatprep.subr.mxu0 0.0
        %833 = vmatpush1.msra.mxu0 0.0
        %834 = vmatprep.subr.mxu0 0.0
        %835 = vmatpush1.msra.mxu0 0.0
        %836 = vmatprep.subr.mxu0 0.0
        %837 = vmatpush1.msra.mxu0 0.0
        %838 = vmatprep.subr.mxu0 0.0
        %839 = vmatpush1.msra.mxu0 0.0
        %840 = vmatprep.subr.mxu0 0.0
        %841 = vmatpush1.msra.mxu0 0.0
        %842 = vmatprep.subr.mxu0 0.0
        %843 = vmatpush1.msra.mxu0 0.0
        %844 = vmatprep.subr.mxu0 0.0
        %845 = vmatpush1.msra.mxu0 0.0
        %846 = vmatprep.subr.mxu0 0.0
        %847 = vmatpush1.msra.mxu0 0.0
        %848 = vmatprep.subr.mxu0 0.0
        %849 = vmatpush1.msra.mxu0 0.0
        %850 = vmatprep.subr.mxu0 0.0
        %851 = vmatpush1.msra.mxu0 0.0
        %852 = vmatprep.subr.mxu0 0.0
        %853 = vmatpush1.msra.mxu0 0.0
        %854 = vmatprep.subr.mxu0 0.0
        %855 = vmatpush1.msra.mxu0 0.0
        %856 = vmatprep.subr.mxu0 0.0
        %857 = vmatpush1.msra.mxu0 0.0
        %858 = vmatprep.subr.mxu0 0.0
        %859 = vmatpush1.msra.mxu0 0.0
        %860 = vmatprep.subr.mxu0 0.0
        %861 = vmatpush1.msra.mxu0 0.0
        %862 = vmatprep.subr.mxu0 0.0
        %863 = vmatpush1.msra.mxu0 0.0
        %864 = vmatprep.mubr.f32.mxu0 0.0
        %865 = vmatmul.mubr.f32.gmra.mrb[0].mxu0 %v798
        %v866 = vpop.f32.mrb[0].mxu0
        %v867 = vadd.f32 0.0, %v866
        %v868 = vpop.f32.mrb[0].mxu0
        %869 = vdwg.mxu0
        %s870 = scalar_lea.vmem %s453, %s688
        %vm871 = vcmask 123904
        %872 = vst.msk [vmem:[%s870] sm:$0x3] %vm871, %v867
        %s873 = sadd.s32 %s677, %s679
        %s874 = smul.u32 %s873, 2
        %s875 = scalar_lea.vmem [#allocation4], %s874
        %v876 = vld [vmem:[%s875] sm:$0x3]
        %v878 = vsel %vm691, %v867, 0
        %880 = vmatprep.subr.mxu0 0.0
        %881 = vmatpush1.msra.mxu0 %v680
        %882 = vmatprep.subr.mxu0 0.0
        %883 = vmatpush1.msra.mxu0 %v681
        %884 = vmatprep.subr.mxu0 0.0
        %885 = vmatpush1.msra.mxu0 0.0
        %886 = vmatprep.subr.mxu0 0.0
        %887 = vmatpush1.msra.mxu0 0.0
        %888 = vmatprep.subr.mxu0 0.0
        %889 = vmatpush1.msra.mxu0 0.0
        %890 = vmatprep.subr.mxu0 0.0
        %891 = vmatpush1.msra.mxu0 0.0
        %892 = vmatprep.subr.mxu0 0.0
        %893 = vmatpush1.msra.mxu0 0.0
        %894 = vmatprep.subr.mxu0 0.0
        %895 = vmatpush1.msra.mxu0 0.0
        %896 = vmatprep.subr.mxu0 0.0
        %897 = vmatpush1.msra.mxu0 0.0
        %898 = vmatprep.subr.mxu0 0.0
        %899 = vmatpush1.msra.mxu0 0.0
        %900 = vmatprep.subr.mxu0 0.0
        %901 = vmatpush1.msra.mxu0 0.0
        %902 = vmatprep.subr.mxu0 0.0
        %903 = vmatpush1.msra.mxu0 0.0
        %904 = vmatprep.subr.mxu0 0.0
        %905 = vmatpush1.msra.mxu0 0.0
        %906 = vmatprep.subr.mxu0 0.0
        %907 = vmatpush1.msra.mxu0 0.0
        %908 = vmatprep.subr.mxu0 0.0
        %909 = vmatpush1.msra.mxu0 0.0
        %910 = vmatprep.subr.mxu0 0.0
        %911 = vmatpush1.msra.mxu0 0.0
        %912 = vmatprep.subr.mxu0 0.0
        %913 = vmatpush1.msra.mxu0 0.0
        %914 = vmatprep.subr.mxu0 0.0
        %915 = vmatpush1.msra.mxu0 0.0
        %916 = vmatprep.subr.mxu0 0.0
        %917 = vmatpush1.msra.mxu0 0.0
        %918 = vmatprep.subr.mxu0 0.0
        %919 = vmatpush1.msra.mxu0 0.0
        %920 = vmatprep.subr.mxu0 0.0
        %921 = vmatpush1.msra.mxu0 0.0
        %922 = vmatprep.subr.mxu0 0.0
        %923 = vmatpush1.msra.mxu0 0.0
        %924 = vmatprep.subr.mxu0 0.0
        %925 = vmatpush1.msra.mxu0 0.0
        %926 = vmatprep.subr.mxu0 0.0
        %927 = vmatpush1.msra.mxu0 0.0
        %928 = vmatprep.subr.mxu0 0.0
        %929 = vmatpush1.msra.mxu0 0.0
        %930 = vmatprep.subr.mxu0 0.0
        %931 = vmatpush1.msra.mxu0 0.0
        %932 = vmatprep.subr.mxu0 0.0
        %933 = vmatpush1.msra.mxu0 0.0
        %934 = vmatprep.subr.mxu0 0.0
        %935 = vmatpush1.msra.mxu0 0.0
        %936 = vmatprep.subr.mxu0 0.0
        %937 = vmatpush1.msra.mxu0 0.0
        %938 = vmatprep.subr.mxu0 0.0
        %939 = vmatpush1.msra.mxu0 0.0
        %940 = vmatprep.subr.mxu0 0.0
        %941 = vmatpush1.msra.mxu0 0.0
        %942 = vmatprep.subr.mxu0 0.0
        %943 = vmatpush1.msra.mxu0 0.0
        %944 = vmatprep.mubr.f32.mxu0 0.0
        %945 = vmatmul.mubr.f32.gmra.mrb[0].mxu0 %v878
        %v946 = vpop.f32.mrb[0].mxu0
        %v947 = vadd.f32 0.0, %v946
        %v948 = vpop.f32.mrb[0].mxu0
        %949 = vdwg.mxu0
        %v950 = vadd.f32 %v876, %v947
        %v951 = vxor.u32 %v950, 2147483648
        %v952 = vmul.f32 %v951, 1.442695
        %v953 = vpow.pop %v952
        %v954 = vadd.f32 %v953, 1.0
        %v955 = vrcp.pop %v954
        %v956 = vmul.f32 1.0, %v955
        %v957 = vtanh.pop %v950
        %v958 = vmul.f32 %v956, %v787
        %960 = vrot.lane.b32.xlu0 %v957, 32
        %v961 = vpop.permute.xlu0 %960
        %v963 = vmul.f32 %v956, %v961
        %965 = vrot.lane.b32.xlu0 %v963, 32
        %v966 = vpop.permute.xlu0 %965
        %v968 = vadd.f32 %v958, %v966
        %v969 = vtanh.pop %v968
        %971 = vrot.lane.b32.xlu0 %v969, 32
        %v972 = vpop.permute.xlu0 %971
        %v974 = vmul.f32 %v956, %v972
        %976 = vrot.lane.b32.xlu0 %v974, 64
        %v977 = vpop.permute.xlu0 %976
        %v978 = vsel %vm797, %v977, 0
        %980 = vmatprep.subr.mxu0 0.0
        %981 = vmatpush1.msra.mxu0 %v682
        %982 = vmatprep.subr.mxu0 0.0
        %983 = vmatpush1.msra.mxu0 %v683
        %984 = vmatprep.subr.mxu0 0.0
        %985 = vmatpush1.msra.mxu0 %v684
        %986 = vmatprep.subr.mxu0 0.0
        %987 = vmatpush1.msra.mxu0 %v685
        %988 = vmatprep.subr.mxu0 0.0
        %989 = vmatpush1.msra.mxu0 0.0
        %990 = vmatprep.subr.mxu0 0.0
        %991 = vmatpush1.msra.mxu0 0.0
        %992 = vmatprep.subr.mxu0 0.0
        %993 = vmatpush1.msra.mxu0 0.0
        %994 = vmatprep.subr.mxu0 0.0
        %995 = vmatpush1.msra.mxu0 0.0
        %996 = vmatprep.subr.mxu0 0.0
        %997 = vmatpush1.msra.mxu0 0.0
        %998 = vmatprep.subr.mxu0 0.0
        %999 = vmatpush1.msra.mxu0 0.0
        %1000 = vmatprep.subr.mxu0 0.0
        %1001 = vmatpush1.msra.mxu0 0.0
        %1002 = vmatprep.subr.mxu0 0.0
        %1003 = vmatpush1.msra.mxu0 0.0
        %1004 = vmatprep.subr.mxu0 0.0
        %1005 = vmatpush1.msra.mxu0 0.0
        %1006 = vmatprep.subr.mxu0 0.0
        %1007 = vmatpush1.msra.mxu0 0.0
        %1008 = vmatprep.subr.mxu0 0.0
        %1009 = vmatpush1.msra.mxu0 0.0
        %1010 = vmatprep.subr.mxu0 0.0
        %1011 = vmatpush1.msra.mxu0 0.0
        %1012 = vmatprep.subr.mxu0 0.0
        %1013 = vmatpush1.msra.mxu0 0.0
        %1014 = vmatprep.subr.mxu0 0.0
        %1015 = vmatpush1.msra.mxu0 0.0
        %1016 = vmatprep.subr.mxu0 0.0
        %1017 = vmatpush1.msra.mxu0 0.0
        %1018 = vmatprep.subr.mxu0 0.0
        %1019 = vmatpush1.msra.mxu0 0.0
        %1020 = vmatprep.subr.mxu0 0.0
        %1021 = vmatpush1.msra.mxu0 0.0
        %1022 = vmatprep.subr.mxu0 0.0
        %1023 = vmatpush1.msra.mxu0 0.0
        %1024 = vmatprep.subr.mxu0 0.0
        %1025 = vmatpush1.msra.mxu0 0.0
        %1026 = vmatprep.subr.mxu0 0.0
        %1027 = vmatpush1.msra.mxu0 0.0
        %1028 = vmatprep.subr.mxu0 0.0
        %1029 = vmatpush1.msra.mxu0 0.0
        %1030 = vmatprep.subr.mxu0 0.0
        %1031 = vmatpush1.msra.mxu0 0.0
        %1032 = vmatprep.subr.mxu0 0.0
        %1033 = vmatpush1.msra.mxu0 0.0
        %1034 = vmatprep.subr.mxu0 0.0
        %1035 = vmatpush1.msra.mxu0 0.0
        %1036 = vmatprep.subr.mxu0 0.0
        %1037 = vmatpush1.msra.mxu0 0.0
        %1038 = vmatprep.subr.mxu0 0.0
        %1039 = vmatpush1.msra.mxu0 0.0
        %1040 = vmatprep.subr.mxu0 0.0
        %1041 = vmatpush1.msra.mxu0 0.0
        %1042 = vmatprep.subr.mxu0 0.0
        %1043 = vmatpush1.msra.mxu0 0.0
        %1044 = vmatprep.mubr.f32.mxu0 0.0
        %1045 = vmatmul.mubr.f32.gmra.mrb[0].mxu0 %v978
        %v1046 = vpop.f32.mrb[0].mxu0
        %v1047 = vadd.f32 0.0, %v1046
        %v1048 = vpop.f32.mrb[0].mxu0
        %1049 = vdwg.mxu0
        %s1050 = scalar_lea.vmem %s453, %s874
        %1051 = vst.msk [vmem:[%s1050] sm:$0x3] %vm871, %v1047
        %s1052 = smul.u32 %s679, 2
        %s1053 = sadd.s32 %s677, %s1052
        %s1054 = smul.u32 %s1053, 2
        %s1055 = scalar_lea.vmem [#allocation4], %s1054
        %v1056 = vld [vmem:[%s1055] sm:$0x3]
        %v1058 = vsel %vm691, %v1047, 0
        %1060 = vmatprep.subr.mxu0 0.0
        %1061 = vmatpush1.msra.mxu0 %v680
        %1062 = vmatprep.subr.mxu0 0.0
        %1063 = vmatpush1.msra.mxu0 %v681
        %1064 = vmatprep.subr.mxu0 0.0
        %1065 = vmatpush1.msra.mxu0 0.0
        %1066 = vmatprep.subr.mxu0 0.0
        %1067 = vmatpush1.msra.mxu0 0.0
        %1068 = vmatprep.subr.mxu0 0.0
        %1069 = vmatpush1.msra.mxu0 0.0
        %1070 = vmatprep.subr.mxu0 0.0
        %1071 = vmatpush1.msra.mxu0 0.0
        %1072 = vmatprep.subr.mxu0 0.0
        %1073 = vmatpush1.msra.mxu0 0.0
        %1074 = vmatprep.subr.mxu0 0.0
        %1075 = vmatpush1.msra.mxu0 0.0
        %1076 = vmatprep.subr.mxu0 0.0
        %1077 = vmatpush1.msra.mxu0 0.0
        %1078 = vmatprep.subr.mxu0 0.0
        %1079 = vmatpush1.msra.mxu0 0.0
        %1080 = vmatprep.subr.mxu0 0.0
        %1081 = vmatpush1.msra.mxu0 0.0
        %1082 = vmatprep.subr.mxu0 0.0
        %1083 = vmatpush1.msra.mxu0 0.0
        %1084 = vmatprep.subr.mxu0 0.0
        %1085 = vmatpush1.msra.mxu0 0.0
        %1086 = vmatprep.subr.mxu0 0.0
        %1087 = vmatpush1.msra.mxu0 0.0
        %1088 = vmatprep.subr.mxu0 0.0
        %1089 = vmatpush1.msra.mxu0 0.0
        %1090 = vmatprep.subr.mxu0 0.0
        %1091 = vmatpush1.msra.mxu0 0.0
        %1092 = vmatprep.subr.mxu0 0.0
        %1093 = vmatpush1.msra.mxu0 0.0
        %1094 = vmatprep.subr.mxu0 0.0
        %1095 = vmatpush1.msra.mxu0 0.0
        %1096 = vmatprep.subr.mxu0 0.0
        %1097 = vmatpush1.msra.mxu0 0.0
        %1098 = vmatprep.subr.mxu0 0.0
        %1099 = vmatpush1.msra.mxu0 0.0
        %1100 = vmatprep.subr.mxu0 0.0
        %1101 = vmatpush1.msra.mxu0 0.0
        %1102 = vmatprep.subr.mxu0 0.0
        %1103 = vmatpush1.msra.mxu0 0.0
        %1104 = vmatprep.subr.mxu0 0.0
        %1105 = vmatpush1.msra.mxu0 0.0
        %1106 = vmatprep.subr.mxu0 0.0
        %1107 = vmatpush1.msra.mxu0 0.0
        %1108 = vmatprep.subr.mxu0 0.0
        %1109 = vmatpush1.msra.mxu0 0.0
        %1110 = vmatprep.subr.mxu0 0.0
        %1111 = vmatpush1.msra.mxu0 0.0
        %1112 = vmatprep.subr.mxu0 0.0
        %1113 = vmatpush1.msra.mxu0 0.0
        %1114 = vmatprep.subr.mxu0 0.0
        %1115 = vmatpush1.msra.mxu0 0.0
        %1116 = vmatprep.subr.mxu0 0.0
        %1117 = vmatpush1.msra.mxu0 0.0
        %1118 = vmatprep.subr.mxu0 0.0
        %1119 = vmatpush1.msra.mxu0 0.0
        %1120 = vmatprep.subr.mxu0 0.0
        %1121 = vmatpush1.msra.mxu0 0.0
        %1122 = vmatprep.subr.mxu0 0.0
        %1123 = vmatpush1.msra.mxu0 0.0
        %1124 = vmatprep.mubr.f32.mxu0 0.0
        %1125 = vmatmul.mubr.f32.gmra.mrb[0].mxu0 %v1058
        %v1126 = vpop.f32.mrb[0].mxu0
        %v1127 = vadd.f32 0.0, %v1126
        %v1128 = vpop.f32.mrb[0].mxu0
        %1129 = vdwg.mxu0
        %v1130 = vadd.f32 %v1056, %v1127
        %v1131 = vxor.u32 %v1130, 2147483648
        %v1132 = vmul.f32 %v1131, 1.442695
        %v1133 = vpow.pop %v1132
        %v1134 = vadd.f32 %v1133, 1.0
        %v1135 = vrcp.pop %v1134
        %v1136 = vmul.f32 1.0, %v1135
        %v1137 = vtanh.pop %v1130
        %v1138 = vmul.f32 %v1136, %v968
        %1140 = vrot.lane.b32.xlu0 %v1137, 32
        %v1141 = vpop.permute.xlu0 %1140
        %v1143 = vmul.f32 %v1136, %v1141
        %1145 = vrot.lane.b32.xlu0 %v1143, 32
        %v1146 = vpop.permute.xlu0 %1145
        %v1148 = vadd.f32 %v1138, %v1146
        %v1149 = vtanh.pop %v1148
        %1151 = vrot.lane.b32.xlu0 %v1149, 32
        %v1152 = vpop.permute.xlu0 %1151
        %v1154 = vmul.f32 %v1136, %v1152
        %1156 = vrot.lane.b32.xlu0 %v1154, 64
        %v1157 = vpop.permute.xlu0 %1156
        %v1158 = vsel %vm797, %v1157, 0
        %1160 = vmatprep.subr.mxu0 0.0
        %1161 = vmatpush1.msra.mxu0 %v682
        %1162 = vmatprep.subr.mxu0 0.0
        %1163 = vmatpush1.msra.mxu0 %v683
        %1164 = vmatprep.subr.mxu0 0.0
        %1165 = vmatpush1.msra.mxu0 %v684
        %1166 = vmatprep.subr.mxu0 0.0
        %1167 = vmatpush1.msra.mxu0 %v685
        %1168 = vmatprep.subr.mxu0 0.0
        %1169 = vmatpush1.msra.mxu0 0.0
        %1170 = vmatprep.subr.mxu0 0.0
        %1171 = vmatpush1.msra.mxu0 0.0
        %1172 = vmatprep.subr.mxu0 0.0
        %1173 = vmatpush1.msra.mxu0 0.0
        %1174 = vmatprep.subr.mxu0 0.0
        %1175 = vmatpush1.msra.mxu0 0.0
        %1176 = vmatprep.subr.mxu0 0.0
        %1177 = vmatpush1.msra.mxu0 0.0
        %1178 = vmatprep.subr.mxu0 0.0
        %1179 = vmatpush1.msra.mxu0 0.0
        %1180 = vmatprep.subr.mxu0 0.0
        %1181 = vmatpush1.msra.mxu0 0.0
        %1182 = vmatprep.subr.mxu0 0.0
        %1183 = vmatpush1.msra.mxu0 0.0
        %1184 = vmatprep.subr.mxu0 0.0
        %1185 = vmatpush1.msra.mxu0 0.0
        %1186 = vmatprep.subr.mxu0 0.0
        %1187 = vmatpush1.msra.mxu0 0.0
        %1188 = vmatprep.subr.mxu0 0.0
        %1189 = vmatpush1.msra.mxu0 0.0
        %1190 = vmatprep.subr.mxu0 0.0
        %1191 = vmatpush1.msra.mxu0 0.0
        %1192 = vmatprep.subr.mxu0 0.0
        %1193 = vmatpush1.msra.mxu0 0.0
        %1194 = vmatprep.subr.mxu0 0.0
        %1195 = vmatpush1.msra.mxu0 0.0
        %1196 = vmatprep.subr.mxu0 0.0
        %1197 = vmatpush1.msra.mxu0 0.0
        %1198 = vmatprep.subr.mxu0 0.0
        %1199 = vmatpush1.msra.mxu0 0.0
        %1200 = vmatprep.subr.mxu0 0.0
        %1201 = vmatpush1.msra.mxu0 0.0
        %1202 = vmatprep.subr.mxu0 0.0
        %1203 = vmatpush1.msra.mxu0 0.0
        %1204 = vmatprep.subr.mxu0 0.0
        %1205 = vmatpush1.msra.mxu0 0.0
        %1206 = vmatprep.subr.mxu0 0.0
        %1207 = vmatpush1.msra.mxu0 0.0
        %1208 = vmatprep.subr.mxu0 0.0
        %1209 = vmatpush1.msra.mxu0 0.0
        %1210 = vmatprep.subr.mxu0 0.0
        %1211 = vmatpush1.msra.mxu0 0.0
        %1212 = vmatprep.subr.mxu0 0.0
        %1213 = vmatpush1.msra.mxu0 0.0
        %1214 = vmatprep.subr.mxu0 0.0
        %1215 = vmatpush1.msra.mxu0 0.0
        %1216 = vmatprep.subr.mxu0 0.0
        %1217 = vmatpush1.msra.mxu0 0.0
        %1218 = vmatprep.subr.mxu0 0.0
        %1219 = vmatpush1.msra.mxu0 0.0
        %1220 = vmatprep.subr.mxu0 0.0
        %1221 = vmatpush1.msra.mxu0 0.0
        %1222 = vmatprep.subr.mxu0 0.0
        %1223 = vmatpush1.msra.mxu0 0.0
        %1224 = vmatprep.mubr.f32.mxu0 0.0
        %1225 = vmatmul.mubr.f32.gmra.mrb[0].mxu0 %v1158
        %v1226 = vpop.f32.mrb[0].mxu0
        %v1227 = vadd.f32 0.0, %v1226
        %v1228 = vpop.f32.mrb[0].mxu0
        %1229 = vdwg.mxu0
        %s1230 = scalar_lea.vmem %s453, %s1054
        %1231 = vst.msk [vmem:[%s1230] sm:$0x3] %vm871, %v1227
        %s1232 = smul.u32 %s679, 3
        %s1233 = sadd.s32 %s677, %s1232
        %s1234 = smul.u32 %s1233, 2
        %s1235 = scalar_lea.vmem [#allocation4], %s1234
        %v1236 = vld [vmem:[%s1235] sm:$0x3]
        %v1238 = vsel %vm691, %v1227, 0
        %1240 = vmatprep.subr.mxu0 0.0
        %1241 = vmatpush1.msra.mxu0 %v680
        %1242 = vmatprep.subr.mxu0 0.0
        %1243 = vmatpush1.msra.mxu0 %v681
        %1244 = vmatprep.subr.mxu0 0.0
        %1245 = vmatpush1.msra.mxu0 0.0
        %1246 = vmatprep.subr.mxu0 0.0
        %1247 = vmatpush1.msra.mxu0 0.0
        %1248 = vmatprep.subr.mxu0 0.0
        %1249 = vmatpush1.msra.mxu0 0.0
        %1250 = vmatprep.subr.mxu0 0.0
        %1251 = vmatpush1.msra.mxu0 0.0
        %1252 = vmatprep.subr.mxu0 0.0
        %1253 = vmatpush1.msra.mxu0 0.0
        %1254 = vmatprep.subr.mxu0 0.0
        %1255 = vmatpush1.msra.mxu0 0.0
        %1256 = vmatprep.subr.mxu0 0.0
        %1257 = vmatpush1.msra.mxu0 0.0
        %1258 = vmatprep.subr.mxu0 0.0
        %1259 = vmatpush1.msra.mxu0 0.0
        %1260 = vmatprep.subr.mxu0 0.0
        %1261 = vmatpush1.msra.mxu0 0.0
        %1262 = vmatprep.subr.mxu0 0.0
        %1263 = vmatpush1.msra.mxu0 0.0
        %1264 = vmatprep.subr.mxu0 0.0
        %1265 = vmatpush1.msra.mxu0 0.0
        %1266 = vmatprep.subr.mxu0 0.0
        %1267 = vmatpush1.msra.mxu0 0.0
        %1268 = vmatprep.subr.mxu0 0.0
        %1269 = vmatpush1.msra.mxu0 0.0
        %1270 = vmatprep.subr.mxu0 0.0
        %1271 = vmatpush1.msra.mxu0 0.0
        %1272 = vmatprep.subr.mxu0 0.0
        %1273 = vmatpush1.msra.mxu0 0.0
        %1274 = vmatprep.subr.mxu0 0.0
        %1275 = vmatpush1.msra.mxu0 0.0
        %1276 = vmatprep.subr.mxu0 0.0
        %1277 = vmatpush1.msra.mxu0 0.0
        %1278 = vmatprep.subr.mxu0 0.0
        %1279 = vmatpush1.msra.mxu0 0.0
        %1280 = vmatprep.subr.mxu0 0.0
        %1281 = vmatpush1.msra.mxu0 0.0
        %1282 = vmatprep.subr.mxu0 0.0
        %1283 = vmatpush1.msra.mxu0 0.0
        %1284 = vmatprep.subr.mxu0 0.0
        %1285 = vmatpush1.msra.mxu0 0.0
        %1286 = vmatprep.subr.mxu0 0.0
        %1287 = vmatpush1.msra.mxu0 0.0
        %1288 = vmatprep.subr.mxu0 0.0
        %1289 = vmatpush1.msra.mxu0 0.0
        %1290 = vmatprep.subr.mxu0 0.0
        %1291 = vmatpush1.msra.mxu0 0.0
        %1292 = vmatprep.subr.mxu0 0.0
        %1293 = vmatpush1.msra.mxu0 0.0
        %1294 = vmatprep.subr.mxu0 0.0
        %1295 = vmatpush1.msra.mxu0 0.0
        %1296 = vmatprep.subr.mxu0 0.0
        %1297 = vmatpush1.msra.mxu0 0.0
        %1298 = vmatprep.subr.mxu0 0.0
        %1299 = vmatpush1.msra.mxu0 0.0
        %1300 = vmatprep.subr.mxu0 0.0
        %1301 = vmatpush1.msra.mxu0 0.0
        %1302 = vmatprep.subr.mxu0 0.0
        %1303 = vmatpush1.msra.mxu0 0.0
        %1304 = vmatprep.mubr.f32.mxu0 0.0
        %1305 = vmatmul.mubr.f32.gmra.mrb[0].mxu0 %v1238
        %v1306 = vpop.f32.mrb[0].mxu0
        %v1307 = vadd.f32 0.0, %v1306
        %v1308 = vpop.f32.mrb[0].mxu0
        %1309 = vdwg.mxu0
        %v1310 = vadd.f32 %v1236, %v1307
        %v1311 = vxor.u32 %v1310, 2147483648
        %v1312 = vmul.f32 %v1311, 1.442695
        %v1313 = vpow.pop %v1312
        %v1314 = vadd.f32 %v1313, 1.0
        %v1315 = vrcp.pop %v1314
        %v1316 = vmul.f32 1.0, %v1315
        %v1317 = vtanh.pop %v1310
        %v1318 = vmul.f32 %v1316, %v1148
        %1320 = vrot.lane.b32.xlu0 %v1317, 32
        %v1321 = vpop.permute.xlu0 %1320
        %v1323 = vmul.f32 %v1316, %v1321
        %1325 = vrot.lane.b32.xlu0 %v1323, 32
        %v1326 = vpop.permute.xlu0 %1325
        %v1328 = vadd.f32 %v1318, %v1326
        %v1329 = vtanh.pop %v1328
        %1331 = vrot.lane.b32.xlu0 %v1329, 32
        %v1332 = vpop.permute.xlu0 %1331
        %v1334 = vmul.f32 %v1316, %v1332
        %1336 = vrot.lane.b32.xlu0 %v1334, 64
        %v1337 = vpop.permute.xlu0 %1336
        %v1338 = vsel %vm797, %v1337, 0
        %1340 = vmatprep.subr.mxu0 0.0
        %1341 = vmatpush1.msra.mxu0 %v682
        %1342 = vmatprep.subr.mxu0 0.0
        %1343 = vmatpush1.msra.mxu0 %v683
        %1344 = vmatprep.subr.mxu0 0.0
        %1345 = vmatpush1.msra.mxu0 %v684
        %1346 = vmatprep.subr.mxu0 0.0
        %1347 = vmatpush1.msra.mxu0 %v685
        %1348 = vmatprep.subr.mxu0 0.0
        %1349 = vmatpush1.msra.mxu0 0.0
        %1350 = vmatprep.subr.mxu0 0.0
        %1351 = vmatpush1.msra.mxu0 0.0
        %1352 = vmatprep.subr.mxu0 0.0
        %1353 = vmatpush1.msra.mxu0 0.0
        %1354 = vmatprep.subr.mxu0 0.0
        %1355 = vmatpush1.msra.mxu0 0.0
        %1356 = vmatprep.subr.mxu0 0.0
        %1357 = vmatpush1.msra.mxu0 0.0
        %1358 = vmatprep.subr.mxu0 0.0
        %1359 = vmatpush1.msra.mxu0 0.0
        %1360 = vmatprep.subr.mxu0 0.0
        %1361 = vmatpush1.msra.mxu0 0.0
        %1362 = vmatprep.subr.mxu0 0.0
        %1363 = vmatpush1.msra.mxu0 0.0
        %1364 = vmatprep.subr.mxu0 0.0
        %1365 = vmatpush1.msra.mxu0 0.0
        %1366 = vmatprep.subr.mxu0 0.0
        %1367 = vmatpush1.msra.mxu0 0.0
        %1368 = vmatprep.subr.mxu0 0.0
        %1369 = vmatpush1.msra.mxu0 0.0
        %1370 = vmatprep.subr.mxu0 0.0
        %1371 = vmatpush1.msra.mxu0 0.0
        %1372 = vmatprep.subr.mxu0 0.0
        %1373 = vmatpush1.msra.mxu0 0.0
        %1374 = vmatprep.subr.mxu0 0.0
        %1375 = vmatpush1.msra.mxu0 0.0
        %1376 = vmatprep.subr.mxu0 0.0
        %1377 = vmatpush1.msra.mxu0 0.0
        %1378 = vmatprep.subr.mxu0 0.0
        %1379 = vmatpush1.msra.mxu0 0.0
        %1380 = vmatprep.subr.mxu0 0.0
        %1381 = vmatpush1.msra.mxu0 0.0
        %1382 = vmatprep.subr.mxu0 0.0
        %1383 = vmatpush1.msra.mxu0 0.0
        %1384 = vmatprep.subr.mxu0 0.0
        %1385 = vmatpush1.msra.mxu0 0.0
        %1386 = vmatprep.subr.mxu0 0.0
        %1387 = vmatpush1.msra.mxu0 0.0
        %1388 = vmatprep.subr.mxu0 0.0
        %1389 = vmatpush1.msra.mxu0 0.0
        %1390 = vmatprep.subr.mxu0 0.0
        %1391 = vmatpush1.msra.mxu0 0.0
        %1392 = vmatprep.subr.mxu0 0.0
        %1393 = vmatpush1.msra.mxu0 0.0
        %1394 = vmatprep.subr.mxu0 0.0
        %1395 = vmatpush1.msra.mxu0 0.0
        %1396 = vmatprep.subr.mxu0 0.0
        %1397 = vmatpush1.msra.mxu0 0.0
        %1398 = vmatprep.subr.mxu0 0.0
        %1399 = vmatpush1.msra.mxu0 0.0
        %1400 = vmatprep.subr.mxu0 0.0
        %1401 = vmatpush1.msra.mxu0 0.0
        %1402 = vmatprep.subr.mxu0 0.0
        %1403 = vmatpush1.msra.mxu0 0.0
        %1404 = vmatprep.mubr.f32.mxu0 0.0
        %1405 = vmatmul.mubr.f32.gmra.mrb[0].mxu0 %v1338
        %v1406 = vpop.f32.mrb[0].mxu0
        %v1407 = vadd.f32 0.0, %v1406
        %v1408 = vpop.f32.mrb[0].mxu0
        %1409 = vdwg.mxu0
        %s1410 = scalar_lea.vmem %s453, %s1234
        %1411 = vst.msk [vmem:[%s1410] sm:$0x3] %vm871, %v1407
        %s1412 = smul.u32 %s679, 4
        %s1413 = sadd.s32 %s677, %s1412
        %s1414 = smul.u32 %s1413, 2
        %s1415 = scalar_lea.vmem [#allocation4], %s1414
        %v1416 = vld [vmem:[%s1415] sm:$0x3]
        %v1418 = vsel %vm691, %v1407, 0
        %1420 = vmatprep.subr.mxu0 0.0
        %1421 = vmatpush1.msra.mxu0 %v680
        %1422 = vmatprep.subr.mxu0 0.0
        %1423 = vmatpush1.msra.mxu0 %v681
        %1424 = vmatprep.subr.mxu0 0.0
        %1425 = vmatpush1.msra.mxu0 0.0
        %1426 = vmatprep.subr.mxu0 0.0
        %1427 = vmatpush1.msra.mxu0 0.0
        %1428 = vmatprep.subr.mxu0 0.0
        %1429 = vmatpush1.msra.mxu0 0.0
        %1430 = vmatprep.subr.mxu0 0.0
        %1431 = vmatpush1.msra.mxu0 0.0
        %1432 = vmatprep.subr.mxu0 0.0
        %1433 = vmatpush1.msra.mxu0 0.0
        %1434 = vmatprep.subr.mxu0 0.0
        %1435 = vmatpush1.msra.mxu0 0.0
        %1436 = vmatprep.subr.mxu0 0.0
        %1437 = vmatpush1.msra.mxu0 0.0
        %1438 = vmatprep.subr.mxu0 0.0
        %1439 = vmatpush1.msra.mxu0 0.0
        %1440 = vmatprep.subr.mxu0 0.0
        %1441 = vmatpush1.msra.mxu0 0.0
        %1442 = vmatprep.subr.mxu0 0.0
        %1443 = vmatpush1.msra.mxu0 0.0
        %1444 = vmatprep.subr.mxu0 0.0
        %1445 = vmatpush1.msra.mxu0 0.0
        %1446 = vmatprep.subr.mxu0 0.0
        %1447 = vmatpush1.msra.mxu0 0.0
        %1448 = vmatprep.subr.mxu0 0.0
        %1449 = vmatpush1.msra.mxu0 0.0
        %1450 = vmatprep.subr.mxu0 0.0
        %1451 = vmatpush1.msra.mxu0 0.0
        %1452 = vmatprep.subr.mxu0 0.0
        %1453 = vmatpush1.msra.mxu0 0.0
        %1454 = vmatprep.subr.mxu0 0.0
        %1455 = vmatpush1.msra.mxu0 0.0
        %1456 = vmatprep.subr.mxu0 0.0
        %1457 = vmatpush1.msra.mxu0 0.0
        %1458 = vmatprep.subr.mxu0 0.0
        %1459 = vmatpush1.msra.mxu0 0.0
        %1460 = vmatprep.subr.mxu0 0.0
        %1461 = vmatpush1.msra.mxu0 0.0
        %1462 = vmatprep.subr.mxu0 0.0
        %1463 = vmatpush1.msra.mxu0 0.0
        %1464 = vmatprep.subr.mxu0 0.0
        %1465 = vmatpush1.msra.mxu0 0.0
        %1466 = vmatprep.subr.mxu0 0.0
        %1467 = vmatpush1.msra.mxu0 0.0
        %1468 = vmatprep.subr.mxu0 0.0
        %1469 = vmatpush1.msra.mxu0 0.0
        %1470 = vmatprep.subr.mxu0 0.0
        %1471 = vmatpush1.msra.mxu0 0.0
        %1472 = vmatprep.subr.mxu0 0.0
        %1473 = vmatpush1.msra.mxu0 0.0
        %1474 = vmatprep.subr.mxu0 0.0
        %1475 = vmatpush1.msra.mxu0 0.0
        %1476 = vmatprep.subr.mxu0 0.0
        %1477 = vmatpush1.msra.mxu0 0.0
        %1478 = vmatprep.subr.mxu0 0.0
        %1479 = vmatpush1.msra.mxu0 0.0
        %1480 = vmatprep.subr.mxu0 0.0
        %1481 = vmatpush1.msra.mxu0 0.0
        %1482 = vmatprep.subr.mxu0 0.0
        %1483 = vmatpush1.msra.mxu0 0.0
        %1484 = vmatprep.mubr.f32.mxu0 0.0
        %1485 = vmatmul.mubr.f32.gmra.mrb[0].mxu0 %v1418
        %v1486 = vpop.f32.mrb[0].mxu0
        %v1487 = vadd.f32 0.0, %v1486
        %v1488 = vpop.f32.mrb[0].mxu0
        %1489 = vdwg.mxu0
        %v1490 = vadd.f32 %v1416, %v1487
        %v1491 = vxor.u32 %v1490, 2147483648
        %v1492 = vmul.f32 %v1491, 1.442695
        %v1493 = vpow.pop %v1492
        %v1494 = vadd.f32 %v1493, 1.0
        %v1495 = vrcp.pop %v1494
        %v1496 = vmul.f32 1.0, %v1495
        %v1497 = vtanh.pop %v1490
        %v1498 = vmul.f32 %v1496, %v1328
        %1500 = vrot.lane.b32.xlu0 %v1497, 32
        %v1501 = vpop.permute.xlu0 %1500
        %v1503 = vmul.f32 %v1496, %v1501
        %1505 = vrot.lane.b32.xlu0 %v1503, 32
        %v1506 = vpop.permute.xlu0 %1505
        %v1508 = vadd.f32 %v1498, %v1506
        %v1509 = vtanh.pop %v1508
        %1511 = vrot.lane.b32.xlu0 %v1509, 32
        %v1512 = vpop.permute.xlu0 %1511
        %v1514 = vmul.f32 %v1496, %v1512
        %1516 = vrot.lane.b32.xlu0 %v1514, 64
        %v1517 = vpop.permute.xlu0 %1516
        %v1518 = vsel %vm797, %v1517, 0
        %1520 = vmatprep.subr.mxu0 0.0
        %1521 = vmatpush1.msra.mxu0 %v682
        %1522 = vmatprep.subr.mxu0 0.0
        %1523 = vmatpush1.msra.mxu0 %v683
        %1524 = vmatprep.subr.mxu0 0.0
        %1525 = vmatpush1.msra.mxu0 %v684
        %1526 = vmatprep.subr.mxu0 0.0
        %1527 = vmatpush1.msra.mxu0 %v685
        %1528 = vmatprep.subr.mxu0 0.0
        %1529 = vmatpush1.msra.mxu0 0.0
        %1530 = vmatprep.subr.mxu0 0.0
        %1531 = vmatpush1.msra.mxu0 0.0
        %1532 = vmatprep.subr.mxu0 0.0
        %1533 = vmatpush1.msra.mxu0 0.0
        %1534 = vmatprep.subr.mxu0 0.0
        %1535 = vmatpush1.msra.mxu0 0.0
        %1536 = vmatprep.subr.mxu0 0.0
        %1537 = vmatpush1.msra.mxu0 0.0
        %1538 = vmatprep.subr.mxu0 0.0
        %1539 = vmatpush1.msra.mxu0 0.0
        %1540 = vmatprep.subr.mxu0 0.0
        %1541 = vmatpush1.msra.mxu0 0.0
        %1542 = vmatprep.subr.mxu0 0.0
        %1543 = vmatpush1.msra.mxu0 0.0
        %1544 = vmatprep.subr.mxu0 0.0
        %1545 = vmatpush1.msra.mxu0 0.0
        %1546 = vmatprep.subr.mxu0 0.0
        %1547 = vmatpush1.msra.mxu0 0.0
        %1548 = vmatprep.subr.mxu0 0.0
        %1549 = vmatpush1.msra.mxu0 0.0
        %1550 = vmatprep.subr.mxu0 0.0
        %1551 = vmatpush1.msra.mxu0 0.0
        %1552 = vmatprep.subr.mxu0 0.0
        %1553 = vmatpush1.msra.mxu0 0.0
        %1554 = vmatprep.subr.mxu0 0.0
        %1555 = vmatpush1.msra.mxu0 0.0
        %1556 = vmatprep.subr.mxu0 0.0
        %1557 = vmatpush1.msra.mxu0 0.0
        %1558 = vmatprep.subr.mxu0 0.0
        %1559 = vmatpush1.msra.mxu0 0.0
        %1560 = vmatprep.subr.mxu0 0.0
        %1561 = vmatpush1.msra.mxu0 0.0
        %1562 = vmatprep.subr.mxu0 0.0
        %1563 = vmatpush1.msra.mxu0 0.0
        %1564 = vmatprep.subr.mxu0 0.0
        %1565 = vmatpush1.msra.mxu0 0.0
        %1566 = vmatprep.subr.mxu0 0.0
        %1567 = vmatpush1.msra.mxu0 0.0
        %1568 = vmatprep.subr.mxu0 0.0
        %1569 = vmatpush1.msra.mxu0 0.0
        %1570 = vmatprep.subr.mxu0 0.0
        %1571 = vmatpush1.msra.mxu0 0.0
        %1572 = vmatprep.subr.mxu0 0.0
        %1573 = vmatpush1.msra.mxu0 0.0
        %1574 = vmatprep.subr.mxu0 0.0
        %1575 = vmatpush1.msra.mxu0 0.0
        %1576 = vmatprep.subr.mxu0 0.0
        %1577 = vmatpush1.msra.mxu0 0.0
        %1578 = vmatprep.subr.mxu0 0.0
        %1579 = vmatpush1.msra.mxu0 0.0
        %1580 = vmatprep.subr.mxu0 0.0
        %1581 = vmatpush1.msra.mxu0 0.0
        %1582 = vmatprep.subr.mxu0 0.0
        %1583 = vmatpush1.msra.mxu0 0.0
        %1584 = vmatprep.mubr.f32.mxu0 0.0
        %1585 = vmatmul.mubr.f32.gmra.mrb[0].mxu0 %v1518
        %v1586 = vpop.f32.mrb[0].mxu0
        %v1587 = vadd.f32 0.0, %v1586
        %v1588 = vpop.f32.mrb[0].mxu0
        %1589 = vdwg.mxu0
        %s1590 = scalar_lea.vmem %s453, %s1414
        %1591 = vst.msk [vmem:[%s1590] sm:$0x3] %vm871, %v1587
        %s1592 = smul.u32 %s679, 5
        %s1593 = sadd.s32 %s677, %s1592
        %s1594 = smul.u32 %s1593, 2
        %s1595 = scalar_lea.vmem [#allocation4], %s1594
        %v1596 = vld [vmem:[%s1595] sm:$0x3]
        %v1598 = vsel %vm691, %v1587, 0
        %1600 = vmatprep.subr.mxu0 0.0
        %1601 = vmatpush1.msra.mxu0 %v680
        %1602 = vmatprep.subr.mxu0 0.0
        %1603 = vmatpush1.msra.mxu0 %v681
        %1604 = vmatprep.subr.mxu0 0.0
        %1605 = vmatpush1.msra.mxu0 0.0
        %1606 = vmatprep.subr.mxu0 0.0
        %1607 = vmatpush1.msra.mxu0 0.0
        %1608 = vmatprep.subr.mxu0 0.0
        %1609 = vmatpush1.msra.mxu0 0.0
        %1610 = vmatprep.subr.mxu0 0.0
        %1611 = vmatpush1.msra.mxu0 0.0
        %1612 = vmatprep.subr.mxu0 0.0
        %1613 = vmatpush1.msra.mxu0 0.0
        %1614 = vmatprep.subr.mxu0 0.0
        %1615 = vmatpush1.msra.mxu0 0.0
        %1616 = vmatprep.subr.mxu0 0.0
        %1617 = vmatpush1.msra.mxu0 0.0
        %1618 = vmatprep.subr.mxu0 0.0
        %1619 = vmatpush1.msra.mxu0 0.0
        %1620 = vmatprep.subr.mxu0 0.0
        %1621 = vmatpush1.msra.mxu0 0.0
        %1622 = vmatprep.subr.mxu0 0.0
        %1623 = vmatpush1.msra.mxu0 0.0
        %1624 = vmatprep.subr.mxu0 0.0
        %1625 = vmatpush1.msra.mxu0 0.0
        %1626 = vmatprep.subr.mxu0 0.0
        %1627 = vmatpush1.msra.mxu0 0.0
        %1628 = vmatprep.subr.mxu0 0.0
        %1629 = vmatpush1.msra.mxu0 0.0
        %1630 = vmatprep.subr.mxu0 0.0
        %1631 = vmatpush1.msra.mxu0 0.0
        %1632 = vmatprep.subr.mxu0 0.0
        %1633 = vmatpush1.msra.mxu0 0.0
        %1634 = vmatprep.subr.mxu0 0.0
        %1635 = vmatpush1.msra.mxu0 0.0
        %1636 = vmatprep.subr.mxu0 0.0
        %1637 = vmatpush1.msra.mxu0 0.0
        %1638 = vmatprep.subr.mxu0 0.0
        %1639 = vmatpush1.msra.mxu0 0.0
        %1640 = vmatprep.subr.mxu0 0.0
        %1641 = vmatpush1.msra.mxu0 0.0
        %1642 = vmatprep.subr.mxu0 0.0
        %1643 = vmatpush1.msra.mxu0 0.0
        %1644 = vmatprep.subr.mxu0 0.0
        %1645 = vmatpush1.msra.mxu0 0.0
        %1646 = vmatprep.subr.mxu0 0.0
        %1647 = vmatpush1.msra.mxu0 0.0
        %1648 = vmatprep.subr.mxu0 0.0
        %1649 = vmatpush1.msra.mxu0 0.0
        %1650 = vmatprep.subr.mxu0 0.0
        %1651 = vmatpush1.msra.mxu0 0.0
        %1652 = vmatprep.subr.mxu0 0.0
        %1653 = vmatpush1.msra.mxu0 0.0
        %1654 = vmatprep.subr.mxu0 0.0
        %1655 = vmatpush1.msra.mxu0 0.0
        %1656 = vmatprep.subr.mxu0 0.0
        %1657 = vmatpush1.msra.mxu0 0.0
        %1658 = vmatprep.subr.mxu0 0.0
        %1659 = vmatpush1.msra.mxu0 0.0
        %1660 = vmatprep.subr.mxu0 0.0
        %1661 = vmatpush1.msra.mxu0 0.0
        %1662 = vmatprep.subr.mxu0 0.0
        %1663 = vmatpush1.msra.mxu0 0.0
        %1664 = vmatprep.mubr.f32.mxu0 0.0
        %1665 = vmatmul.mubr.f32.gmra.mrb[0].mxu0 %v1598
        %v1666 = vpop.f32.mrb[0].mxu0
        %v1667 = vadd.f32 0.0, %v1666
        %v1668 = vpop.f32.mrb[0].mxu0
        %1669 = vdwg.mxu0
        %v1670 = vadd.f32 %v1596, %v1667
        %v1671 = vxor.u32 %v1670, 2147483648
        %v1672 = vmul.f32 %v1671, 1.442695
        %v1673 = vpow.pop %v1672
        %v1674 = vadd.f32 %v1673, 1.0
        %v1675 = vrcp.pop %v1674
        %v1676 = vmul.f32 1.0, %v1675
        %v1677 = vtanh.pop %v1670
        %v1678 = vmul.f32 %v1676, %v1508
        %1680 = vrot.lane.b32.xlu0 %v1677, 32
        %v1681 = vpop.permute.xlu0 %1680
        %v1683 = vmul.f32 %v1676, %v1681
        %1685 = vrot.lane.b32.xlu0 %v1683, 32
        %v1686 = vpop.permute.xlu0 %1685
        %v1688 = vadd.f32 %v1678, %v1686
        %v1689 = vtanh.pop %v1688
        %1691 = vrot.lane.b32.xlu0 %v1689, 32
        %v1692 = vpop.permute.xlu0 %1691
        %v1694 = vmul.f32 %v1676, %v1692
        %1696 = vrot.lane.b32.xlu0 %v1694, 64
        %v1697 = vpop.permute.xlu0 %1696
        %v1698 = vsel %vm797, %v1697, 0
        %1700 = vmatprep.subr.mxu0 0.0
        %1701 = vmatpush1.msra.mxu0 %v682
        %1702 = vmatprep.subr.mxu0 0.0
        %1703 = vmatpush1.msra.mxu0 %v683
        %1704 = vmatprep.subr.mxu0 0.0
        %1705 = vmatpush1.msra.mxu0 %v684
        %1706 = vmatprep.subr.mxu0 0.0
        %1707 = vmatpush1.msra.mxu0 %v685
        %1708 = vmatprep.subr.mxu0 0.0
        %1709 = vmatpush1.msra.mxu0 0.0
        %1710 = vmatprep.subr.mxu0 0.0
        %1711 = vmatpush1.msra.mxu0 0.0
        %1712 = vmatprep.subr.mxu0 0.0
        %1713 = vmatpush1.msra.mxu0 0.0
        %1714 = vmatprep.subr.mxu0 0.0
        %1715 = vmatpush1.msra.mxu0 0.0
        %1716 = vmatprep.subr.mxu0 0.0
        %1717 = vmatpush1.msra.mxu0 0.0
        %1718 = vmatprep.subr.mxu0 0.0
        %1719 = vmatpush1.msra.mxu0 0.0
        %1720 = vmatprep.subr.mxu0 0.0
        %1721 = vmatpush1.msra.mxu0 0.0
        %1722 = vmatprep.subr.mxu0 0.0
        %1723 = vmatpush1.msra.mxu0 0.0
        %1724 = vmatprep.subr.mxu0 0.0
        %1725 = vmatpush1.msra.mxu0 0.0
        %1726 = vmatprep.subr.mxu0 0.0
        %1727 = vmatpush1.msra.mxu0 0.0
        %1728 = vmatprep.subr.mxu0 0.0
        %1729 = vmatpush1.msra.mxu0 0.0
        %1730 = vmatprep.subr.mxu0 0.0
        %1731 = vmatpush1.msra.mxu0 0.0
        %1732 = vmatprep.subr.mxu0 0.0
        %1733 = vmatpush1.msra.mxu0 0.0
        %1734 = vmatprep.subr.mxu0 0.0
        %1735 = vmatpush1.msra.mxu0 0.0
        %1736 = vmatprep.subr.mxu0 0.0
        %1737 = vmatpush1.msra.mxu0 0.0
        %1738 = vmatprep.subr.mxu0 0.0
        %1739 = vmatpush1.msra.mxu0 0.0
        %1740 = vmatprep.subr.mxu0 0.0
        %1741 = vmatpush1.msra.mxu0 0.0
        %1742 = vmatprep.subr.mxu0 0.0
        %1743 = vmatpush1.msra.mxu0 0.0
        %1744 = vmatprep.subr.mxu0 0.0
        %1745 = vmatpush1.msra.mxu0 0.0
        %1746 = vmatprep.subr.mxu0 0.0
        %1747 = vmatpush1.msra.mxu0 0.0
        %1748 = vmatprep.subr.mxu0 0.0
        %1749 = vmatpush1.msra.mxu0 0.0
        %1750 = vmatprep.subr.mxu0 0.0
        %1751 = vmatpush1.msra.mxu0 0.0
        %1752 = vmatprep.subr.mxu0 0.0
        %1753 = vmatpush1.msra.mxu0 0.0
        %1754 = vmatprep.subr.mxu0 0.0
        %1755 = vmatpush1.msra.mxu0 0.0
        %1756 = vmatprep.subr.mxu0 0.0
        %1757 = vmatpush1.msra.mxu0 0.0
        %1758 = vmatprep.subr.mxu0 0.0
        %1759 = vmatpush1.msra.mxu0 0.0
        %1760 = vmatprep.subr.mxu0 0.0
        %1761 = vmatpush1.msra.mxu0 0.0
        %1762 = vmatprep.subr.mxu0 0.0
        %1763 = vmatpush1.msra.mxu0 0.0
        %1764 = vmatprep.mubr.f32.mxu0 0.0
        %1765 = vmatmul.mubr.f32.gmra.mrb[0].mxu0 %v1698
        %v1766 = vpop.f32.mrb[0].mxu0
        %v1767 = vadd.f32 0.0, %v1766
        %v1768 = vpop.f32.mrb[0].mxu0
        %1769 = vdwg.mxu0
        %s1770 = scalar_lea.vmem %s453, %s1594
        %1771 = vst.msk [vmem:[%s1770] sm:$0x3] %vm871, %v1767
        %s1772 = smul.u32 %s679, 6
        %s1773 = sadd.s32 %s677, %s1772
        %s1774 = smul.u32 %s1773, 2
        %s1775 = scalar_lea.vmem [#allocation4], %s1774
        %v1776 = vld [vmem:[%s1775] sm:$0x3]
        %v1778 = vsel %vm691, %v1767, 0
        %1780 = vmatprep.subr.mxu0 0.0
        %1781 = vmatpush1.msra.mxu0 %v680
        %1782 = vmatprep.subr.mxu0 0.0
        %1783 = vmatpush1.msra.mxu0 %v681
        %1784 = vmatprep.subr.mxu0 0.0
        %1785 = vmatpush1.msra.mxu0 0.0
        %1786 = vmatprep.subr.mxu0 0.0
        %1787 = vmatpush1.msra.mxu0 0.0
        %1788 = vmatprep.subr.mxu0 0.0
        %1789 = vmatpush1.msra.mxu0 0.0
        %1790 = vmatprep.subr.mxu0 0.0
        %1791 = vmatpush1.msra.mxu0 0.0
        %1792 = vmatprep.subr.mxu0 0.0
        %1793 = vmatpush1.msra.mxu0 0.0
        %1794 = vmatprep.subr.mxu0 0.0
        %1795 = vmatpush1.msra.mxu0 0.0
        %1796 = vmatprep.subr.mxu0 0.0
        %1797 = vmatpush1.msra.mxu0 0.0
        %1798 = vmatprep.subr.mxu0 0.0
        %1799 = vmatpush1.msra.mxu0 0.0
        %1800 = vmatprep.subr.mxu0 0.0
        %1801 = vmatpush1.msra.mxu0 0.0
        %1802 = vmatprep.subr.mxu0 0.0
        %1803 = vmatpush1.msra.mxu0 0.0
        %1804 = vmatprep.subr.mxu0 0.0
        %1805 = vmatpush1.msra.mxu0 0.0
        %1806 = vmatprep.subr.mxu0 0.0
        %1807 = vmatpush1.msra.mxu0 0.0
        %1808 = vmatprep.subr.mxu0 0.0
        %1809 = vmatpush1.msra.mxu0 0.0
        %1810 = vmatprep.subr.mxu0 0.0
        %1811 = vmatpush1.msra.mxu0 0.0
        %1812 = vmatprep.subr.mxu0 0.0
        %1813 = vmatpush1.msra.mxu0 0.0
        %1814 = vmatprep.subr.mxu0 0.0
        %1815 = vmatpush1.msra.mxu0 0.0
        %1816 = vmatprep.subr.mxu0 0.0
        %1817 = vmatpush1.msra.mxu0 0.0
        %1818 = vmatprep.subr.mxu0 0.0
        %1819 = vmatpush1.msra.mxu0 0.0
        %1820 = vmatprep.subr.mxu0 0.0
        %1821 = vmatpush1.msra.mxu0 0.0
        %1822 = vmatprep.subr.mxu0 0.0
        %1823 = vmatpush1.msra.mxu0 0.0
        %1824 = vmatprep.subr.mxu0 0.0
        %1825 = vmatpush1.msra.mxu0 0.0
        %1826 = vmatprep.subr.mxu0 0.0
        %1827 = vmatpush1.msra.mxu0 0.0
        %1828 = vmatprep.subr.mxu0 0.0
        %1829 = vmatpush1.msra.mxu0 0.0
        %1830 = vmatprep.subr.mxu0 0.0
        %1831 = vmatpush1.msra.mxu0 0.0
        %1832 = vmatprep.subr.mxu0 0.0
        %1833 = vmatpush1.msra.mxu0 0.0
        %1834 = vmatprep.subr.mxu0 0.0
        %1835 = vmatpush1.msra.mxu0 0.0
        %1836 = vmatprep.subr.mxu0 0.0
        %1837 = vmatpush1.msra.mxu0 0.0
        %1838 = vmatprep.subr.mxu0 0.0
        %1839 = vmatpush1.msra.mxu0 0.0
        %1840 = vmatprep.subr.mxu0 0.0
        %1841 = vmatpush1.msra.mxu0 0.0
        %1842 = vmatprep.subr.mxu0 0.0
        %1843 = vmatpush1.msra.mxu0 0.0
        %1844 = vmatprep.mubr.f32.mxu0 0.0
        %1845 = vmatmul.mubr.f32.gmra.mrb[0].mxu0 %v1778
        %v1846 = vpop.f32.mrb[0].mxu0
        %v1847 = vadd.f32 0.0, %v1846
        %v1848 = vpop.f32.mrb[0].mxu0
        %1849 = vdwg.mxu0
        %v1850 = vadd.f32 %v1776, %v1847
        %v1851 = vxor.u32 %v1850, 2147483648
        %v1852 = vmul.f32 %v1851, 1.442695
        %v1853 = vpow.pop %v1852
        %v1854 = vadd.f32 %v1853, 1.0
        %v1855 = vrcp.pop %v1854
        %v1856 = vmul.f32 1.0, %v1855
        %v1857 = vtanh.pop %v1850
        %v1858 = vmul.f32 %v1856, %v1688
        %1860 = vrot.lane.b32.xlu0 %v1857, 32
        %v1861 = vpop.permute.xlu0 %1860
        %v1863 = vmul.f32 %v1856, %v1861
        %1865 = vrot.lane.b32.xlu0 %v1863, 32
        %v1866 = vpop.permute.xlu0 %1865
        %v1868 = vadd.f32 %v1858, %v1866
        %v1869 = vtanh.pop %v1868
        %1871 = vrot.lane.b32.xlu0 %v1869, 32
        %v1872 = vpop.permute.xlu0 %1871
        %v1874 = vmul.f32 %v1856, %v1872
        %1876 = vrot.lane.b32.xlu0 %v1874, 64
        %v1877 = vpop.permute.xlu0 %1876
        %v1878 = vsel %vm797, %v1877, 0
        %1880 = vmatprep.subr.mxu0 0.0
        %1881 = vmatpush1.msra.mxu0 %v682
        %1882 = vmatprep.subr.mxu0 0.0
        %1883 = vmatpush1.msra.mxu0 %v683
        %1884 = vmatprep.subr.mxu0 0.0
        %1885 = vmatpush1.msra.mxu0 %v684
        %1886 = vmatprep.subr.mxu0 0.0
        %1887 = vmatpush1.msra.mxu0 %v685
        %1888 = vmatprep.subr.mxu0 0.0
        %1889 = vmatpush1.msra.mxu0 0.0
        %1890 = vmatprep.subr.mxu0 0.0
        %1891 = vmatpush1.msra.mxu0 0.0
        %1892 = vmatprep.subr.mxu0 0.0
        %1893 = vmatpush1.msra.mxu0 0.0
        %1894 = vmatprep.subr.mxu0 0.0
        %1895 = vmatpush1.msra.mxu0 0.0
        %1896 = vmatprep.subr.mxu0 0.0
        %1897 = vmatpush1.msra.mxu0 0.0
        %1898 = vmatprep.subr.mxu0 0.0
        %1899 = vmatpush1.msra.mxu0 0.0
        %1900 = vmatprep.subr.mxu0 0.0
        %1901 = vmatpush1.msra.mxu0 0.0
        %1902 = vmatprep.subr.mxu0 0.0
        %1903 = vmatpush1.msra.mxu0 0.0
        %1904 = vmatprep.subr.mxu0 0.0
        %1905 = vmatpush1.msra.mxu0 0.0
        %1906 = vmatprep.subr.mxu0 0.0
        %1907 = vmatpush1.msra.mxu0 0.0
        %1908 = vmatprep.subr.mxu0 0.0
        %1909 = vmatpush1.msra.mxu0 0.0
        %1910 = vmatprep.subr.mxu0 0.0
        %1911 = vmatpush1.msra.mxu0 0.0
        %1912 = vmatprep.subr.mxu0 0.0
        %1913 = vmatpush1.msra.mxu0 0.0
        %1914 = vmatprep.subr.mxu0 0.0
        %1915 = vmatpush1.msra.mxu0 0.0
        %1916 = vmatprep.subr.mxu0 0.0
        %1917 = vmatpush1.msra.mxu0 0.0
        %1918 = vmatprep.subr.mxu0 0.0
        %1919 = vmatpush1.msra.mxu0 0.0
        %1920 = vmatprep.subr.mxu0 0.0
        %1921 = vmatpush1.msra.mxu0 0.0
        %1922 = vmatprep.subr.mxu0 0.0
        %1923 = vmatpush1.msra.mxu0 0.0
        %1924 = vmatprep.subr.mxu0 0.0
        %1925 = vmatpush1.msra.mxu0 0.0
        %1926 = vmatprep.subr.mxu0 0.0
        %1927 = vmatpush1.msra.mxu0 0.0
        %1928 = vmatprep.subr.mxu0 0.0
        %1929 = vmatpush1.msra.mxu0 0.0
        %1930 = vmatprep.subr.mxu0 0.0
        %1931 = vmatpush1.msra.mxu0 0.0
        %1932 = vmatprep.subr.mxu0 0.0
        %1933 = vmatpush1.msra.mxu0 0.0
        %1934 = vmatprep.subr.mxu0 0.0
        %1935 = vmatpush1.msra.mxu0 0.0
        %1936 = vmatprep.subr.mxu0 0.0
        %1937 = vmatpush1.msra.mxu0 0.0
        %1938 = vmatprep.subr.mxu0 0.0
        %1939 = vmatpush1.msra.mxu0 0.0
        %1940 = vmatprep.subr.mxu0 0.0
        %1941 = vmatpush1.msra.mxu0 0.0
        %1942 = vmatprep.subr.mxu0 0.0
        %1943 = vmatpush1.msra.mxu0 0.0
        %1944 = vmatprep.mubr.f32.mxu0 0.0
        %1945 = vmatmul.mubr.f32.gmra.mrb[0].mxu0 %v1878
        %v1946 = vpop.f32.mrb[0].mxu0
        %v1947 = vadd.f32 0.0, %v1946
        %v1948 = vpop.f32.mrb[0].mxu0
        %1949 = vdwg.mxu0
        %s1950 = scalar_lea.vmem %s453, %s1774
        %1951 = vst.msk [vmem:[%s1950] sm:$0x3] %vm871, %v1947
        %s1952 = smul.u32 %s679, 7
        %s1953 = sadd.s32 %s677, %s1952
        %s1954 = smul.u32 %s1953, 2
        %s1955 = scalar_lea.vmem [#allocation4], %s1954
        %v1956 = vld [vmem:[%s1955] sm:$0x3]
        %v1958 = vsel %vm691, %v1947, 0
        %1960 = vmatprep.subr.mxu0 0.0
        %1961 = vmatpush1.msra.mxu0 %v680
        %1962 = vmatprep.subr.mxu0 0.0
        %1963 = vmatpush1.msra.mxu0 %v681
        %1964 = vmatprep.subr.mxu0 0.0
        %1965 = vmatpush1.msra.mxu0 0.0
        %1966 = vmatprep.subr.mxu0 0.0
        %1967 = vmatpush1.msra.mxu0 0.0
        %1968 = vmatprep.subr.mxu0 0.0
        %1969 = vmatpush1.msra.mxu0 0.0
        %1970 = vmatprep.subr.mxu0 0.0
        %1971 = vmatpush1.msra.mxu0 0.0
        %1972 = vmatprep.subr.mxu0 0.0
        %1973 = vmatpush1.msra.mxu0 0.0
        %1974 = vmatprep.subr.mxu0 0.0
        %1975 = vmatpush1.msra.mxu0 0.0
        %1976 = vmatprep.subr.mxu0 0.0
        %1977 = vmatpush1.msra.mxu0 0.0
        %1978 = vmatprep.subr.mxu0 0.0
        %1979 = vmatpush1.msra.mxu0 0.0
        %1980 = vmatprep.subr.mxu0 0.0
        %1981 = vmatpush1.msra.mxu0 0.0
        %1982 = vmatprep.subr.mxu0 0.0
        %1983 = vmatpush1.msra.mxu0 0.0
        %1984 = vmatprep.subr.mxu0 0.0
        %1985 = vmatpush1.msra.mxu0 0.0
        %1986 = vmatprep.subr.mxu0 0.0
        %1987 = vmatpush1.msra.mxu0 0.0
        %1988 = vmatprep.subr.mxu0 0.0
        %1989 = vmatpush1.msra.mxu0 0.0
        %1990 = vmatprep.subr.mxu0 0.0
        %1991 = vmatpush1.msra.mxu0 0.0
        %1992 = vmatprep.subr.mxu0 0.0
        %1993 = vmatpush1.msra.mxu0 0.0
        %1994 = vmatprep.subr.mxu0 0.0
        %1995 = vmatpush1.msra.mxu0 0.0
        %1996 = vmatprep.subr.mxu0 0.0
        %1997 = vmatpush1.msra.mxu0 0.0
        %1998 = vmatprep.subr.mxu0 0.0
        %1999 = vmatpush1.msra.mxu0 0.0
        %2000 = vmatprep.subr.mxu0 0.0
        %2001 = vmatpush1.msra.mxu0 0.0
        %2002 = vmatprep.subr.mxu0 0.0
        %2003 = vmatpush1.msra.mxu0 0.0
        %2004 = vmatprep.subr.mxu0 0.0
        %2005 = vmatpush1.msra.mxu0 0.0
        %2006 = vmatprep.subr.mxu0 0.0
        %2007 = vmatpush1.msra.mxu0 0.0
        %2008 = vmatprep.subr.mxu0 0.0
        %2009 = vmatpush1.msra.mxu0 0.0
        %2010 = vmatprep.subr.mxu0 0.0
        %2011 = vmatpush1.msra.mxu0 0.0
        %2012 = vmatprep.subr.mxu0 0.0
        %2013 = vmatpush1.msra.mxu0 0.0
        %2014 = vmatprep.subr.mxu0 0.0
        %2015 = vmatpush1.msra.mxu0 0.0
        %2016 = vmatprep.subr.mxu0 0.0
        %2017 = vmatpush1.msra.mxu0 0.0
        %2018 = vmatprep.subr.mxu0 0.0
        %2019 = vmatpush1.msra.mxu0 0.0
        %2020 = vmatprep.subr.mxu0 0.0
        %2021 = vmatpush1.msra.mxu0 0.0
        %2022 = vmatprep.subr.mxu0 0.0
        %2023 = vmatpush1.msra.mxu0 0.0
        %2024 = vmatprep.mubr.f32.mxu0 0.0
        %2025 = vmatmul.mubr.f32.gmra.mrb[0].mxu0 %v1958
        %v2026 = vpop.f32.mrb[0].mxu0
        %v2027 = vadd.f32 0.0, %v2026
        %v2028 = vpop.f32.mrb[0].mxu0
        %2029 = vdwg.mxu0
        %v2030 = vadd.f32 %v1956, %v2027
        %v2031 = vxor.u32 %v2030, 2147483648
        %v2032 = vmul.f32 %v2031, 1.442695
        %v2033 = vpow.pop %v2032
        %v2034 = vadd.f32 %v2033, 1.0
        %v2035 = vrcp.pop %v2034
        %v2036 = vmul.f32 1.0, %v2035
        %v2037 = vtanh.pop %v2030
        %v2038 = vmul.f32 %v2036, %v1868
        %2040 = vrot.lane.b32.xlu0 %v2037, 32
        %v2041 = vpop.permute.xlu0 %2040
        %v2043 = vmul.f32 %v2036, %v2041
        %2045 = vrot.lane.b32.xlu0 %v2043, 32
        %v2046 = vpop.permute.xlu0 %2045
        %v2048 = vadd.f32 %v2038, %v2046
        %v2049 = vtanh.pop %v2048
        %2051 = vrot.lane.b32.xlu0 %v2049, 32
        %v2052 = vpop.permute.xlu0 %2051
        %v2054 = vmul.f32 %v2036, %v2052
        %2056 = vrot.lane.b32.xlu0 %v2054, 64
        %v2057 = vpop.permute.xlu0 %2056
        %v2058 = vsel %vm797, %v2057, 0
        %2060 = vmatprep.subr.mxu0 0.0
        %2061 = vmatpush1.msra.mxu0 %v682
        %2062 = vmatprep.subr.mxu0 0.0
        %2063 = vmatpush1.msra.mxu0 %v683
        %2064 = vmatprep.subr.mxu0 0.0
        %2065 = vmatpush1.msra.mxu0 %v684
        %2066 = vmatprep.subr.mxu0 0.0
        %2067 = vmatpush1.msra.mxu0 %v685
        %2068 = vmatprep.subr.mxu0 0.0
        %2069 = vmatpush1.msra.mxu0 0.0
        %2070 = vmatprep.subr.mxu0 0.0
        %2071 = vmatpush1.msra.mxu0 0.0
        %2072 = vmatprep.subr.mxu0 0.0
        %2073 = vmatpush1.msra.mxu0 0.0
        %2074 = vmatprep.subr.mxu0 0.0
        %2075 = vmatpush1.msra.mxu0 0.0
        %2076 = vmatprep.subr.mxu0 0.0
        %2077 = vmatpush1.msra.mxu0 0.0
        %2078 = vmatprep.subr.mxu0 0.0
        %2079 = vmatpush1.msra.mxu0 0.0
        %2080 = vmatprep.subr.mxu0 0.0
        %2081 = vmatpush1.msra.mxu0 0.0
        %2082 = vmatprep.subr.mxu0 0.0
        %2083 = vmatpush1.msra.mxu0 0.0
        %2084 = vmatprep.subr.mxu0 0.0
        %2085 = vmatpush1.msra.mxu0 0.0
        %2086 = vmatprep.subr.mxu0 0.0
        %2087 = vmatpush1.msra.mxu0 0.0
        %2088 = vmatprep.subr.mxu0 0.0
        %2089 = vmatpush1.msra.mxu0 0.0
        %2090 = vmatprep.subr.mxu0 0.0
        %2091 = vmatpush1.msra.mxu0 0.0
        %2092 = vmatprep.subr.mxu0 0.0
        %2093 = vmatpush1.msra.mxu0 0.0
        %2094 = vmatprep.subr.mxu0 0.0
        %2095 = vmatpush1.msra.mxu0 0.0
        %2096 = vmatprep.subr.mxu0 0.0
        %2097 = vmatpush1.msra.mxu0 0.0
        %2098 = vmatprep.subr.mxu0 0.0
        %2099 = vmatpush1.msra.mxu0 0.0
        %2100 = vmatprep.subr.mxu0 0.0
        %2101 = vmatpush1.msra.mxu0 0.0
        %2102 = vmatprep.subr.mxu0 0.0
        %2103 = vmatpush1.msra.mxu0 0.0
        %2104 = vmatprep.subr.mxu0 0.0
        %2105 = vmatpush1.msra.mxu0 0.0
        %2106 = vmatprep.subr.mxu0 0.0
        %2107 = vmatpush1.msra.mxu0 0.0
        %2108 = vmatprep.subr.mxu0 0.0
        %2109 = vmatpush1.msra.mxu0 0.0
        %2110 = vmatprep.subr.mxu0 0.0
        %2111 = vmatpush1.msra.mxu0 0.0
        %2112 = vmatprep.subr.mxu0 0.0
        %2113 = vmatpush1.msra.mxu0 0.0
        %2114 = vmatprep.subr.mxu0 0.0
        %2115 = vmatpush1.msra.mxu0 0.0
        %2116 = vmatprep.subr.mxu0 0.0
        %2117 = vmatpush1.msra.mxu0 0.0
        %2118 = vmatprep.subr.mxu0 0.0
        %2119 = vmatpush1.msra.mxu0 0.0
        %2120 = vmatprep.subr.mxu0 0.0
        %2121 = vmatpush1.msra.mxu0 0.0
        %2122 = vmatprep.subr.mxu0 0.0
        %2123 = vmatpush1.msra.mxu0 0.0
        %2124 = vmatprep.mubr.f32.mxu0 0.0
        %2125 = vmatmul.mubr.f32.gmra.mrb[0].mxu0 %v2058
        %v2126 = vpop.f32.mrb[0].mxu0
        %v2127 = vadd.f32 0.0, %v2126
        %v2128 = vpop.f32.mrb[0].mxu0
        %2129 = vdwg.mxu0
        %s2130 = scalar_lea.vmem %s453, %s1954
        %2131 = vst.msk [vmem:[%s2130] sm:$0x3] %vm871, %v2127
        %2132 = vst.msk [vmem:[#allocation2] sm:$0x3] %vm871, %v2127
        %2134 = vrot.lane.b32.xlu0 %v2048, 96
        %v2135 = vpop.permute.xlu0 %2134
        %vm2137 = vcmask 254976
        %2138 = vst.msk [vmem:[#allocation3] sm:$0x3] %vm2137, %v2135
        // Predicated region
        $region49: #{audio_encoder_forward.4} parent=39 // pred_check
          %p2139 = pneg %p467
        $region50: #{audio_encoder_forward.4} parent=39 // pred_check_branch
          %2141 = sbr.rel (%p2139) target = $region52
        $region51: #{audio_encoder_forward.4} parent=39 // pred_region
          %2142 = vst.msk [vmem:[%s462] sm:$0x3] %vm871, %v2127
          %2143 = vst.msk [vmem:[%s466] sm:$0x3] %vm2137, %v2135
        $region52: #{audio_encoder_forward.4} parent=39 // pred_fallthru
          _
        %s2144 = smul.u32 %s27, 2
        %s2145 = ssub.s32 0, %s2144
        %s2146 = smul.u32 %s26, %s2145
        %s2147 = sadd.s32 %s27, %s2146
        %s2148 = smul.u32 8, %s2147
        %p2149 = scmp.lt.s32.totalorder %s26, 1
        %s2150 = scalar_select %p2149, %s26, 1
        %p2151 = scmp.lt.s32.totalorder %s2148, 7
        %s2152 = scalar_select %p2151, %s2148, 7
        %s2153 = smul.addr %s2150, 8
        %s2154 = sadd.s32 %s2152, %s2153
        %s2155 = smul.addr %s2154, 2
        %s2156 = scalar_lea.vmem %s5, %s2155
        %p2157 = scmp.lt.s32.totalorder %s26, 1
        %s2158 = scalar_select %p2157, %s26, 1
        %s2159 = smul.addr %s2158, 2
        %s2160 = scalar_lea.vmem %s6, %s2159
        %p2161 = scmp.lt.s32.totalorder %s26, 1
        %s2162 = scalar_select %p2161, %s26, 1
        %s2163 = smul.addr %s2162, 2
        %s2164 = scalar_lea.vmem %s7, %s2163
        // Predicated region
        $region53: #{audio_encoder_forward.4} parent=39 // pred_check
          %p2165 = pneg %p200
        $region54: #{audio_encoder_forward.4} parent=39 // pred_check_branch
          %2167 = sbr.rel (%p2165) target = $region56
        $region55: #{audio_encoder_forward.4} parent=39 // pred_region
          %s2168 = smul.u32 %s27, 2
          %s2169 = ssub.s32 0, %s2168
          %s2170 = smul.u32 %s26, %s2169
          %s2171 = sadd.s32 %s27, %s2170
          %s2172 = smul.u32 8, %s2171
        $region56: #{audio_encoder_forward.4} parent=39 // pred_fallthru
          _
        // Predicated region
        $region57: #{audio_encoder_forward.4} parent=39 // pred_check
          %p2173 = pneg %p226
        $region58: #{audio_encoder_forward.4} parent=39 // pred_check_branch
          %2175 = sbr.rel (%p2173) target = $region60
        $region59: #{audio_encoder_forward.4} parent=39 // pred_region
          _
        $region60: #{audio_encoder_forward.4} parent=39 // pred_fallthru
          _
        // Predicated region
        $region61: #{audio_encoder_forward.4} parent=39 // pred_check
          %p2176 = pneg %p252
        $region62: #{audio_encoder_forward.4} parent=39 // pred_check_branch
          %2178 = sbr.rel (%p2176) target = $region64
        $region63: #{audio_encoder_forward.4} parent=39 // pred_region
          _
        $region64: #{audio_encoder_forward.4} parent=39 // pred_fallthru
          _
      $region40: #{audio_encoder_forward.4} parent=5 // pred_fallthru
        _
      %p2179 = scmp.le.s32.totalorder 2, %s17
      // Predicated region
      $region65: #{audio_encoder_forward.4} parent=5 // pred_check
        %p2180 = pneg %p2179
      $region66: #{audio_encoder_forward.4} parent=5 // pred_check_branch
        %2182 = sbr.rel (%p2180) target = $region68
      $region67: #{audio_encoder_forward.4} parent=5 // pred_region
        %s2183 = ssub.s32 %s17, 2
        // Predicated region
        $region69: #{audio_encoder_forward.4} parent=67 // pred_check
          %p2184 = pneg %p206
        $region70: #{audio_encoder_forward.4} parent=67 // pred_check_branch
          %2186 = sbr.rel (%p2184) target = $region72
        $region71: #{audio_encoder_forward.4} parent=67 // pred_region
          %s2187 = smul.u32 %s29, 2
          %s2188 = ssub.s32 0, %s2187
          %s2189 = smul.u32 %s28, %s2188
          %s2190 = sadd.s32 %s29, %s2189
          %s2191 = smul.u32 8, %s2190
          %p2192 = scmp.lt.s32.totalorder %s28, 1
          %s2193 = scalar_select %p2192, %s28, 1
          %p2194 = scmp.lt.s32.totalorder %s2191, 7
          %s2195 = scalar_select %p2194, %s2191, 7
          %s2196 = smul.addr %s2193, 8
          %s2197 = sadd.s32 %s2195, %s2196
          %s2198 = smul.addr %s2197, 2
          %s2199 = scalar_lea.vmem %s5, %s2198
        $region72: #{audio_encoder_forward.4} parent=67 // pred_fallthru
          _
        // Predicated region
        $region73: #{audio_encoder_forward.4} parent=67 // pred_check
          %p2200 = pneg %p232
        $region74: #{audio_encoder_forward.4} parent=67 // pred_check_branch
          %2202 = sbr.rel (%p2200) target = $region76
        $region75: #{audio_encoder_forward.4} parent=67 // pred_region
          %p2203 = scmp.lt.s32.totalorder %s28, 1
          %s2204 = scalar_select %p2203, %s28, 1
          %s2205 = smul.addr %s2204, 2
          %s2206 = scalar_lea.vmem %s6, %s2205
        $region76: #{audio_encoder_forward.4} parent=67 // pred_fallthru
          _
        // Predicated region
        $region77: #{audio_encoder_forward.4} parent=67 // pred_check
          %p2207 = pneg %p258
        $region78: #{audio_encoder_forward.4} parent=67 // pred_check_branch
          %2209 = sbr.rel (%p2207) target = $region80
        $region79: #{audio_encoder_forward.4} parent=67 // pred_region
          %p2210 = scmp.lt.s32.totalorder %s28, 1
          %s2211 = scalar_select %p2210, %s28, 1
          %s2212 = smul.addr %s2211, 2
          %s2213 = scalar_lea.vmem %s7, %s2212
        $region80: #{audio_encoder_forward.4} parent=67 // pred_fallthru
          _
      $region68: #{audio_encoder_forward.4} parent=5 // pred_fallthru
        _
    $region6: #{audio_encoder_forward.4} parent=1 // loop_footer
      %s21 = sadd.s32 1, %s17
    $region7: #{audio_encoder_forward.4} parent=1 // loop_footer_branch
      %16 = sbr.rel target = $region3
    $region8: #{audio_encoder_forward.4} parent=1 // loop_exit
      _
    %2214 = vsyncpa [#allocation6], 1
    %s2215 = scalar_lea.sflag [#allocation6], 1
    %2216 = vsyncpa %s2215, 1

// kernel: audio_encoder_forward.5
$region0: #{audio_encoder_forward.5}
  #allocation0 [shape = 'u32[]', space=smem, size = 0x4, offset = 0x4, fixed_abs, tag = 'smem constant byte address 0x4 - core index']
  #allocation1 [shape = 'u32[144,128]{1,0:T(1,128)}', space=vmem, size = 0x12000, scoped, tag = 'internal scratch']
  #allocation2 [shape = 'f32[2,16]{1,0:T(2,128)}', space=vmem, size = 0x400, scoped, tag = 'scratch operand']
  #allocation3 [shape = 'f32[2,32]{1,0:T(2,128)}', space=vmem, size = 0x400, scoped, tag = 'scratch operand']
  #allocation4 [shape = 'f32[8,2,128]{2,1,0:T(2,128)}', space=vmem, size = 0x2000, scoped, tag = 'scratch operand']
  %s0 = inlined_call_operand.vmem [shape: f32[8,2,32], index: 0, kind: input, shape index: {}]
  %s1 = inlined_call_operand.vmem [shape: f32[2,32,128], index: 1, kind: input, shape index: {}]
  %s2 = inlined_call_operand.vmem [shape: f32[2,16,128], index: 2, kind: input, shape index: {}]
  %s3 = inlined_call_operand.vmem [shape: f32[2,32,16], index: 3, kind: input, shape index: {}]
  %s4 = inlined_call_operand.vmem [shape: f32[2,1,128], index: 4, kind: input, shape index: {}]
  %s5 = inlined_call_operand.vmem [shape: f32[2,8,2,16], index: 5, kind: output, shape index: {0}]
  %s6 = inlined_call_operand.vmem [shape: f32[2,2,16], index: 6, kind: output, shape index: {1}]
  %s7 = inlined_call_operand.vmem [shape: f32[2,2,32], index: 7, kind: output, shape index: {2}]
  %8 = xla_tuple %s5, %s6, %s7
  %s9 = sld [smem:[#allocation0]]
  $region77: #{audio_encoder_forward.5} parent=0
    _
  %s11 = ssub.s32 1, %s9
  %s12 = scalar_select 0, %s11, %s9
  loop: start=0, step=1, limit=4
  $region2: #{audio_encoder_forward.5} parent=0 // loop_pre_header
    _
  $region3: #{audio_encoder_forward.5} parent=0 // loop_header
    %s14 = sphi 0, %s18
    %p15 = scmp.ge.s32.totalorder %s14, 4
    %s21 = sphi 0, %s33
    %s22 = sphi 0, %s29
    %s23 = sphi 0, %s21
    %s24 = sphi 0, %s22
    %s25 = sphi 0, %s23
    %s26 = sphi 0, %s24
    %s44 = sphi 0, %s46
    %s47 = sphi 0, %s44
    %s48 = sphi 0, %s47
    %s64 = sphi 0, %s48
    %s70 = sphi 0, %s72
    %s73 = sphi 0, %s70
    %s74 = sphi 0, %s73
    %s90 = sphi 0, %s74
    %s96 = sphi 0, %s98
    %s99 = sphi 0, %s96
    %s100 = sphi 0, %s99
    %s116 = sphi 0, %s100
    %s122 = sphi 0, %s124
    %s125 = sphi 0, %s122
    %s126 = sphi 0, %s125
    %s142 = sphi 0, %s126
    %s148 = sphi 0, %s150
    %s151 = sphi 0, %s148
    %s152 = sphi 0, %s151
    %s168 = sphi 0, %s152
    %s184 = sphi 0, %s186
    %s187 = sphi 0, %s184
    %s188 = sphi 0, %s187
    %s204 = sphi 0, %s188
    %s210 = sphi 0, %s212
    %s213 = sphi 0, %s210
    %s214 = sphi 0, %s213
    %s230 = sphi 0, %s214
    %s236 = sphi 0, %s238
    %s239 = sphi 0, %s236
    %s240 = sphi 0, %s239
    %s256 = sphi 0, %s240
  $region4: #{audio_encoder_forward.5} parent=0 // loop_header_branch
    %17 = sbr.rel (%p15) target = $region8
  $region5: #{audio_encoder_forward.5} parent=0 // loop_body
    %s19 = ssub.s32 %s14, 1
    %s20 = ssub.s32 %s14, 2
    %s27 = sadd.s32 1, %s22
    %p28 = scmp.ge.s32.totalorder %s27, 1
    %s29 = scalar_select %p28, 0, %s27
    %s30 = sadd.s32 1, %s21
    %s31 = scalar_select %p28, %s30, %s21
    %p32 = scmp.ge.s32.totalorder %s31, 2
    %s33 = scalar_select %p32, 0, %s31
    %s34 = smul.u32 %s22, 2
    %s35 = ssub.s32 0, %s34
    %s36 = smul.u32 %s21, %s35
    %s37 = sadd.s32 %s22, %s36
    %s38 = smul.u32 %s29, 2
    %s39 = ssub.s32 0, %s38
    %s40 = smul.u32 %s33, %s39
    %s41 = sadd.s32 %s29, %s40
    %s42 = ssub.s32 %s37, %s41
    %p43 = scmp.eq.s32.totalorder %s42, 0
    %s45 = sadd.s32 %s44, 1
    %s46 = scalar_select %p43, %s44, %s45
    %p49 = pneg %p43
    %p50 = scmp.eq.s32.totalorder %s14, 1
    %p51 = por %p49, %p50
    %p52 = scmp.ne.s32.totalorder %s44, %s47
    %p53 = scmp.eq.s32.totalorder %s14, 0
    %p54 = por %p52, %p53
    %p55 = scmp.ne.s32.totalorder %s44, %s47
    %p56 = scmp.eq.s32.totalorder %s19, 1
    %p57 = por %p55, %p56
    %p58 = scmp.ne.s32.totalorder %s47, %s48
    %p59 = scmp.eq.s32.totalorder %s19, 0
    %p60 = por %p58, %p59
    %p61 = scmp.ne.s32.totalorder %s47, %s48
    %p62 = scmp.eq.s32.totalorder %s20, 1
    %p63 = por %p61, %p62
    %p65 = scmp.ne.s32.totalorder %s48, %s64
    %p66 = scmp.eq.s32.totalorder %s20, 0
    %p67 = por %p65, %p66
    %s68 = ssub.s32 %s21, %s33
    %p69 = scmp.eq.s32.totalorder %s68, 0
    %s71 = sadd.s32 %s70, 1
    %s72 = scalar_select %p69, %s70, %s71
    %p75 = pneg %p69
    %p76 = scmp.eq.s32.totalorder %s14, 1
    %p77 = por %p75, %p76
    %p78 = scmp.ne.s32.totalorder %s70, %s73
    %p79 = scmp.eq.s32.totalorder %s14, 0
    %p80 = por %p78, %p79
    %p81 = scmp.ne.s32.totalorder %s70, %s73
    %p82 = scmp.eq.s32.totalorder %s19, 1
    %p83 = por %p81, %p82
    %p84 = scmp.ne.s32.totalorder %s73, %s74
    %p85 = scmp.eq.s32.totalorder %s19, 0
    %p86 = por %p84, %p85
    %p87 = scmp.ne.s32.totalorder %s73, %s74
    %p88 = scmp.eq.s32.totalorder %s20, 1
    %p89 = por %p87, %p88
    %p91 = scmp.ne.s32.totalorder %s74, %s90
    %p92 = scmp.eq.s32.totalorder %s20, 0
    %p93 = por %p91, %p92
    %s94 = ssub.s32 %s21, %s33
    %p95 = scmp.eq.s32.totalorder %s94, 0
    %s97 = sadd.s32 %s96, 1
    %s98 = scalar_select %p95, %s96, %s97
    %p101 = pneg %p95
    %p102 = scmp.eq.s32.totalorder %s14, 1
    %p103 = por %p101, %p102
    %p104 = scmp.ne.s32.totalorder %s96, %s99
    %p105 = scmp.eq.s32.totalorder %s14, 0
    %p106 = por %p104, %p105
    %p107 = scmp.ne.s32.totalorder %s96, %s99
    %p108 = scmp.eq.s32.totalorder %s19, 1
    %p109 = por %p107, %p108
    %p110 = scmp.ne.s32.totalorder %s99, %s100
    %p111 = scmp.eq.s32.totalorder %s19, 0
    %p112 = por %p110, %p111
    %p113 = scmp.ne.s32.totalorder %s99, %s100
    %p114 = scmp.eq.s32.totalorder %s20, 1
    %p115 = por %p113, %p114
    %p117 = scmp.ne.s32.totalorder %s100, %s116
    %p118 = scmp.eq.s32.totalorder %s20, 0
    %p119 = por %p117, %p118
    %s120 = ssub.s32 %s21, %s33
    %p121 = scmp.eq.s32.totalorder %s120, 0
    %s123 = sadd.s32 %s122, 1
    %s124 = scalar_select %p121, %s122, %s123
    %p127 = pneg %p121
    %p128 = scmp.eq.s32.totalorder %s14, 1
    %p129 = por %p127, %p128
    %p130 = scmp.ne.s32.totalorder %s122, %s125
    %p131 = scmp.eq.s32.totalorder %s14, 0
    %p132 = por %p130, %p131
    %p133 = scmp.ne.s32.totalorder %s122, %s125
    %p134 = scmp.eq.s32.totalorder %s19, 1
    %p135 = por %p133, %p134
    %p136 = scmp.ne.s32.totalorder %s125, %s126
    %p137 = scmp.eq.s32.totalorder %s19, 0
    %p138 = por %p136, %p137
    %p139 = scmp.ne.s32.totalorder %s125, %s126
    %p140 = scmp.eq.s32.totalorder %s20, 1
    %p141 = por %p139, %p140
    %p143 = scmp.ne.s32.totalorder %s126, %s142
    %p144 = scmp.eq.s32.totalorder %s20, 0
    %p145 = por %p143, %p144
    %s146 = ssub.s32 %s21, %s33
    %p147 = scmp.eq.s32.totalorder %s146, 0
    %s149 = sadd.s32 %s148, 1
    %s150 = scalar_select %p147, %s148, %s149
    %p153 = pneg %p147
    %p154 = scmp.eq.s32.totalorder %s14, 1
    %p155 = por %p153, %p154
    %p156 = scmp.ne.s32.totalorder %s148, %s151
    %p157 = scmp.eq.s32.totalorder %s14, 0
    %p158 = por %p156, %p157
    %p159 = scmp.ne.s32.totalorder %s148, %s151
    %p160 = scmp.eq.s32.totalorder %s19, 1
    %p161 = por %p159, %p160
    %p162 = scmp.ne.s32.totalorder %s151, %s152
    %p163 = scmp.eq.s32.totalorder %s19, 0
    %p164 = por %p162, %p163
    %p165 = scmp.ne.s32.totalorder %s151, %s152
    %p166 = scmp.eq.s32.totalorder %s20, 1
    %p167 = por %p165, %p166
    %p169 = scmp.ne.s32.totalorder %s152, %s168
    %p170 = scmp.eq.s32.totalorder %s20, 0
    %p171 = por %p169, %p170
    %s172 = smul.u32 %s22, 2
    %s173 = ssub.s32 0, %s172
    %s174 = smul.u32 %s21, %s173
    %s175 = sadd.s32 %s22, %s174
    %s176 = smul.u32 %s29, 2
    %s177 = ssub.s32 0, %s176
    %s178 = smul.u32 %s33, %s177
    %s179 = sadd.s32 %s29, %s178
    %s180 = ssub.s32 %s21, %s33
    %s181 = ssub.s32 %s175, %s179
    %s182 = sor.u32 %s180, %s181
    %p183 = scmp.eq.s32.totalorder %s182, 0
    %s185 = sadd.s32 %s184, 1
    %s186 = scalar_select %p183, %s184, %s185
    %p189 = pneg %p183
    %p190 = scmp.eq.s32.totalorder %s14, 1
    %p191 = por %p189, %p190
    %p192 = scmp.ne.s32.totalorder %s184, %s187
    %p193 = scmp.eq.s32.totalorder %s14, 0
    %p194 = por %p192, %p193
    %p195 = scmp.ne.s32.totalorder %s184, %s187
    %p196 = scmp.eq.s32.totalorder %s19, 1
    %p197 = por %p195, %p196
    %p198 = scmp.ne.s32.totalorder %s187, %s188
    %p199 = scmp.eq.s32.totalorder %s19, 0
    %p200 = por %p198, %p199
    %p201 = scmp.ne.s32.totalorder %s187, %s188
    %p202 = scmp.eq.s32.totalorder %s20, 1
    %p203 = por %p201, %p202
    %p205 = scmp.ne.s32.totalorder %s188, %s204
    %p206 = scmp.eq.s32.totalorder %s20, 0
    %p207 = por %p205, %p206
    %s208 = ssub.s32 %s21, %s33
    %p209 = scmp.eq.s32.totalorder %s208, 0
    %s211 = sadd.s32 %s210, 1
    %s212 = scalar_select %p209, %s210, %s211
    %p215 = pneg %p209
    %p216 = scmp.eq.s32.totalorder %s14, 1
    %p217 = por %p215, %p216
    %p218 = scmp.ne.s32.totalorder %s210, %s213
    %p219 = scmp.eq.s32.totalorder %s14, 0
    %p220 = por %p218, %p219
    %p221 = scmp.ne.s32.totalorder %s210, %s213
    %p222 = scmp.eq.s32.totalorder %s19, 1
    %p223 = por %p221, %p222
    %p224 = scmp.ne.s32.totalorder %s213, %s214
    %p225 = scmp.eq.s32.totalorder %s19, 0
    %p226 = por %p224, %p225
    %p227 = scmp.ne.s32.totalorder %s213, %s214
    %p228 = scmp.eq.s32.totalorder %s20, 1
    %p229 = por %p227, %p228
    %p231 = scmp.ne.s32.totalorder %s214, %s230
    %p232 = scmp.eq.s32.totalorder %s20, 0
    %p233 = por %p231, %p232
    %s234 = ssub.s32 %s21, %s33
    %p235 = scmp.eq.s32.totalorder %s234, 0
    %s237 = sadd.s32 %s236, 1
    %s238 = scalar_select %p235, %s236, %s237
    %p241 = pneg %p235
    %p242 = scmp.eq.s32.totalorder %s14, 1
    %p243 = por %p241, %p242
    %p244 = scmp.ne.s32.totalorder %s236, %s239
    %p245 = scmp.eq.s32.totalorder %s14, 0
    %p246 = por %p244, %p245
    %p247 = scmp.ne.s32.totalorder %s236, %s239
    %p248 = scmp.eq.s32.totalorder %s19, 1
    %p249 = por %p247, %p248
    %p250 = scmp.ne.s32.totalorder %s239, %s240
    %p251 = scmp.eq.s32.totalorder %s19, 0
    %p252 = por %p250, %p251
    %p253 = scmp.ne.s32.totalorder %s239, %s240
    %p254 = scmp.eq.s32.totalorder %s20, 1
    %p255 = por %p253, %p254
    %p257 = scmp.ne.s32.totalorder %s240, %s256
    %p258 = scmp.eq.s32.totalorder %s20, 0
    %p259 = por %p257, %p258
    %p260 = scmp.le.s32.totalorder 1, %s14
    %p261 = scmp.lt.s32.totalorder %s14, 3
    %p262 = pnand %p260, %p261
    %p263 = pneg %p262
    // Predicated region
    $region9: #{audio_encoder_forward.5} parent=5 // pred_check
      _
    $region10: #{audio_encoder_forward.5} parent=5 // pred_check_branch
      %265 = sbr.rel (%p262) target = $region12
    $region11: #{audio_encoder_forward.5} parent=5 // pred_region
      %s266 = ssub.s32 %s14, 1
    $region12: #{audio_encoder_forward.5} parent=5 // pred_fallthru
      _
    %p267 = scmp.lt.s32.totalorder %s14, 2
    // Predicated region
    $region13: #{audio_encoder_forward.5} parent=5 // pred_check
      %p268 = pneg %p267
    $region14: #{audio_encoder_forward.5} parent=5 // pred_check_branch
      %270 = sbr.rel (%p268) target = $region16
    $region15: #{audio_encoder_forward.5} parent=5 // pred_region
      // Predicated region
      $region17: #{audio_encoder_forward.5} parent=15 // pred_check
        %p271 = pneg %p54
      $region18: #{audio_encoder_forward.5} parent=15 // pred_check_branch
        %273 = sbr.rel (%p271) target = $region20
      $region19: #{audio_encoder_forward.5} parent=15 // pred_region
        %s274 = smul.u32 %s22, 2
        %s275 = ssub.s32 0, %s274
        %s276 = smul.u32 %s21, %s275
        %s277 = sadd.s32 %s22, %s276
        %s278 = smul.u32 8, %s277
        %p279 = scmp.lt.s32.totalorder %s278, 7
        %s280 = scalar_select %p279, %s278, 7
        %s281 = smul.addr %s280, 2
        %s282 = scalar_lea.vmem %s0, %s281
        %s283 = smul.u32 %s22, 2
        %s284 = ssub.s32 0, %s283
        %s285 = smul.u32 %s21, %s284
        %s286 = sadd.s32 %s22, %s285
        %s287 = smul.u32 8, %s286
      $region20: #{audio_encoder_forward.5} parent=15 // pred_fallthru
        _
      // Predicated region
      $region21: #{audio_encoder_forward.5} parent=15 // pred_check
        %p288 = pneg %p80
      $region22: #{audio_encoder_forward.5} parent=15 // pred_check_branch
        %290 = sbr.rel (%p288) target = $region24
      $region23: #{audio_encoder_forward.5} parent=15 // pred_region
        %p291 = scmp.lt.s32.totalorder %s21, 1
        %s292 = scalar_select %p291, %s21, 1
        %s293 = smul.addr %s292, 4
        %s294 = smul.addr %s293, 8
        %s295 = scalar_lea.vmem %s1, %s294
      $region24: #{audio_encoder_forward.5} parent=15 // pred_fallthru
        _
      // Predicated region
      $region25: #{audio_encoder_forward.5} parent=15 // pred_check
        %p296 = pneg %p106
      $region26: #{audio_encoder_forward.5} parent=15 // pred_check_branch
        %298 = sbr.rel (%p296) target = $region28
      $region27: #{audio_encoder_forward.5} parent=15 // pred_region
        %p299 = scmp.lt.s32.totalorder %s21, 1
        %s300 = scalar_select %p299, %s21, 1
        %s301 = smul.addr %s300, 2
        %s302 = smul.addr %s301, 8
        %s303 = scalar_lea.vmem %s2, %s302
      $region28: #{audio_encoder_forward.5} parent=15 // pred_fallthru
        _
      // Predicated region
      $region29: #{audio_encoder_forward.5} parent=15 // pred_check
        %p304 = pneg %p132
      $region30: #{audio_encoder_forward.5} parent=15 // pred_check_branch
        %306 = sbr.rel (%p304) target = $region32
      $region31: #{audio_encoder_forward.5} parent=15 // pred_region
        %p307 = scmp.lt.s32.totalorder %s21, 1
        %s308 = scalar_select %p307, %s21, 1
        %s309 = smul.addr %s308, 4
        %s310 = smul.addr %s309, 8
        %s311 = scalar_lea.vmem %s3, %s310
      $region32: #{audio_encoder_forward.5} parent=15 // pred_fallthru
        _
      // Predicated region
      $region33: #{audio_encoder_forward.5} parent=15 // pred_check
        %p312 = pneg %p158
      $region34: #{audio_encoder_forward.5} parent=15 // pred_check_branch
        %314 = sbr.rel (%p312) target = $region36
      $region35: #{audio_encoder_forward.5} parent=15 // pred_region
        %p315 = scmp.lt.s32.totalorder %s21, 1
        %s316 = scalar_select %p315, %s21, 1
        %s317 = scalar_lea.vmem %s4, %s316
      $region36: #{audio_encoder_forward.5} parent=15 // pred_fallthru
        _
    $region16: #{audio_encoder_forward.5} parent=5 // pred_fallthru
      _
    %p318 = scmp.le.s32.totalorder 1, %s14
    %p319 = scmp.lt.s32.totalorder %s14, 3
    %p320 = pnand %p318, %p319
    %p321 = pneg %p320
    // Predicated region
    $region37: #{audio_encoder_forward.5} parent=5 // pred_check
      _
    $region38: #{audio_encoder_forward.5} parent=5 // pred_check_branch
      %323 = sbr.rel (%p320) target = $region40
    $region39: #{audio_encoder_forward.5} parent=5 // pred_region
      %s324 = ssub.s32 %s14, 1
      %s325 = smul.u32 %s24, 2
      %s326 = ssub.s32 0, %s325
      %s327 = smul.u32 %s23, %s326
      %s328 = sadd.s32 %s24, %s327
      %s329 = smul.u32 8, %s328
      %p330 = scmp.lt.s32.totalorder %s329, 7
      %s331 = scalar_select %p330, %s329, 7
      %s332 = smul.addr %s331, 2
      %s333 = scalar_lea.vmem %s0, %s332
      %p334 = pneg %p60
      %p335 = pneg %p57
      %p336 = scmp.lt.s32.totalorder %s23, 1
      %s337 = scalar_select %p336, %s23, 1
      %s338 = smul.addr %s337, 4
      %s339 = smul.addr %s338, 8
      %s340 = scalar_lea.vmem %s1, %s339
      %p341 = pneg %p86
      %p342 = pneg %p83
      %p343 = scmp.lt.s32.totalorder %s23, 1
      %s344 = scalar_select %p343, %s23, 1
      %s345 = smul.addr %s344, 2
      %s346 = smul.addr %s345, 8
      %s347 = scalar_lea.vmem %s2, %s346
      %p348 = pneg %p112
      %p349 = pneg %p109
      %p350 = scmp.lt.s32.totalorder %s23, 1
      %s351 = scalar_select %p350, %s23, 1
      %s352 = smul.addr %s351, 4
      %s353 = smul.addr %s352, 8
      %s354 = scalar_lea.vmem %s3, %s353
      %p355 = pneg %p138
      %p356 = pneg %p135
      %p357 = scmp.lt.s32.totalorder %s23, 1
      %s358 = scalar_select %p357, %s23, 1
      %s359 = scalar_lea.vmem %s4, %s358
      %p360 = pneg %p164
      %p361 = pneg %p161
      %p362 = pneg %p200
      %p363 = pneg %p197
      %s364 = smul.u32 %s24, 2
      %s365 = ssub.s32 0, %s364
      %s366 = smul.u32 %s23, %s365
      %s367 = sadd.s32 %s24, %s366
      %s368 = smul.u32 8, %s367
      %p369 = scmp.lt.s32.totalorder %s23, 1
      %s370 = scalar_select %p369, %s23, 1
      %p371 = scmp.lt.s32.totalorder %s368, 7
      %s372 = scalar_select %p371, %s368, 7
      %s373 = smul.addr %s370, 8
      %s374 = sadd.s32 %s372, %s373
      %s375 = smul.addr %s374, 2
      %s376 = scalar_lea.vmem %s5, %s375
      %p377 = pneg %p226
      %p378 = pneg %p223
      %p379 = scmp.lt.s32.totalorder %s23, 1
      %s380 = scalar_select %p379, %s23, 1
      %s381 = smul.addr %s380, 2
      %s382 = scalar_lea.vmem %s6, %s381
      %p383 = pneg %p252
      %p384 = pneg %p249
      %p385 = scmp.lt.s32.totalorder %s23, 1
      %s386 = scalar_select %p385, %s23, 1
      %s387 = smul.addr %s386, 2
      %s388 = scalar_lea.vmem %s7, %s387
      %s389 = smul.u32 %s24, 2
      %s390 = ssub.s32 0, %s389
      %s391 = smul.u32 %s23, %s390
      %s392 = sadd.s32 %s24, %s391
      %s393 = smul.u32 8, %s392
      %p394 = scmp.lt.s32.totalorder %s393, 7
      %s395 = scalar_select %p394, %s393, 7
      %s396 = smul.addr %s395, 2
      %s397 = scalar_lea.vmem %s0, %s396
      %s398 = smul.u32 %s24, 2
      %s399 = ssub.s32 0, %s398
      %s400 = smul.u32 %s23, %s399
      %s401 = sadd.s32 %s24, %s400
      %s402 = smul.u32 8, %s401
      %p403 = scmp.lt.s32.totalorder %s23, 1
      %s404 = scalar_select %p403, %s23, 1
      %s405 = smul.addr %s404, 4
      %s406 = smul.addr %s405, 8
      %s407 = scalar_lea.vmem %s1, %s406
      %p408 = scmp.lt.s32.totalorder %s23, 1
      %s409 = scalar_select %p408, %s23, 1
      %s410 = smul.addr %s409, 2
      %s411 = smul.addr %s410, 8
      %s412 = scalar_lea.vmem %s2, %s411
      %p413 = scmp.lt.s32.totalorder %s23, 1
      %s414 = scalar_select %p413, %s23, 1
      %s415 = smul.addr %s414, 4
      %s416 = smul.addr %s415, 8
      %s417 = scalar_lea.vmem %s3, %s416
      %p418 = scmp.lt.s32.totalorder %s23, 1
      %s419 = scalar_select %p418, %s23, 1
      %s420 = scalar_lea.vmem %s4, %s419
      %s421 = smul.u32 %s24, 2
      %s422 = ssub.s32 0, %s421
      %s423 = smul.u32 %s23, %s422
      %s424 = sadd.s32 %s24, %s423
      %s425 = smul.u32 8, %s424
      %p426 = scmp.lt.s32.totalorder %s23, 1
      %s427 = scalar_select %p426, %s23, 1
      %p428 = scmp.lt.s32.totalorder %s425, 7
      %s429 = scalar_select %p428, %s425, 7
      %s430 = smul.addr %s427, 8
      %s431 = sadd.s32 %s429, %s430
      %s432 = smul.addr %s431, 2
      %s433 = scalar_lea.vmem %s5, %s432
      %s434 = smul.u32 %s24, 2
      %s435 = ssub.s32 0, %s434
      %s436 = smul.u32 %s23, %s435
      %s437 = sadd.s32 %s24, %s436
      %s438 = smul.u32 8, %s437
      %p439 = scmp.lt.s32.totalorder %s23, 1
      %s440 = scalar_select %p439, %s23, 1
      %s441 = smul.addr %s440, 2
      %s442 = scalar_lea.vmem %s6, %s441
      %p443 = scmp.lt.s32.totalorder %s23, 1
      %s444 = scalar_select %p443, %s23, 1
      %s445 = smul.addr %s444, 2
      %s446 = scalar_lea.vmem %s7, %s445
      %p447 = scmp.eq.s32.totalorder %s24, 0
      // Predicated region
      $region41: #{audio_encoder_forward.5} parent=39 // pred_check
        %p448 = pneg %p447
      $region42: #{audio_encoder_forward.5} parent=39 // pred_check_branch
        %450 = sbr.rel (%p448) target = $region44
      $region43: #{audio_encoder_forward.5} parent=39 // pred_region
        %vm451 = vcmask 123904
        %452 = vst.msk [vmem:[#allocation2] sm:$0x3] %vm451, 0.0
        %vm453 = vcmask 254976
        %454 = vst.msk [vmem:[#allocation3] sm:$0x3] %vm453, 0.0
      $region44: #{audio_encoder_forward.5} parent=39 // pred_fallthru
        _
      %v455 = vld [vmem:[%s397] sm:$0x3]
      %v456 = vld [vmem:[%s397 + $0x2] sm:$0x3]
      %v457 = vld [vmem:[%s397 + $0x4] sm:$0x3]
      %v458 = vld [vmem:[%s397 + $0x6] sm:$0x3]
      %v459 = vld [vmem:[%s397 + $0x8] sm:$0x3]
      %v460 = vld [vmem:[%s397 + $0xa] sm:$0x3]
      %v461 = vld [vmem:[%s397 + $0xc] sm:$0x3]
      %v462 = vld [vmem:[%s397 + $0xe] sm:$0x3]
      %v463 = vld [vmem:[%s407] sm:$0xff]
      %v464 = vld [vmem:[%s407 + $0x8] sm:$0xff]
      %v465 = vld [vmem:[%s407 + $0x10] sm:$0xff]
      %v466 = vld [vmem:[%s407 + $0x18] sm:$0xff]
      %v467 = vld [vmem:[%s420] sm:$0x1]
      %v469 = vlaneseq
      %v470 = vshrl.u32 %v469, 7
      %v471 = vsub.s32 0, %v470
      %v472 = vrot.slane %v467, %v471
      %v482 = vcombine.low %v455, %v456
      %v483 = vcombine.low %v457, %v458
      %v485 = vunpack.c.l.s4 1983009808
      %v486 = vunpack.c.0.s8 %v485
      %v487 = vlaneseq
      %v488 = vshrl.u32 %v487, 7
      %v489 = vsub.s32 %v486, %v488
      %v490 = vrot.slane %v482, %v489
      %v492 = vunpack.c.l.s4 1983009808
      %v493 = vunpack.c.0.s8 %v492
      %v494 = vlaneseq
      %v495 = vshrl.u32 %v494, 7
      %v496 = vsub.s32 %v493, %v495
      %v497 = vrot.slane %v483, %v496
      %v498 = vcombine.low %v490, %v497
      %v499 = vcombine.low %v459, %v460
      %v500 = vcombine.low %v461, %v462
      %v502 = vunpack.c.l.s4 1983009808
      %v503 = vunpack.c.0.s8 %v502
      %v504 = vlaneseq
      %v505 = vshrl.u32 %v504, 7
      %v506 = vsub.s32 %v503, %v505
      %v507 = vrot.slane %v499, %v506
      %v509 = vunpack.c.l.s4 1983009808
      %v510 = vunpack.c.0.s8 %v509
      %v511 = vlaneseq
      %v512 = vshrl.u32 %v511, 7
      %v513 = vsub.s32 %v510, %v512
      %v514 = vrot.slane %v500, %v513
      %v515 = vcombine.low %v507, %v514
      %vm516 = vcmask 261120
      %v517 = vsel %vm516, %v498, 0
      %v519 = vsel %vm516, %v515, 0
      %521 = vmatprep.subr.mxu0 0.0
      %522 = vmatpush1.msra.mxu0 %v463
      %523 = vmatprep.subr.mxu0 0.0
      %524 = vmatpush1.msra.mxu0 %v464
      %525 = vmatprep.subr.mxu0 0.0
      %526 = vmatpush1.msra.mxu0 %v465
      %527 = vmatprep.subr.mxu0 0.0
      %528 = vmatpush1.msra.mxu0 %v466
      %529 = vmatprep.subr.mxu0 0.0
      %530 = vmatpush1.msra.mxu0 0.0
      %531 = vmatprep.subr.mxu0 0.0
      %532 = vmatpush1.msra.mxu0 0.0
      %533 = vmatprep.subr.mxu0 0.0
      %534 = vmatpush1.msra.mxu0 0.0
      %535 = vmatprep.subr.mxu0 0.0
      %536 = vmatpush1.msra.mxu0 0.0
      %537 = vmatprep.subr.mxu0 0.0
      %538 = vmatpush1.msra.mxu0 0.0
      %539 = vmatprep.subr.mxu0 0.0
      %540 = vmatpush1.msra.mxu0 0.0
      %541 = vmatprep.subr.mxu0 0.0
      %542 = vmatpush1.msra.mxu0 0.0
      %543 = vmatprep.subr.mxu0 0.0
      %544 = vmatpush1.msra.mxu0 0.0
      %545 = vmatprep.subr.mxu0 0.0
      %546 = vmatpush1.msra.mxu0 0.0
      %547 = vmatprep.subr.mxu0 0.0
      %548 = vmatpush1.msra.mxu0 0.0
      %549 = vmatprep.subr.mxu0 0.0
      %550 = vmatpush1.msra.mxu0 0.0
      %551 = vmatprep.subr.mxu0 0.0
      %552 = vmatpush1.msra.mxu0 0.0
      %553 = vmatprep.subr.mxu0 0.0
      %554 = vmatpush1.msra.mxu0 0.0
      %555 = vmatprep.subr.mxu0 0.0
      %556 = vmatpush1.msra.mxu0 0.0
      %557 = vmatprep.subr.mxu0 0.0
      %558 = vmatpush1.msra.mxu0 0.0
      %559 = vmatprep.subr.mxu0 0.0
      %560 = vmatpush1.msra.mxu0 0.0
      %561 = vmatprep.subr.mxu0 0.0
      %562 = vmatpush1.msra.mxu0 0.0
      %563 = vmatprep.subr.mxu0 0.0
      %564 = vmatpush1.msra.mxu0 0.0
      %565 = vmatprep.subr.mxu0 0.0
      %566 = vmatpush1.msra.mxu0 0.0
      %567 = vmatprep.subr.mxu0 0.0
      %568 = vmatpush1.msra.mxu0 0.0
      %569 = vmatprep.subr.mxu0 0.0
      %570 = vmatpush1.msra.mxu0 0.0
      %571 = vmatprep.subr.mxu0 0.0
      %572 = vmatpush1.msra.mxu0 0.0
      %573 = vmatprep.subr.mxu0 0.0
      %574 = vmatpush1.msra.mxu0 0.0
      %575 = vmatprep.subr.mxu0 0.0
      %576 = vmatpush1.msra.mxu0 0.0
      %577 = vmatprep.subr.mxu0 0.0
      %578 = vmatpush1.msra.mxu0 0.0
      %579 = vmatprep.subr.mxu0 0.0
      %580 = vmatpush1.msra.mxu0 0.0
      %581 = vmatprep.subr.mxu0 0.0
      %582 = vmatpush1.msra.mxu0 0.0
      %583 = vmatprep.subr.mxu0 0.0
      %584 = vmatpush1.msra.mxu0 0.0
      %585 = vmatprep.mubr.f32.mxu0 0.0
      %586 = vmatmul.mubr.f32.gmra.mrb[0].mxu0 %v517
      %v587 = vpop.f32.mrb[0].mxu0
      %v588 = vadd.f32 %v472, %v587
      %v589 = vpop.f32.mrb[0].mxu0
      %590 = vmatprep.mubr.f32.mxu0 0.0
      %591 = vmatmul.mubr.f32.gmra.mrb[0].mxu0 %v519
      %v592 = vpop.f32.mrb[0].mxu0
      %v593 = vadd.f32 %v472, %v592
      %v594 = vpop.f32.mrb[0].mxu0
      %595 = vdwg.mxu0
      %v598 = vcombine.high %v588, %v588
      %v600 = vunpack.c.l.s4 1983009808
      %v601 = vunpack.c.0.s8 %v600
      %v602 = vlaneseq
      %v603 = vshrl.u32 %v602, 7
      %v604 = vsub.s32 %v601, %v603
      %v605 = vrot.slane %v588, %v604
      %v607 = vunpack.c.l.s4 1983009808
      %v608 = vunpack.c.0.s8 %v607
      %v609 = vlaneseq
      %v610 = vshrl.u32 %v609, 7
      %v611 = vsub.s32 %v608, %v610
      %v612 = vrot.slane %v598, %v611
      %v613 = vcombine.high %v605, %v605
      %v614 = vcombine.high %v612, %v612
      %v615 = vcombine.high %v593, %v593
      %v617 = vunpack.c.l.s4 1983009808
      %v618 = vunpack.c.0.s8 %v617
      %v619 = vlaneseq
      %v620 = vshrl.u32 %v619, 7
      %v621 = vsub.s32 %v618, %v620
      %v622 = vrot.slane %v593, %v621
      %v624 = vunpack.c.l.s4 1983009808
      %v625 = vunpack.c.0.s8 %v624
      %v626 = vlaneseq
      %v627 = vshrl.u32 %v626, 7
      %v628 = vsub.s32 %v625, %v627
      %v629 = vrot.slane %v615, %v628
      %v630 = vcombine.high %v622, %v622
      %v631 = vcombine.high %v629, %v629
      %640 = vst [vmem:[#allocation4] sm:$0x3] %v605
      %641 = vst [vmem:[#allocation4 + $0x2] sm:$0x3] %v613
      %642 = vst [vmem:[#allocation4 + $0x4] sm:$0x3] %v612
      %643 = vst [vmem:[#allocation4 + $0x6] sm:$0x3] %v614
      %644 = vst [vmem:[#allocation4 + $0x8] sm:$0x3] %v622
      %645 = vst [vmem:[#allocation4 + $0xa] sm:$0x3] %v630
      %646 = vst [vmem:[#allocation4 + $0xc] sm:$0x3] %v629
      %647 = vst [vmem:[#allocation4 + $0xe] sm:$0x3] %v631
      %s648 = smul.u32 %s23, 7
      %s649 = smul.u32 %s23, 2
      %s650 = ssub.s32 1, %s649
      %v651 = vld [vmem:[%s412] sm:$0xff]
      %v652 = vld [vmem:[%s412 + $0x8] sm:$0xff]
      %v653 = vld [vmem:[%s417] sm:$0xff]
      %v654 = vld [vmem:[%s417 + $0x8] sm:$0xff]
      %v655 = vld [vmem:[%s417 + $0x10] sm:$0xff]
      %v656 = vld [vmem:[%s417 + $0x18] sm:$0xff]
      %v657 = vld [vmem:[#allocation2] sm:$0x3]
      %v658 = vld [vmem:[#allocation3] sm:$0x3]
      %s659 = smul.u32 %s648, 2
      %s660 = scalar_lea.vmem [#allocation4], %s659
      %v661 = vld [vmem:[%s660] sm:$0x3]
      %vm662 = vcmask 130048
      %v664 = vsel %vm662, %v657, 0
      %666 = vmatprep.subr.mxu0 0.0
      %667 = vmatpush1.msra.mxu0 %v651
      %668 = vmatprep.subr.mxu0 0.0
      %669 = vmatpush1.msra.mxu0 %v652
      %670 = vmatprep.subr.mxu0 0.0
      %671 = vmatpush1.msra.mxu0 0.0
      %672 = vmatprep.subr.mxu0 0.0
      %673 = vmatpush1.msra.mxu0 0.0
      %674 = vmatprep.subr.mxu0 0.0
      %675 = vmatpush1.msra.mxu0 0.0
      %676 = vmatprep.subr.mxu0 0.0
      %677 = vmatpush1.msra.mxu0 0.0
      %678 = vmatprep.subr.mxu0 0.0
      %679 = vmatpush1.msra.mxu0 0.0
      %680 = vmatprep.subr.mxu0 0.0
      %681 = vmatpush1.msra.mxu0 0.0
      %682 = vmatprep.subr.mxu0 0.0
      %683 = vmatpush1.msra.mxu0 0.0
      %684 = vmatprep.subr.mxu0 0.0
      %685 = vmatpush1.msra.mxu0 0.0
      %686 = vmatprep.subr.mxu0 0.0
      %687 = vmatpush1.msra.mxu0 0.0
      %688 = vmatprep.subr.mxu0 0.0
      %689 = vmatpush1.msra.mxu0 0.0
      %690 = vmatprep.subr.mxu0 0.0
      %691 = vmatpush1.msra.mxu0 0.0
      %692 = vmatprep.subr.mxu0 0.0
      %693 = vmatpush1.msra.mxu0 0.0
      %694 = vmatprep.subr.mxu0 0.0
      %695 = vmatpush1.msra.mxu0 0.0
      %696 = vmatprep.subr.mxu0 0.0
      %697 = vmatpush1.msra.mxu0 0.0
      %698 = vmatprep.subr.mxu0 0.0
      %699 = vmatpush1.msra.mxu0 0.0
      %700 = vmatprep.subr.mxu0 0.0
      %701 = vmatpush1.msra.mxu0 0.0
      %702 = vmatprep.subr.mxu0 0.0
      %703 = vmatpush1.msra.mxu0 0.0
      %704 = vmatprep.subr.mxu0 0.0
      %705 = vmatpush1.msra.mxu0 0.0
      %706 = vmatprep.subr.mxu0 0.0
      %707 = vmatpush1.msra.mxu0 0.0
      %708 = vmatprep.subr.mxu0 0.0
      %709 = vmatpush1.msra.mxu0 0.0
      %710 = vmatprep.subr.mxu0 0.0
      %711 = vmatpush1.msra.mxu0 0.0
      %712 = vmatprep.subr.mxu0 0.0
      %713 = vmatpush1.msra.mxu0 0.0
      %714 = vmatprep.subr.mxu0 0.0
      %715 = vmatpush1.msra.mxu0 0.0
      %716 = vmatprep.subr.mxu0 0.0
      %717 = vmatpush1.msra.mxu0 0.0
      %718 = vmatprep.subr.mxu0 0.0
      %719 = vmatpush1.msra.mxu0 0.0
      %720 = vmatprep.subr.mxu0 0.0
      %721 = vmatpush1.msra.mxu0 0.0
      %722 = vmatprep.subr.mxu0 0.0
      %723 = vmatpush1.msra.mxu0 0.0
      %724 = vmatprep.subr.mxu0 0.0
      %725 = vmatpush1.msra.mxu0 0.0
      %726 = vmatprep.subr.mxu0 0.0
      %727 = vmatpush1.msra.mxu0 0.0
      %728 = vmatprep.subr.mxu0 0.0
      %729 = vmatpush1.msra.mxu0 0.0
      %730 = vmatprep.mubr.f32.mxu0 0.0
      %731 = vmatmul.mubr.f32.gmra.mrb[0].mxu0 %v664
      %v732 = vpop.f32.mrb[0].mxu0
      %v733 = vadd.f32 0.0, %v732
      %v734 = vpop.f32.mrb[0].mxu0
      %735 = vdwg.mxu0
      %v736 = vadd.f32 %v661, %v733
      %v737 = vxor.u32 %v736, 2147483648
      %v738 = vmul.f32 %v737, 1.442695
      %v739 = vpow.pop %v738
      %v740 = vadd.f32 %v739, 1.0
      %v741 = vrcp.pop %v740
      %v742 = vmul.f32 1.0, %v741
      %v743 = vtanh.pop %v736
      %745 = vrot.lane.b32.xlu0 %v658, 32
      %v746 = vpop.permute.xlu0 %745
      %v748 = vmul.f32 %v742, %v746
      %750 = vrot.lane.b32.xlu0 %v743, 32
      %v751 = vpop.permute.xlu0 %750
      %v753 = vmul.f32 %v742, %v751
      %755 = vrot.lane.b32.xlu0 %v753, 32
      %v756 = vpop.permute.xlu0 %755
      %v758 = vadd.f32 %v748, %v756
      %v759 = vtanh.pop %v758
      %761 = vrot.lane.b32.xlu0 %v759, 32
      %v762 = vpop.permute.xlu0 %761
      %v764 = vmul.f32 %v742, %v762
      %766 = vrot.lane.b32.xlu0 %v764, 64
      %v767 = vpop.permute.xlu0 %766
      %v768 = vsel %vm516, %v767, 0
      %770 = vmatprep.subr.mxu0 0.0
      %771 = vmatpush1.msra.mxu0 %v653
      %772 = vmatprep.subr.mxu0 0.0
      %773 = vmatpush1.msra.mxu0 %v654
      %774 = vmatprep.subr.mxu0 0.0
      %775 = vmatpush1.msra.mxu0 %v655
      %776 = vmatprep.subr.mxu0 0.0
      %777 = vmatpush1.msra.mxu0 %v656
      %778 = vmatprep.subr.mxu0 0.0
      %779 = vmatpush1.msra.mxu0 0.0
      %780 = vmatprep.subr.mxu0 0.0
      %781 = vmatpush1.msra.mxu0 0.0
      %782 = vmatprep.subr.mxu0 0.0
      %783 = vmatpush1.msra.mxu0 0.0
      %784 = vmatprep.subr.mxu0 0.0
      %785 = vmatpush1.msra.mxu0 0.0
      %786 = vmatprep.subr.mxu0 0.0
      %787 = vmatpush1.msra.mxu0 0.0
      %788 = vmatprep.subr.mxu0 0.0
      %789 = vmatpush1.msra.mxu0 0.0
      %790 = vmatprep.subr.mxu0 0.0
      %791 = vmatpush1.msra.mxu0 0.0
      %792 = vmatprep.subr.mxu0 0.0
      %793 = vmatpush1.msra.mxu0 0.0
      %794 = vmatprep.subr.mxu0 0.0
      %795 = vmatpush1.msra.mxu0 0.0
      %796 = vmatprep.subr.mxu0 0.0
      %797 = vmatpush1.msra.mxu0 0.0
      %798 = vmatprep.subr.mxu0 0.0
      %799 = vmatpush1.msra.mxu0 0.0
      %800 = vmatprep.subr.mxu0 0.0
      %801 = vmatpush1.msra.mxu0 0.0
      %802 = vmatprep.subr.mxu0 0.0
      %803 = vmatpush1.msra.mxu0 0.0
      %804 = vmatprep.subr.mxu0 0.0
      %805 = vmatpush1.msra.mxu0 0.0
      %806 = vmatprep.subr.mxu0 0.0
      %807 = vmatpush1.msra.mxu0 0.0
      %808 = vmatprep.subr.mxu0 0.0
      %809 = vmatpush1.msra.mxu0 0.0
      %810 = vmatprep.subr.mxu0 0.0
      %811 = vmatpush1.msra.mxu0 0.0
      %812 = vmatprep.subr.mxu0 0.0
      %813 = vmatpush1.msra.mxu0 0.0
      %814 = vmatprep.subr.mxu0 0.0
      %815 = vmatpush1.msra.mxu0 0.0
      %816 = vmatprep.subr.mxu0 0.0
      %817 = vmatpush1.msra.mxu0 0.0
      %818 = vmatprep.subr.mxu0 0.0
      %819 = vmatpush1.msra.mxu0 0.0
      %820 = vmatprep.subr.mxu0 0.0
      %821 = vmatpush1.msra.mxu0 0.0
      %822 = vmatprep.subr.mxu0 0.0
      %823 = vmatpush1.msra.mxu0 0.0
      %824 = vmatprep.subr.mxu0 0.0
      %825 = vmatpush1.msra.mxu0 0.0
      %826 = vmatprep.subr.mxu0 0.0
      %827 = vmatpush1.msra.mxu0 0.0
      %828 = vmatprep.subr.mxu0 0.0
      %829 = vmatpush1.msra.mxu0 0.0
      %830 = vmatprep.subr.mxu0 0.0
      %831 = vmatpush1.msra.mxu0 0.0
      %832 = vmatprep.subr.mxu0 0.0
      %833 = vmatpush1.msra.mxu0 0.0
      %834 = vmatprep.mubr.f32.mxu0 0.0
      %835 = vmatmul.mubr.f32.gmra.mrb[0].mxu0 %v768
      %v836 = vpop.f32.mrb[0].mxu0
      %v837 = vadd.f32 0.0, %v836
      %v838 = vpop.f32.mrb[0].mxu0
      %839 = vdwg.mxu0
      %s840 = scalar_lea.vmem %s433, %s659
      %vm841 = vcmask 123904
      %842 = vst.msk [vmem:[%s840] sm:$0x3] %vm841, %v837
      %s843 = sadd.s32 %s648, %s650
      %s844 = smul.u32 %s843, 2
      %s845 = scalar_lea.vmem [#allocation4], %s844
      %v846 = vld [vmem:[%s845] sm:$0x3]
      %v848 = vsel %vm662, %v837, 0
      %850 = vmatprep.subr.mxu0 0.0
      %851 = vmatpush1.msra.mxu0 %v651
      %852 = vmatprep.subr.mxu0 0.0
      %853 = vmatpush1.msra.mxu0 %v652
      %854 = vmatprep.subr.mxu0 0.0
      %855 = vmatpush1.msra.mxu0 0.0
      %856 = vmatprep.subr.mxu0 0.0
      %857 = vmatpush1.msra.mxu0 0.0
      %858 = vmatprep.subr.mxu0 0.0
      %859 = vmatpush1.msra.mxu0 0.0
      %860 = vmatprep.subr.mxu0 0.0
      %861 = vmatpush1.msra.mxu0 0.0
      %862 = vmatprep.subr.mxu0 0.0
      %863 = vmatpush1.msra.mxu0 0.0
      %864 = vmatprep.subr.mxu0 0.0
      %865 = vmatpush1.msra.mxu0 0.0
      %866 = vmatprep.subr.mxu0 0.0
      %867 = vmatpush1.msra.mxu0 0.0
      %868 = vmatprep.subr.mxu0 0.0
      %869 = vmatpush1.msra.mxu0 0.0
      %870 = vmatprep.subr.mxu0 0.0
      %871 = vmatpush1.msra.mxu0 0.0
      %872 = vmatprep.subr.mxu0 0.0
      %873 = vmatpush1.msra.mxu0 0.0
      %874 = vmatprep.subr.mxu0 0.0
      %875 = vmatpush1.msra.mxu0 0.0
      %876 = vmatprep.subr.mxu0 0.0
      %877 = vmatpush1.msra.mxu0 0.0
      %878 = vmatprep.subr.mxu0 0.0
      %879 = vmatpush1.msra.mxu0 0.0
      %880 = vmatprep.subr.mxu0 0.0
      %881 = vmatpush1.msra.mxu0 0.0
      %882 = vmatprep.subr.mxu0 0.0
      %883 = vmatpush1.msra.mxu0 0.0
      %884 = vmatprep.subr.mxu0 0.0
      %885 = vmatpush1.msra.mxu0 0.0
      %886 = vmatprep.subr.mxu0 0.0
      %887 = vmatpush1.msra.mxu0 0.0
      %888 = vmatprep.subr.mxu0 0.0
      %889 = vmatpush1.msra.mxu0 0.0
      %890 = vmatprep.subr.mxu0 0.0
      %891 = vmatpush1.msra.mxu0 0.0
      %892 = vmatprep.subr.mxu0 0.0
      %893 = vmatpush1.msra.mxu0 0.0
      %894 = vmatprep.subr.mxu0 0.0
      %895 = vmatpush1.msra.mxu0 0.0
      %896 = vmatprep.subr.mxu0 0.0
      %897 = vmatpush1.msra.mxu0 0.0
      %898 = vmatprep.subr.mxu0 0.0
      %899 = vmatpush1.msra.mxu0 0.0
      %900 = vmatprep.subr.mxu0 0.0
      %901 = vmatpush1.msra.mxu0 0.0
      %902 = vmatprep.subr.mxu0 0.0
      %903 = vmatpush1.msra.mxu0 0.0
      %904 = vmatprep.subr.mxu0 0.0
      %905 = vmatpush1.msra.mxu0 0.0
      %906 = vmatprep.subr.mxu0 0.0
      %907 = vmatpush1.msra.mxu0 0.0
      %908 = vmatprep.subr.mxu0 0.0
      %909 = vmatpush1.msra.mxu0 0.0
      %910 = vmatprep.subr.mxu0 0.0
      %911 = vmatpush1.msra.mxu0 0.0
      %912 = vmatprep.subr.mxu0 0.0
      %913 = vmatpush1.msra.mxu0 0.0
      %914 = vmatprep.mubr.f32.mxu0 0.0
      %915 = vmatmul.mubr.f32.gmra.mrb[0].mxu0 %v848
      %v916 = vpop.f32.mrb[0].mxu0
      %v917 = vadd.f32 0.0, %v916
      %v918 = vpop.f32.mrb[0].mxu0
      %919 = vdwg.mxu0
      %v920 = vadd.f32 %v846, %v917
      %v921 = vxor.u32 %v920, 2147483648
      %v922 = vmul.f32 %v921, 1.442695
      %v923 = vpow.pop %v922
      %v924 = vadd.f32 %v923, 1.0
      %v925 = vrcp.pop %v924
      %v926 = vmul.f32 1.0, %v925
      %v927 = vtanh.pop %v920
      %v928 = vmul.f32 %v926, %v758
      %930 = vrot.lane.b32.xlu0 %v927, 32
      %v931 = vpop.permute.xlu0 %930
      %v933 = vmul.f32 %v926, %v931
      %935 = vrot.lane.b32.xlu0 %v933, 32
      %v936 = vpop.permute.xlu0 %935
      %v938 = vadd.f32 %v928, %v936
      %v939 = vtanh.pop %v938
      %941 = vrot.lane.b32.xlu0 %v939, 32
      %v942 = vpop.permute.xlu0 %941
      %v944 = vmul.f32 %v926, %v942
      %946 = vrot.lane.b32.xlu0 %v944, 64
      %v947 = vpop.permute.xlu0 %946
      %v948 = vsel %vm516, %v947, 0
      %950 = vmatprep.subr.mxu0 0.0
      %951 = vmatpush1.msra.mxu0 %v653
      %952 = vmatprep.subr.mxu0 0.0
      %953 = vmatpush1.msra.mxu0 %v654
      %954 = vmatprep.subr.mxu0 0.0
      %955 = vmatpush1.msra.mxu0 %v655
      %956 = vmatprep.subr.mxu0 0.0
      %957 = vmatpush1.msra.mxu0 %v656
      %958 = vmatprep.subr.mxu0 0.0
      %959 = vmatpush1.msra.mxu0 0.0
      %960 = vmatprep.subr.mxu0 0.0
      %961 = vmatpush1.msra.mxu0 0.0
      %962 = vmatprep.subr.mxu0 0.0
      %963 = vmatpush1.msra.mxu0 0.0
      %964 = vmatprep.subr.mxu0 0.0
      %965 = vmatpush1.msra.mxu0 0.0
      %966 = vmatprep.subr.mxu0 0.0
      %967 = vmatpush1.msra.mxu0 0.0
      %968 = vmatprep.subr.mxu0 0.0
      %969 = vmatpush1.msra.mxu0 0.0
      %970 = vmatprep.subr.mxu0 0.0
      %971 = vmatpush1.msra.mxu0 0.0
      %972 = vmatprep.subr.mxu0 0.0
      %973 = vmatpush1.msra.mxu0 0.0
      %974 = vmatprep.subr.mxu0 0.0
      %975 = vmatpush1.msra.mxu0 0.0
      %976 = vmatprep.subr.mxu0 0.0
      %977 = vmatpush1.msra.mxu0 0.0
      %978 = vmatprep.subr.mxu0 0.0
      %979 = vmatpush1.msra.mxu0 0.0
      %980 = vmatprep.subr.mxu0 0.0
      %981 = vmatpush1.msra.mxu0 0.0
      %982 = vmatprep.subr.mxu0 0.0
      %983 = vmatpush1.msra.mxu0 0.0
      %984 = vmatprep.subr.mxu0 0.0
      %985 = vmatpush1.msra.mxu0 0.0
      %986 = vmatprep.subr.mxu0 0.0
      %987 = vmatpush1.msra.mxu0 0.0
      %988 = vmatprep.subr.mxu0 0.0
      %989 = vmatpush1.msra.mxu0 0.0
      %990 = vmatprep.subr.mxu0 0.0
      %991 = vmatpush1.msra.mxu0 0.0
      %992 = vmatprep.subr.mxu0 0.0
      %993 = vmatpush1.msra.mxu0 0.0
      %994 = vmatprep.subr.mxu0 0.0
      %995 = vmatpush1.msra.mxu0 0.0
      %996 = vmatprep.subr.mxu0 0.0
      %997 = vmatpush1.msra.mxu0 0.0
      %998 = vmatprep.subr.mxu0 0.0
      %999 = vmatpush1.msra.mxu0 0.0
      %1000 = vmatprep.subr.mxu0 0.0
      %1001 = vmatpush1.msra.mxu0 0.0
      %1002 = vmatprep.subr.mxu0 0.0
      %1003 = vmatpush1.msra.mxu0 0.0
      %1004 = vmatprep.subr.mxu0 0.0
      %1005 = vmatpush1.msra.mxu0 0.0
      %1006 = vmatprep.subr.mxu0 0.0
      %1007 = vmatpush1.msra.mxu0 0.0
      %1008 = vmatprep.subr.mxu0 0.0
      %1009 = vmatpush1.msra.mxu0 0.0
      %1010 = vmatprep.subr.mxu0 0.0
      %1011 = vmatpush1.msra.mxu0 0.0
      %1012 = vmatprep.subr.mxu0 0.0
      %1013 = vmatpush1.msra.mxu0 0.0
      %1014 = vmatprep.mubr.f32.mxu0 0.0
      %1015 = vmatmul.mubr.f32.gmra.mrb[0].mxu0 %v948
      %v1016 = vpop.f32.mrb[0].mxu0
      %v1017 = vadd.f32 0.0, %v1016
      %v1018 = vpop.f32.mrb[0].mxu0
      %1019 = vdwg.mxu0
      %s1020 = scalar_lea.vmem %s433, %s844
      %1021 = vst.msk [vmem:[%s1020] sm:$0x3] %vm841, %v1017
      %s1022 = smul.u32 %s650, 2
      %s1023 = sadd.s32 %s648, %s1022
      %s1024 = smul.u32 %s1023, 2
      %s1025 = scalar_lea.vmem [#allocation4], %s1024
      %v1026 = vld [vmem:[%s1025] sm:$0x3]
      %v1028 = vsel %vm662, %v1017, 0
      %1030 = vmatprep.subr.mxu0 0.0
      %1031 = vmatpush1.msra.mxu0 %v651
      %1032 = vmatprep.subr.mxu0 0.0
      %1033 = vmatpush1.msra.mxu0 %v652
      %1034 = vmatprep.subr.mxu0 0.0
      %1035 = vmatpush1.msra.mxu0 0.0
      %1036 = vmatprep.subr.mxu0 0.0
      %1037 = vmatpush1.msra.mxu0 0.0
      %1038 = vmatprep.subr.mxu0 0.0
      %1039 = vmatpush1.msra.mxu0 0.0
      %1040 = vmatprep.subr.mxu0 0.0
      %1041 = vmatpush1.msra.mxu0 0.0
      %1042 = vmatprep.subr.mxu0 0.0
      %1043 = vmatpush1.msra.mxu0 0.0
      %1044 = vmatprep.subr.mxu0 0.0
      %1045 = vmatpush1.msra.mxu0 0.0
      %1046 = vmatprep.subr.mxu0 0.0
      %1047 = vmatpush1.msra.mxu0 0.0
      %1048 = vmatprep.subr.mxu0 0.0
      %1049 = vmatpush1.msra.mxu0 0.0
      %1050 = vmatprep.subr.mxu0 0.0
      %1051 = vmatpush1.msra.mxu0 0.0
      %1052 = vmatprep.subr.mxu0 0.0
      %1053 = vmatpush1.msra.mxu0 0.0
      %1054 = vmatprep.subr.mxu0 0.0
      %1055 = vmatpush1.msra.mxu0 0.0
      %1056 = vmatprep.subr.mxu0 0.0
      %1057 = vmatpush1.msra.mxu0 0.0
      %1058 = vmatprep.subr.mxu0 0.0
      %1059 = vmatpush1.msra.mxu0 0.0
      %1060 = vmatprep.subr.mxu0 0.0
      %1061 = vmatpush1.msra.mxu0 0.0
      %1062 = vmatprep.subr.mxu0 0.0
      %1063 = vmatpush1.msra.mxu0 0.0
      %1064 = vmatprep.subr.mxu0 0.0
      %1065 = vmatpush1.msra.mxu0 0.0
      %1066 = vmatprep.subr.mxu0 0.0
      %1067 = vmatpush1.msra.mxu0 0.0
      %1068 = vmatprep.subr.mxu0 0.0
      %1069 = vmatpush1.msra.mxu0 0.0
      %1070 = vmatprep.subr.mxu0 0.0
      %1071 = vmatpush1.msra.mxu0 0.0
      %1072 = vmatprep.subr.mxu0 0.0
      %1073 = vmatpush1.msra.mxu0 0.0
      %1074 = vmatprep.subr.mxu0 0.0
      %1075 = vmatpush1.msra.mxu0 0.0
      %1076 = vmatprep.subr.mxu0 0.0
      %1077 = vmatpush1.msra.mxu0 0.0
      %1078 = vmatprep.subr.mxu0 0.0
      %1079 = vmatpush1.msra.mxu0 0.0
      %1080 = vmatprep.subr.mxu0 0.0
      %1081 = vmatpush1.msra.mxu0 0.0
      %1082 = vmatprep.subr.mxu0 0.0
      %1083 = vmatpush1.msra.mxu0 0.0
      %1084 = vmatprep.subr.mxu0 0.0
      %1085 = vmatpush1.msra.mxu0 0.0
      %1086 = vmatprep.subr.mxu0 0.0
      %1087 = vmatpush1.msra.mxu0 0.0
      %1088 = vmatprep.subr.mxu0 0.0
      %1089 = vmatpush1.msra.mxu0 0.0
      %1090 = vmatprep.subr.mxu0 0.0
      %1091 = vmatpush1.msra.mxu0 0.0
      %1092 = vmatprep.subr.mxu0 0.0
      %1093 = vmatpush1.msra.mxu0 0.0
      %1094 = vmatprep.mubr.f32.mxu0 0.0
      %1095 = vmatmul.mubr.f32.gmra.mrb[0].mxu0 %v1028
      %v1096 = vpop.f32.mrb[0].mxu0
      %v1097 = vadd.f32 0.0, %v1096
      %v1098 = vpop.f32.mrb[0].mxu0
      %1099 = vdwg.mxu0
      %v1100 = vadd.f32 %v1026, %v1097
      %v1101 = vxor.u32 %v1100, 2147483648
      %v1102 = vmul.f32 %v1101, 1.442695
      %v1103 = vpow.pop %v1102
      %v1104 = vadd.f32 %v1103, 1.0
      %v1105 = vrcp.pop %v1104
      %v1106 = vmul.f32 1.0, %v1105
      %v1107 = vtanh.pop %v1100
      %v1108 = vmul.f32 %v1106, %v938
      %1110 = vrot.lane.b32.xlu0 %v1107, 32
      %v1111 = vpop.permute.xlu0 %1110
      %v1113 = vmul.f32 %v1106, %v1111
      %1115 = vrot.lane.b32.xlu0 %v1113, 32
      %v1116 = vpop.permute.xlu0 %1115
      %v1118 = vadd.f32 %v1108, %v1116
      %v1119 = vtanh.pop %v1118
      %1121 = vrot.lane.b32.xlu0 %v1119, 32
      %v1122 = vpop.permute.xlu0 %1121
      %v1124 = vmul.f32 %v1106, %v1122
      %1126 = vrot.lane.b32.xlu0 %v1124, 64
      %v1127 = vpop.permute.xlu0 %1126
      %v1128 = vsel %vm516, %v1127, 0
      %1130 = vmatprep.subr.mxu0 0.0
      %1131 = vmatpush1.msra.mxu0 %v653
      %1132 = vmatprep.subr.mxu0 0.0
      %1133 = vmatpush1.msra.mxu0 %v654
      %1134 = vmatprep.subr.mxu0 0.0
      %1135 = vmatpush1.msra.mxu0 %v655
      %1136 = vmatprep.subr.mxu0 0.0
      %1137 = vmatpush1.msra.mxu0 %v656
      %1138 = vmatprep.subr.mxu0 0.0
      %1139 = vmatpush1.msra.mxu0 0.0
      %1140 = vmatprep.subr.mxu0 0.0
      %1141 = vmatpush1.msra.mxu0 0.0
      %1142 = vmatprep.subr.mxu0 0.0
      %1143 = vmatpush1.msra.mxu0 0.0
      %1144 = vmatprep.subr.mxu0 0.0
      %1145 = vmatpush1.msra.mxu0 0.0
      %1146 = vmatprep.subr.mxu0 0.0
      %1147 = vmatpush1.msra.mxu0 0.0
      %1148 = vmatprep.subr.mxu0 0.0
      %1149 = vmatpush1.msra.mxu0 0.0
      %1150 = vmatprep.subr.mxu0 0.0
      %1151 = vmatpush1.msra.mxu0 0.0
      %1152 = vmatprep.subr.mxu0 0.0
      %1153 = vmatpush1.msra.mxu0 0.0
      %1154 = vmatprep.subr.mxu0 0.0
      %1155 = vmatpush1.msra.mxu0 0.0
      %1156 = vmatprep.subr.mxu0 0.0
      %1157 = vmatpush1.msra.mxu0 0.0
      %1158 = vmatprep.subr.mxu0 0.0
      %1159 = vmatpush1.msra.mxu0 0.0
      %1160 = vmatprep.subr.mxu0 0.0
      %1161 = vmatpush1.msra.mxu0 0.0
      %1162 = vmatprep.subr.mxu0 0.0
      %1163 = vmatpush1.msra.mxu0 0.0
      %1164 = vmatprep.subr.mxu0 0.0
      %1165 = vmatpush1.msra.mxu0 0.0
      %1166 = vmatprep.subr.mxu0 0.0
      %1167 = vmatpush1.msra.mxu0 0.0
      %1168 = vmatprep.subr.mxu0 0.0
      %1169 = vmatpush1.msra.mxu0 0.0
      %1170 = vmatprep.subr.mxu0 0.0
      %1171 = vmatpush1.msra.mxu0 0.0
      %1172 = vmatprep.subr.mxu0 0.0
      %1173 = vmatpush1.msra.mxu0 0.0
      %1174 = vmatprep.subr.mxu0 0.0
      %1175 = vmatpush1.msra.mxu0 0.0
      %1176 = vmatprep.subr.mxu0 0.0
      %1177 = vmatpush1.msra.mxu0 0.0
      %1178 = vmatprep.subr.mxu0 0.0
      %1179 = vmatpush1.msra.mxu0 0.0
      %1180 = vmatprep.subr.mxu0 0.0
      %1181 = vmatpush1.msra.mxu0 0.0
      %1182 = vmatprep.subr.mxu0 0.0
      %1183 = vmatpush1.msra.mxu0 0.0
      %1184 = vmatprep.subr.mxu0 0.0
      %1185 = vmatpush1.msra.mxu0 0.0
      %1186 = vmatprep.subr.mxu0 0.0
      %1187 = vmatpush1.msra.mxu0 0.0
      %1188 = vmatprep.subr.mxu0 0.0
      %1189 = vmatpush1.msra.mxu0 0.0
      %1190 = vmatprep.subr.mxu0 0.0
      %1191 = vmatpush1.msra.mxu0 0.0
      %1192 = vmatprep.subr.mxu0 0.0
      %1193 = vmatpush1.msra.mxu0 0.0
      %1194 = vmatprep.mubr.f32.mxu0 0.0
      %1195 = vmatmul.mubr.f32.gmra.mrb[0].mxu0 %v1128
      %v1196 = vpop.f32.mrb[0].mxu0
      %v1197 = vadd.f32 0.0, %v1196
      %v1198 = vpop.f32.mrb[0].mxu0
      %1199 = vdwg.mxu0
      %s1200 = scalar_lea.vmem %s433, %s1024
      %1201 = vst.msk [vmem:[%s1200] sm:$0x3] %vm841, %v1197
      %s1202 = smul.u32 %s650, 3
      %s1203 = sadd.s32 %s648, %s1202
      %s1204 = smul.u32 %s1203, 2
      %s1205 = scalar_lea.vmem [#allocation4], %s1204
      %v1206 = vld [vmem:[%s1205] sm:$0x3]
      %v1208 = vsel %vm662, %v1197, 0
      %1210 = vmatprep.subr.mxu0 0.0
      %1211 = vmatpush1.msra.mxu0 %v651
      %1212 = vmatprep.subr.mxu0 0.0
      %1213 = vmatpush1.msra.mxu0 %v652
      %1214 = vmatprep.subr.mxu0 0.0
      %1215 = vmatpush1.msra.mxu0 0.0
      %1216 = vmatprep.subr.mxu0 0.0
      %1217 = vmatpush1.msra.mxu0 0.0
      %1218 = vmatprep.subr.mxu0 0.0
      %1219 = vmatpush1.msra.mxu0 0.0
      %1220 = vmatprep.subr.mxu0 0.0
      %1221 = vmatpush1.msra.mxu0 0.0
      %1222 = vmatprep.subr.mxu0 0.0
      %1223 = vmatpush1.msra.mxu0 0.0
      %1224 = vmatprep.subr.mxu0 0.0
      %1225 = vmatpush1.msra.mxu0 0.0
      %1226 = vmatprep.subr.mxu0 0.0
      %1227 = vmatpush1.msra.mxu0 0.0
      %1228 = vmatprep.subr.mxu0 0.0
      %1229 = vmatpush1.msra.mxu0 0.0
      %1230 = vmatprep.subr.mxu0 0.0
      %1231 = vmatpush1.msra.mxu0 0.0
      %1232 = vmatprep.subr.mxu0 0.0
      %1233 = vmatpush1.msra.mxu0 0.0
      %1234 = vmatprep.subr.mxu0 0.0
      %1235 = vmatpush1.msra.mxu0 0.0
      %1236 = vmatprep.subr.mxu0 0.0
      %1237 = vmatpush1.msra.mxu0 0.0
      %1238 = vmatprep.subr.mxu0 0.0
      %1239 = vmatpush1.msra.mxu0 0.0
      %1240 = vmatprep.subr.mxu0 0.0
      %1241 = vmatpush1.msra.mxu0 0.0
      %1242 = vmatprep.subr.mxu0 0.0
      %1243 = vmatpush1.msra.mxu0 0.0
      %1244 = vmatprep.subr.mxu0 0.0
      %1245 = vmatpush1.msra.mxu0 0.0
      %1246 = vmatprep.subr.mxu0 0.0
      %1247 = vmatpush1.msra.mxu0 0.0
      %1248 = vmatprep.subr.mxu0 0.0
      %1249 = vmatpush1.msra.mxu0 0.0
      %1250 = vmatprep.subr.mxu0 0.0
      %1251 = vmatpush1.msra.mxu0 0.0
      %1252 = vmatprep.subr.mxu0 0.0
      %1253 = vmatpush1.msra.mxu0 0.0
      %1254 = vmatprep.subr.mxu0 0.0
      %1255 = vmatpush1.msra.mxu0 0.0
      %1256 = vmatprep.subr.mxu0 0.0
      %1257 = vmatpush1.msra.mxu0 0.0
      %1258 = vmatprep.subr.mxu0 0.0
      %1259 = vmatpush1.msra.mxu0 0.0
      %1260 = vmatprep.subr.mxu0 0.0
      %1261 = vmatpush1.msra.mxu0 0.0
      %1262 = vmatprep.subr.mxu0 0.0
      %1263 = vmatpush1.msra.mxu0 0.0
      %1264 = vmatprep.subr.mxu0 0.0
      %1265 = vmatpush1.msra.mxu0 0.0
      %1266 = vmatprep.subr.mxu0 0.0
      %1267 = vmatpush1.msra.mxu0 0.0
      %1268 = vmatprep.subr.mxu0 0.0
      %1269 = vmatpush1.msra.mxu0 0.0
      %1270 = vmatprep.subr.mxu0 0.0
      %1271 = vmatpush1.msra.mxu0 0.0
      %1272 = vmatprep.subr.mxu0 0.0
      %1273 = vmatpush1.msra.mxu0 0.0
      %1274 = vmatprep.mubr.f32.mxu0 0.0
      %1275 = vmatmul.mubr.f32.gmra.mrb[0].mxu0 %v1208
      %v1276 = vpop.f32.mrb[0].mxu0
      %v1277 = vadd.f32 0.0, %v1276
      %v1278 = vpop.f32.mrb[0].mxu0
      %1279 = vdwg.mxu0
      %v1280 = vadd.f32 %v1206, %v1277
      %v1281 = vxor.u32 %v1280, 2147483648
      %v1282 = vmul.f32 %v1281, 1.442695
      %v1283 = vpow.pop %v1282
      %v1284 = vadd.f32 %v1283, 1.0
      %v1285 = vrcp.pop %v1284
      %v1286 = vmul.f32 1.0, %v1285
      %v1287 = vtanh.pop %v1280
      %v1288 = vmul.f32 %v1286, %v1118
      %1290 = vrot.lane.b32.xlu0 %v1287, 32
      %v1291 = vpop.permute.xlu0 %1290
      %v1293 = vmul.f32 %v1286, %v1291
      %1295 = vrot.lane.b32.xlu0 %v1293, 32
      %v1296 = vpop.permute.xlu0 %1295
      %v1298 = vadd.f32 %v1288, %v1296
      %v1299 = vtanh.pop %v1298
      %1301 = vrot.lane.b32.xlu0 %v1299, 32
      %v1302 = vpop.permute.xlu0 %1301
      %v1304 = vmul.f32 %v1286, %v1302
      %1306 = vrot.lane.b32.xlu0 %v1304, 64
      %v1307 = vpop.permute.xlu0 %1306
      %v1308 = vsel %vm516, %v1307, 0
      %1310 = vmatprep.subr.mxu0 0.0
      %1311 = vmatpush1.msra.mxu0 %v653
      %1312 = vmatprep.subr.mxu0 0.0
      %1313 = vmatpush1.msra.mxu0 %v654
      %1314 = vmatprep.subr.mxu0 0.0
      %1315 = vmatpush1.msra.mxu0 %v655
      %1316 = vmatprep.subr.mxu0 0.0
      %1317 = vmatpush1.msra.mxu0 %v656
      %1318 = vmatprep.subr.mxu0 0.0
      %1319 = vmatpush1.msra.mxu0 0.0
      %1320 = vmatprep.subr.mxu0 0.0
      %1321 = vmatpush1.msra.mxu0 0.0
      %1322 = vmatprep.subr.mxu0 0.0
      %1323 = vmatpush1.msra.mxu0 0.0
      %1324 = vmatprep.subr.mxu0 0.0
      %1325 = vmatpush1.msra.mxu0 0.0
      %1326 = vmatprep.subr.mxu0 0.0
      %1327 = vmatpush1.msra.mxu0 0.0
      %1328 = vmatprep.subr.mxu0 0.0
      %1329 = vmatpush1.msra.mxu0 0.0
      %1330 = vmatprep.subr.mxu0 0.0
      %1331 = vmatpush1.msra.mxu0 0.0
      %1332 = vmatprep.subr.mxu0 0.0
      %1333 = vmatpush1.msra.mxu0 0.0
      %1334 = vmatprep.subr.mxu0 0.0
      %1335 = vmatpush1.msra.mxu0 0.0
      %1336 = vmatprep.subr.mxu0 0.0
      %1337 = vmatpush1.msra.mxu0 0.0
      %1338 = vmatprep.subr.mxu0 0.0
      %1339 = vmatpush1.msra.mxu0 0.0
      %1340 = vmatprep.subr.mxu0 0.0
      %1341 = vmatpush1.msra.mxu0 0.0
      %1342 = vmatprep.subr.mxu0 0.0
      %1343 = vmatpush1.msra.mxu0 0.0
      %1344 = vmatprep.subr.mxu0 0.0
      %1345 = vmatpush1.msra.mxu0 0.0
      %1346 = vmatprep.subr.mxu0 0.0
      %1347 = vmatpush1.msra.mxu0 0.0
      %1348 = vmatprep.subr.mxu0 0.0
      %1349 = vmatpush1.msra.mxu0 0.0
      %1350 = vmatprep.subr.mxu0 0.0
      %1351 = vmatpush1.msra.mxu0 0.0
      %1352 = vmatprep.subr.mxu0 0.0
      %1353 = vmatpush1.msra.mxu0 0.0
      %1354 = vmatprep.subr.mxu0 0.0
      %1355 = vmatpush1.msra.mxu0 0.0
      %1356 = vmatprep.subr.mxu0 0.0
      %1357 = vmatpush1.msra.mxu0 0.0
      %1358 = vmatprep.subr.mxu0 0.0
      %1359 = vmatpush1.msra.mxu0 0.0
      %1360 = vmatprep.subr.mxu0 0.0
      %1361 = vmatpush1.msra.mxu0 0.0
      %1362 = vmatprep.subr.mxu0 0.0
      %1363 = vmatpush1.msra.mxu0 0.0
      %1364 = vmatprep.subr.mxu0 0.0
      %1365 = vmatpush1.msra.mxu0 0.0
      %1366 = vmatprep.subr.mxu0 0.0
      %1367 = vmatpush1.msra.mxu0 0.0
      %1368 = vmatprep.subr.mxu0 0.0
      %1369 = vmatpush1.msra.mxu0 0.0
      %1370 = vmatprep.subr.mxu0 0.0
      %1371 = vmatpush1.msra.mxu0 0.0
      %1372 = vmatprep.subr.mxu0 0.0
      %1373 = vmatpush1.msra.mxu0 0.0
      %1374 = vmatprep.mubr.f32.mxu0 0.0
      %1375 = vmatmul.mubr.f32.gmra.mrb[0].mxu0 %v1308
      %v1376 = vpop.f32.mrb[0].mxu0
      %v1377 = vadd.f32 0.0, %v1376
      %v1378 = vpop.f32.mrb[0].mxu0
      %1379 = vdwg.mxu0
      %s1380 = scalar_lea.vmem %s433, %s1204
      %1381 = vst.msk [vmem:[%s1380] sm:$0x3] %vm841, %v1377
      %s1382 = smul.u32 %s650, 4
      %s1383 = sadd.s32 %s648, %s1382
      %s1384 = smul.u32 %s1383, 2
      %s1385 = scalar_lea.vmem [#allocation4], %s1384
      %v1386 = vld [vmem:[%s1385] sm:$0x3]
      %v1388 = vsel %vm662, %v1377, 0
      %1390 = vmatprep.subr.mxu0 0.0
      %1391 = vmatpush1.msra.mxu0 %v651
      %1392 = vmatprep.subr.mxu0 0.0
      %1393 = vmatpush1.msra.mxu0 %v652
      %1394 = vmatprep.subr.mxu0 0.0
      %1395 = vmatpush1.msra.mxu0 0.0
      %1396 = vmatprep.subr.mxu0 0.0
      %1397 = vmatpush1.msra.mxu0 0.0
      %1398 = vmatprep.subr.mxu0 0.0
      %1399 = vmatpush1.msra.mxu0 0.0
      %1400 = vmatprep.subr.mxu0 0.0
      %1401 = vmatpush1.msra.mxu0 0.0
      %1402 = vmatprep.subr.mxu0 0.0
      %1403 = vmatpush1.msra.mxu0 0.0
      %1404 = vmatprep.subr.mxu0 0.0
      %1405 = vmatpush1.msra.mxu0 0.0
      %1406 = vmatprep.subr.mxu0 0.0
      %1407 = vmatpush1.msra.mxu0 0.0
      %1408 = vmatprep.subr.mxu0 0.0
      %1409 = vmatpush1.msra.mxu0 0.0
      %1410 = vmatprep.subr.mxu0 0.0
      %1411 = vmatpush1.msra.mxu0 0.0
      %1412 = vmatprep.subr.mxu0 0.0
      %1413 = vmatpush1.msra.mxu0 0.0
      %1414 = vmatprep.subr.mxu0 0.0
      %1415 = vmatpush1.msra.mxu0 0.0
      %1416 = vmatprep.subr.mxu0 0.0
      %1417 = vmatpush1.msra.mxu0 0.0
      %1418 = vmatprep.subr.mxu0 0.0
      %1419 = vmatpush1.msra.mxu0 0.0
      %1420 = vmatprep.subr.mxu0 0.0
      %1421 = vmatpush1.msra.mxu0 0.0
      %1422 = vmatprep.subr.mxu0 0.0
      %1423 = vmatpush1.msra.mxu0 0.0
      %1424 = vmatprep.subr.mxu0 0.0
      %1425 = vmatpush1.msra.mxu0 0.0
      %1426 = vmatprep.subr.mxu0 0.0
      %1427 = vmatpush1.msra.mxu0 0.0
      %1428 = vmatprep.subr.mxu0 0.0
      %1429 = vmatpush1.msra.mxu0 0.0
      %1430 = vmatprep.subr.mxu0 0.0
      %1431 = vmatpush1.msra.mxu0 0.0
      %1432 = vmatprep.subr.mxu0 0.0
      %1433 = vmatpush1.msra.mxu0 0.0
      %1434 = vmatprep.subr.mxu0 0.0
      %1435 = vmatpush1.msra.mxu0 0.0
      %1436 = vmatprep.subr.mxu0 0.0
      %1437 = vmatpush1.msra.mxu0 0.0
      %1438 = vmatprep.subr.mxu0 0.0
      %1439 = vmatpush1.msra.mxu0 0.0
      %1440 = vmatprep.subr.mxu0 0.0
      %1441 = vmatpush1.msra.mxu0 0.0
      %1442 = vmatprep.subr.mxu0 0.0
      %1443 = vmatpush1.msra.mxu0 0.0
      %1444 = vmatprep.subr.mxu0 0.0
      %1445 = vmatpush1.msra.mxu0 0.0
      %1446 = vmatprep.subr.mxu0 0.0
      %1447 = vmatpush1.msra.mxu0 0.0
      %1448 = vmatprep.subr.mxu0 0.0
      %1449 = vmatpush1.msra.mxu0 0.0
      %1450 = vmatprep.subr.mxu0 0.0
      %1451 = vmatpush1.msra.mxu0 0.0
      %1452 = vmatprep.subr.mxu0 0.0
      %1453 = vmatpush1.msra.mxu0 0.0
      %1454 = vmatprep.mubr.f32.mxu0 0.0
      %1455 = vmatmul.mubr.f32.gmra.mrb[0].mxu0 %v1388
      %v1456 = vpop.f32.mrb[0].mxu0
      %v1457 = vadd.f32 0.0, %v1456
      %v1458 = vpop.f32.mrb[0].mxu0
      %1459 = vdwg.mxu0
      %v1460 = vadd.f32 %v1386, %v1457
      %v1461 = vxor.u32 %v1460, 2147483648
      %v1462 = vmul.f32 %v1461, 1.442695
      %v1463 = vpow.pop %v1462
      %v1464 = vadd.f32 %v1463, 1.0
      %v1465 = vrcp.pop %v1464
      %v1466 = vmul.f32 1.0, %v1465
      %v1467 = vtanh.pop %v1460
      %v1468 = vmul.f32 %v1466, %v1298
      %1470 = vrot.lane.b32.xlu0 %v1467, 32
      %v1471 = vpop.permute.xlu0 %1470
      %v1473 = vmul.f32 %v1466, %v1471
      %1475 = vrot.lane.b32.xlu0 %v1473, 32
      %v1476 = vpop.permute.xlu0 %1475
      %v1478 = vadd.f32 %v1468, %v1476
      %v1479 = vtanh.pop %v1478
      %1481 = vrot.lane.b32.xlu0 %v1479, 32
      %v1482 = vpop.permute.xlu0 %1481
      %v1484 = vmul.f32 %v1466, %v1482
      %1486 = vrot.lane.b32.xlu0 %v1484, 64
      %v1487 = vpop.permute.xlu0 %1486
      %v1488 = vsel %vm516, %v1487, 0
      %1490 = vmatprep.subr.mxu0 0.0
      %1491 = vmatpush1.msra.mxu0 %v653
      %1492 = vmatprep.subr.mxu0 0.0
      %1493 = vmatpush1.msra.mxu0 %v654
      %1494 = vmatprep.subr.mxu0 0.0
      %1495 = vmatpush1.msra.mxu0 %v655
      %1496 = vmatprep.subr.mxu0 0.0
      %1497 = vmatpush1.msra.mxu0 %v656
      %1498 = vmatprep.subr.mxu0 0.0
      %1499 = vmatpush1.msra.mxu0 0.0
      %1500 = vmatprep.subr.mxu0 0.0
      %1501 = vmatpush1.msra.mxu0 0.0
      %1502 = vmatprep.subr.mxu0 0.0
      %1503 = vmatpush1.msra.mxu0 0.0
      %1504 = vmatprep.subr.mxu0 0.0
      %1505 = vmatpush1.msra.mxu0 0.0
      %1506 = vmatprep.subr.mxu0 0.0
      %1507 = vmatpush1.msra.mxu0 0.0
      %1508 = vmatprep.subr.mxu0 0.0
      %1509 = vmatpush1.msra.mxu0 0.0
      %1510 = vmatprep.subr.mxu0 0.0
      %1511 = vmatpush1.msra.mxu0 0.0
      %1512 = vmatprep.subr.mxu0 0.0
      %1513 = vmatpush1.msra.mxu0 0.0
      %1514 = vmatprep.subr.mxu0 0.0
      %1515 = vmatpush1.msra.mxu0 0.0
      %1516 = vmatprep.subr.mxu0 0.0
      %1517 = vmatpush1.msra.mxu0 0.0
      %1518 = vmatprep.subr.mxu0 0.0
      %1519 = vmatpush1.msra.mxu0 0.0
      %1520 = vmatprep.subr.mxu0 0.0
      %1521 = vmatpush1.msra.mxu0 0.0
      %1522 = vmatprep.subr.mxu0 0.0
      %1523 = vmatpush1.msra.mxu0 0.0
      %1524 = vmatprep.subr.mxu0 0.0
      %1525 = vmatpush1.msra.mxu0 0.0
      %1526 = vmatprep.subr.mxu0 0.0
      %1527 = vmatpush1.msra.mxu0 0.0
      %1528 = vmatprep.subr.mxu0 0.0
      %1529 = vmatpush1.msra.mxu0 0.0
      %1530 = vmatprep.subr.mxu0 0.0
      %1531 = vmatpush1.msra.mxu0 0.0
      %1532 = vmatprep.subr.mxu0 0.0
      %1533 = vmatpush1.msra.mxu0 0.0
      %1534 = vmatprep.subr.mxu0 0.0
      %1535 = vmatpush1.msra.mxu0 0.0
      %1536 = vmatprep.subr.mxu0 0.0
      %1537 = vmatpush1.msra.mxu0 0.0
      %1538 = vmatprep.subr.mxu0 0.0
      %1539 = vmatpush1.msra.mxu0 0.0
      %1540 = vmatprep.subr.mxu0 0.0
      %1541 = vmatpush1.msra.mxu0 0.0
      %1542 = vmatprep.subr.mxu0 0.0
      %1543 = vmatpush1.msra.mxu0 0.0
      %1544 = vmatprep.subr.mxu0 0.0
      %1545 = vmatpush1.msra.mxu0 0.0
      %1546 = vmatprep.subr.mxu0 0.0
      %1547 = vmatpush1.msra.mxu0 0.0
      %1548 = vmatprep.subr.mxu0 0.0
      %1549 = vmatpush1.msra.mxu0 0.0
      %1550 = vmatprep.subr.mxu0 0.0
      %1551 = vmatpush1.msra.mxu0 0.0
      %1552 = vmatprep.subr.mxu0 0.0
      %1553 = vmatpush1.msra.mxu0 0.0
      %1554 = vmatprep.mubr.f32.mxu0 0.0
      %1555 = vmatmul.mubr.f32.gmra.mrb[0].mxu0 %v1488
      %v1556 = vpop.f32.mrb[0].mxu0
      %v1557 = vadd.f32 0.0, %v1556
      %v1558 = vpop.f32.mrb[0].mxu0
      %1559 = vdwg.mxu0
      %s1560 = scalar_lea.vmem %s433, %s1384
      %1561 = vst.msk [vmem:[%s1560] sm:$0x3] %vm841, %v1557
      %s1562 = smul.u32 %s650, 5
      %s1563 = sadd.s32 %s648, %s1562
      %s1564 = smul.u32 %s1563, 2
      %s1565 = scalar_lea.vmem [#allocation4], %s1564
      %v1566 = vld [vmem:[%s1565] sm:$0x3]
      %v1568 = vsel %vm662, %v1557, 0
      %1570 = vmatprep.subr.mxu0 0.0
      %1571 = vmatpush1.msra.mxu0 %v651
      %1572 = vmatprep.subr.mxu0 0.0
      %1573 = vmatpush1.msra.mxu0 %v652
      %1574 = vmatprep.subr.mxu0 0.0
      %1575 = vmatpush1.msra.mxu0 0.0
      %1576 = vmatprep.subr.mxu0 0.0
      %1577 = vmatpush1.msra.mxu0 0.0
      %1578 = vmatprep.subr.mxu0 0.0
      %1579 = vmatpush1.msra.mxu0 0.0
      %1580 = vmatprep.subr.mxu0 0.0
      %1581 = vmatpush1.msra.mxu0 0.0
      %1582 = vmatprep.subr.mxu0 0.0
      %1583 = vmatpush1.msra.mxu0 0.0
      %1584 = vmatprep.subr.mxu0 0.0
      %1585 = vmatpush1.msra.mxu0 0.0
      %1586 = vmatprep.subr.mxu0 0.0
      %1587 = vmatpush1.msra.mxu0 0.0
      %1588 = vmatprep.subr.mxu0 0.0
      %1589 = vmatpush1.msra.mxu0 0.0
      %1590 = vmatprep.subr.mxu0 0.0
      %1591 = vmatpush1.msra.mxu0 0.0
      %1592 = vmatprep.subr.mxu0 0.0
      %1593 = vmatpush1.msra.mxu0 0.0
      %1594 = vmatprep.subr.mxu0 0.0
      %1595 = vmatpush1.msra.mxu0 0.0
      %1596 = vmatprep.subr.mxu0 0.0
      %1597 = vmatpush1.msra.mxu0 0.0
      %1598 = vmatprep.subr.mxu0 0.0
      %1599 = vmatpush1.msra.mxu0 0.0
      %1600 = vmatprep.subr.mxu0 0.0
      %1601 = vmatpush1.msra.mxu0 0.0
      %1602 = vmatprep.subr.mxu0 0.0
      %1603 = vmatpush1.msra.mxu0 0.0
      %1604 = vmatprep.subr.mxu0 0.0
      %1605 = vmatpush1.msra.mxu0 0.0
      %1606 = vmatprep.subr.mxu0 0.0
      %1607 = vmatpush1.msra.mxu0 0.0
      %1608 = vmatprep.subr.mxu0 0.0
      %1609 = vmatpush1.msra.mxu0 0.0
      %1610 = vmatprep.subr.mxu0 0.0
      %1611 = vmatpush1.msra.mxu0 0.0
      %1612 = vmatprep.subr.mxu0 0.0
      %1613 = vmatpush1.msra.mxu0 0.0
      %1614 = vmatprep.subr.mxu0 0.0
      %1615 = vmatpush1.msra.mxu0 0.0
      %1616 = vmatprep.subr.mxu0 0.0
      %1617 = vmatpush1.msra.mxu0 0.0
      %1618 = vmatprep.subr.mxu0 0.0
      %1619 = vmatpush1.msra.mxu0 0.0
      %1620 = vmatprep.subr.mxu0 0.0
      %1621 = vmatpush1.msra.mxu0 0.0
      %1622 = vmatprep.subr.mxu0 0.0
      %1623 = vmatpush1.msra.mxu0 0.0
      %1624 = vmatprep.subr.mxu0 0.0
      %1625 = vmatpush1.msra.mxu0 0.0
      %1626 = vmatprep.subr.mxu0 0.0
      %1627 = vmatpush1.msra.mxu0 0.0
      %1628 = vmatprep.subr.mxu0 0.0
      %1629 = vmatpush1.msra.mxu0 0.0
      %1630 = vmatprep.subr.mxu0 0.0
      %1631 = vmatpush1.msra.mxu0 0.0
      %1632 = vmatprep.subr.mxu0 0.0
      %1633 = vmatpush1.msra.mxu0 0.0
      %1634 = vmatprep.mubr.f32.mxu0 0.0
      %1635 = vmatmul.mubr.f32.gmra.mrb[0].mxu0 %v1568
      %v1636 = vpop.f32.mrb[0].mxu0
      %v1637 = vadd.f32 0.0, %v1636
      %v1638 = vpop.f32.mrb[0].mxu0
      %1639 = vdwg.mxu0
      %v1640 = vadd.f32 %v1566, %v1637
      %v1641 = vxor.u32 %v1640, 2147483648
      %v1642 = vmul.f32 %v1641, 1.442695
      %v1643 = vpow.pop %v1642
      %v1644 = vadd.f32 %v1643, 1.0
      %v1645 = vrcp.pop %v1644
      %v1646 = vmul.f32 1.0, %v1645
      %v1647 = vtanh.pop %v1640
      %v1648 = vmul.f32 %v1646, %v1478
      %1650 = vrot.lane.b32.xlu0 %v1647, 32
      %v1651 = vpop.permute.xlu0 %1650
      %v1653 = vmul.f32 %v1646, %v1651
      %1655 = vrot.lane.b32.xlu0 %v1653, 32
      %v1656 = vpop.permute.xlu0 %1655
      %v1658 = vadd.f32 %v1648, %v1656
      %v1659 = vtanh.pop %v1658
      %1661 = vrot.lane.b32.xlu0 %v1659, 32
      %v1662 = vpop.permute.xlu0 %1661
      %v1664 = vmul.f32 %v1646, %v1662
      %1666 = vrot.lane.b32.xlu0 %v1664, 64
      %v1667 = vpop.permute.xlu0 %1666
      %v1668 = vsel %vm516, %v1667, 0
      %1670 = vmatprep.subr.mxu0 0.0
      %1671 = vmatpush1.msra.mxu0 %v653
      %1672 = vmatprep.subr.mxu0 0.0
      %1673 = vmatpush1.msra.mxu0 %v654
      %1674 = vmatprep.subr.mxu0 0.0
      %1675 = vmatpush1.msra.mxu0 %v655
      %1676 = vmatprep.subr.mxu0 0.0
      %1677 = vmatpush1.msra.mxu0 %v656
      %1678 = vmatprep.subr.mxu0 0.0
      %1679 = vmatpush1.msra.mxu0 0.0
      %1680 = vmatprep.subr.mxu0 0.0
      %1681 = vmatpush1.msra.mxu0 0.0
      %1682 = vmatprep.subr.mxu0 0.0
      %1683 = vmatpush1.msra.mxu0 0.0
      %1684 = vmatprep.subr.mxu0 0.0
      %1685 = vmatpush1.msra.mxu0 0.0
      %1686 = vmatprep.subr.mxu0 0.0
      %1687 = vmatpush1.msra.mxu0 0.0
      %1688 = vmatprep.subr.mxu0 0.0
      %1689 = vmatpush1.msra.mxu0 0.0
      %1690 = vmatprep.subr.mxu0 0.0
      %1691 = vmatpush1.msra.mxu0 0.0
      %1692 = vmatprep.subr.mxu0 0.0
      %1693 = vmatpush1.msra.mxu0 0.0
      %1694 = vmatprep.subr.mxu0 0.0
      %1695 = vmatpush1.msra.mxu0 0.0
      %1696 = vmatprep.subr.mxu0 0.0
      %1697 = vmatpush1.msra.mxu0 0.0
      %1698 = vmatprep.subr.mxu0 0.0
      %1699 = vmatpush1.msra.mxu0 0.0
      %1700 = vmatprep.subr.mxu0 0.0
      %1701 = vmatpush1.msra.mxu0 0.0
      %1702 = vmatprep.subr.mxu0 0.0
      %1703 = vmatpush1.msra.mxu0 0.0
      %1704 = vmatprep.subr.mxu0 0.0
      %1705 = vmatpush1.msra.mxu0 0.0
      %1706 = vmatprep.subr.mxu0 0.0
      %1707 = vmatpush1.msra.mxu0 0.0
      %1708 = vmatprep.subr.mxu0 0.0
      %1709 = vmatpush1.msra.mxu0 0.0
      %1710 = vmatprep.subr.mxu0 0.0
      %1711 = vmatpush1.msra.mxu0 0.0
      %1712 = vmatprep.subr.mxu0 0.0
      %1713 = vmatpush1.msra.mxu0 0.0
      %1714 = vmatprep.subr.mxu0 0.0
      %1715 = vmatpush1.msra.mxu0 0.0
      %1716 = vmatprep.subr.mxu0 0.0
      %1717 = vmatpush1.msra.mxu0 0.0
      %1718 = vmatprep.subr.mxu0 0.0
      %1719 = vmatpush1.msra.mxu0 0.0
      %1720 = vmatprep.subr.mxu0 0.0
      %1721 = vmatpush1.msra.mxu0 0.0
      %1722 = vmatprep.subr.mxu0 0.0
      %1723 = vmatpush1.msra.mxu0 0.0
      %1724 = vmatprep.subr.mxu0 0.0
      %1725 = vmatpush1.msra.mxu0 0.0
      %1726 = vmatprep.subr.mxu0 0.0
      %1727 = vmatpush1.msra.mxu0 0.0
      %1728 = vmatprep.subr.mxu0 0.0
      %1729 = vmatpush1.msra.mxu0 0.0
      %1730 = vmatprep.subr.mxu0 0.0
      %1731 = vmatpush1.msra.mxu0 0.0
      %1732 = vmatprep.subr.mxu0 0.0
      %1733 = vmatpush1.msra.mxu0 0.0
      %1734 = vmatprep.mubr.f32.mxu0 0.0
      %1735 = vmatmul.mubr.f32.gmra.mrb[0].mxu0 %v1668
      %v1736 = vpop.f32.mrb[0].mxu0
      %v1737 = vadd.f32 0.0, %v1736
      %v1738 = vpop.f32.mrb[0].mxu0
      %1739 = vdwg.mxu0
      %s1740 = scalar_lea.vmem %s433, %s1564
      %1741 = vst.msk [vmem:[%s1740] sm:$0x3] %vm841, %v1737
      %s1742 = smul.u32 %s650, 6
      %s1743 = sadd.s32 %s648, %s1742
      %s1744 = smul.u32 %s1743, 2
      %s1745 = scalar_lea.vmem [#allocation4], %s1744
      %v1746 = vld [vmem:[%s1745] sm:$0x3]
      %v1748 = vsel %vm662, %v1737, 0
      %1750 = vmatprep.subr.mxu0 0.0
      %1751 = vmatpush1.msra.mxu0 %v651
      %1752 = vmatprep.subr.mxu0 0.0
      %1753 = vmatpush1.msra.mxu0 %v652
      %1754 = vmatprep.subr.mxu0 0.0
      %1755 = vmatpush1.msra.mxu0 0.0
      %1756 = vmatprep.subr.mxu0 0.0
      %1757 = vmatpush1.msra.mxu0 0.0
      %1758 = vmatprep.subr.mxu0 0.0
      %1759 = vmatpush1.msra.mxu0 0.0
      %1760 = vmatprep.subr.mxu0 0.0
      %1761 = vmatpush1.msra.mxu0 0.0
      %1762 = vmatprep.subr.mxu0 0.0
      %1763 = vmatpush1.msra.mxu0 0.0
      %1764 = vmatprep.subr.mxu0 0.0
      %1765 = vmatpush1.msra.mxu0 0.0
      %1766 = vmatprep.subr.mxu0 0.0
      %1767 = vmatpush1.msra.mxu0 0.0
      %1768 = vmatprep.subr.mxu0 0.0
      %1769 = vmatpush1.msra.mxu0 0.0
      %1770 = vmatprep.subr.mxu0 0.0
      %1771 = vmatpush1.msra.mxu0 0.0
      %1772 = vmatprep.subr.mxu0 0.0
      %1773 = vmatpush1.msra.mxu0 0.0
      %1774 = vmatprep.subr.mxu0 0.0
      %1775 = vmatpush1.msra.mxu0 0.0
      %1776 = vmatprep.subr.mxu0 0.0
      %1777 = vmatpush1.msra.mxu0 0.0
      %1778 = vmatprep.subr.mxu0 0.0
      %1779 = vmatpush1.msra.mxu0 0.0
      %1780 = vmatprep.subr.mxu0 0.0
      %1781 = vmatpush1.msra.mxu0 0.0
      %1782 = vmatprep.subr.mxu0 0.0
      %1783 = vmatpush1.msra.mxu0 0.0
      %1784 = vmatprep.subr.mxu0 0.0
      %1785 = vmatpush1.msra.mxu0 0.0
      %1786 = vmatprep.subr.mxu0 0.0
      %1787 = vmatpush1.msra.mxu0 0.0
      %1788 = vmatprep.subr.mxu0 0.0
      %1789 = vmatpush1.msra.mxu0 0.0
      %1790 = vmatprep.subr.mxu0 0.0
      %1791 = vmatpush1.msra.mxu0 0.0
      %1792 = vmatprep.subr.mxu0 0.0
      %1793 = vmatpush1.msra.mxu0 0.0
      %1794 = vmatprep.subr.mxu0 0.0
      %1795 = vmatpush1.msra.mxu0 0.0
      %1796 = vmatprep.subr.mxu0 0.0
      %1797 = vmatpush1.msra.mxu0 0.0
      %1798 = vmatprep.subr.mxu0 0.0
      %1799 = vmatpush1.msra.mxu0 0.0
      %1800 = vmatprep.subr.mxu0 0.0
      %1801 = vmatpush1.msra.mxu0 0.0
      %1802 = vmatprep.subr.mxu0 0.0
      %1803 = vmatpush1.msra.mxu0 0.0
      %1804 = vmatprep.subr.mxu0 0.0
      %1805 = vmatpush1.msra.mxu0 0.0
      %1806 = vmatprep.subr.mxu0 0.0
      %1807 = vmatpush1.msra.mxu0 0.0
      %1808 = vmatprep.subr.mxu0 0.0
      %1809 = vmatpush1.msra.mxu0 0.0
      %1810 = vmatprep.subr.mxu0 0.0
      %1811 = vmatpush1.msra.mxu0 0.0
      %1812 = vmatprep.subr.mxu0 0.0
      %1813 = vmatpush1.msra.mxu0 0.0
      %1814 = vmatprep.mubr.f32.mxu0 0.0
      %1815 = vmatmul.mubr.f32.gmra.mrb[0].mxu0 %v1748
      %v1816 = vpop.f32.mrb[0].mxu0
      %v1817 = vadd.f32 0.0, %v1816
      %v1818 = vpop.f32.mrb[0].mxu0
      %1819 = vdwg.mxu0
      %v1820 = vadd.f32 %v1746, %v1817
      %v1821 = vxor.u32 %v1820, 2147483648
      %v1822 = vmul.f32 %v1821, 1.442695
      %v1823 = vpow.pop %v1822
      %v1824 = vadd.f32 %v1823, 1.0
      %v1825 = vrcp.pop %v1824
      %v1826 = vmul.f32 1.0, %v1825
      %v1827 = vtanh.pop %v1820
      %v1828 = vmul.f32 %v1826, %v1658
      %1830 = vrot.lane.b32.xlu0 %v1827, 32
      %v1831 = vpop.permute.xlu0 %1830
      %v1833 = vmul.f32 %v1826, %v1831
      %1835 = vrot.lane.b32.xlu0 %v1833, 32
      %v1836 = vpop.permute.xlu0 %1835
      %v1838 = vadd.f32 %v1828, %v1836
      %v1839 = vtanh.pop %v1838
      %1841 = vrot.lane.b32.xlu0 %v1839, 32
      %v1842 = vpop.permute.xlu0 %1841
      %v1844 = vmul.f32 %v1826, %v1842
      %1846 = vrot.lane.b32.xlu0 %v1844, 64
      %v1847 = vpop.permute.xlu0 %1846
      %v1848 = vsel %vm516, %v1847, 0
      %1850 = vmatprep.subr.mxu0 0.0
      %1851 = vmatpush1.msra.mxu0 %v653
      %1852 = vmatprep.subr.mxu0 0.0
      %1853 = vmatpush1.msra.mxu0 %v654
      %1854 = vmatprep.subr.mxu0 0.0
      %1855 = vmatpush1.msra.mxu0 %v655
      %1856 = vmatprep.subr.mxu0 0.0
      %1857 = vmatpush1.msra.mxu0 %v656
      %1858 = vmatprep.subr.mxu0 0.0
      %1859 = vmatpush1.msra.mxu0 0.0
      %1860 = vmatprep.subr.mxu0 0.0
      %1861 = vmatpush1.msra.mxu0 0.0
      %1862 = vmatprep.subr.mxu0 0.0
      %1863 = vmatpush1.msra.mxu0 0.0
      %1864 = vmatprep.subr.mxu0 0.0
      %1865 = vmatpush1.msra.mxu0 0.0
      %1866 = vmatprep.subr.mxu0 0.0
      %1867 = vmatpush1.msra.mxu0 0.0
      %1868 = vmatprep.subr.mxu0 0.0
      %1869 = vmatpush1.msra.mxu0 0.0
      %1870 = vmatprep.subr.mxu0 0.0
      %1871 = vmatpush1.msra.mxu0 0.0
      %1872 = vmatprep.subr.mxu0 0.0
      %1873 = vmatpush1.msra.mxu0 0.0
      %1874 = vmatprep.subr.mxu0 0.0
      %1875 = vmatpush1.msra.mxu0 0.0
      %1876 = vmatprep.subr.mxu0 0.0
      %1877 = vmatpush1.msra.mxu0 0.0
      %1878 = vmatprep.subr.mxu0 0.0
      %1879 = vmatpush1.msra.mxu0 0.0
      %1880 = vmatprep.subr.mxu0 0.0
      %1881 = vmatpush1.msra.mxu0 0.0
      %1882 = vmatprep.subr.mxu0 0.0
      %1883 = vmatpush1.msra.mxu0 0.0
      %1884 = vmatprep.subr.mxu0 0.0
      %1885 = vmatpush1.msra.mxu0 0.0
      %1886 = vmatprep.subr.mxu0 0.0
      %1887 = vmatpush1.msra.mxu0 0.0
      %1888 = vmatprep.subr.mxu0 0.0
      %1889 = vmatpush1.msra.mxu0 0.0
      %1890 = vmatprep.subr.mxu0 0.0
      %1891 = vmatpush1.msra.mxu0 0.0
      %1892 = vmatprep.subr.mxu0 0.0
      %1893 = vmatpush1.msra.mxu0 0.0
      %1894 = vmatprep.subr.mxu0 0.0
      %1895 = vmatpush1.msra.mxu0 0.0
      %1896 = vmatprep.subr.mxu0 0.0
      %1897 = vmatpush1.msra.mxu0 0.0
      %1898 = vmatprep.subr.mxu0 0.0
      %1899 = vmatpush1.msra.mxu0 0.0
      %1900 = vmatprep.subr.mxu0 0.0
      %1901 = vmatpush1.msra.mxu0 0.0
      %1902 = vmatprep.subr.mxu0 0.0
      %1903 = vmatpush1.msra.mxu0 0.0
      %1904 = vmatprep.subr.mxu0 0.0
      %1905 = vmatpush1.msra.mxu0 0.0
      %1906 = vmatprep.subr.mxu0 0.0
      %1907 = vmatpush1.msra.mxu0 0.0
      %1908 = vmatprep.subr.mxu0 0.0
      %1909 = vmatpush1.msra.mxu0 0.0
      %1910 = vmatprep.subr.mxu0 0.0
      %1911 = vmatpush1.msra.mxu0 0.0
      %1912 = vmatprep.subr.mxu0 0.0
      %1913 = vmatpush1.msra.mxu0 0.0
      %1914 = vmatprep.mubr.f32.mxu0 0.0
      %1915 = vmatmul.mubr.f32.gmra.mrb[0].mxu0 %v1848
      %v1916 = vpop.f32.mrb[0].mxu0
      %v1917 = vadd.f32 0.0, %v1916
      %v1918 = vpop.f32.mrb[0].mxu0
      %1919 = vdwg.mxu0
      %s1920 = scalar_lea.vmem %s433, %s1744
      %1921 = vst.msk [vmem:[%s1920] sm:$0x3] %vm841, %v1917
      %s1922 = smul.u32 %s650, 7
      %s1923 = sadd.s32 %s648, %s1922
      %s1924 = smul.u32 %s1923, 2
      %s1925 = scalar_lea.vmem [#allocation4], %s1924
      %v1926 = vld [vmem:[%s1925] sm:$0x3]
      %v1928 = vsel %vm662, %v1917, 0
      %1930 = vmatprep.subr.mxu0 0.0
      %1931 = vmatpush1.msra.mxu0 %v651
      %1932 = vmatprep.subr.mxu0 0.0
      %1933 = vmatpush1.msra.mxu0 %v652
      %1934 = vmatprep.subr.mxu0 0.0
      %1935 = vmatpush1.msra.mxu0 0.0
      %1936 = vmatprep.subr.mxu0 0.0
      %1937 = vmatpush1.msra.mxu0 0.0
      %1938 = vmatprep.subr.mxu0 0.0
      %1939 = vmatpush1.msra.mxu0 0.0
      %1940 = vmatprep.subr.mxu0 0.0
      %1941 = vmatpush1.msra.mxu0 0.0
      %1942 = vmatprep.subr.mxu0 0.0
      %1943 = vmatpush1.msra.mxu0 0.0
      %1944 = vmatprep.subr.mxu0 0.0
      %1945 = vmatpush1.msra.mxu0 0.0
      %1946 = vmatprep.subr.mxu0 0.0
      %1947 = vmatpush1.msra.mxu0 0.0
      %1948 = vmatprep.subr.mxu0 0.0
      %1949 = vmatpush1.msra.mxu0 0.0
      %1950 = vmatprep.subr.mxu0 0.0
      %1951 = vmatpush1.msra.mxu0 0.0
      %1952 = vmatprep.subr.mxu0 0.0
      %1953 = vmatpush1.msra.mxu0 0.0
      %1954 = vmatprep.subr.mxu0 0.0
      %1955 = vmatpush1.msra.mxu0 0.0
      %1956 = vmatprep.subr.mxu0 0.0
      %1957 = vmatpush1.msra.mxu0 0.0
      %1958 = vmatprep.subr.mxu0 0.0
      %1959 = vmatpush1.msra.mxu0 0.0
      %1960 = vmatprep.subr.mxu0 0.0
      %1961 = vmatpush1.msra.mxu0 0.0
      %1962 = vmatprep.subr.mxu0 0.0
      %1963 = vmatpush1.msra.mxu0 0.0
      %1964 = vmatprep.subr.mxu0 0.0
      %1965 = vmatpush1.msra.mxu0 0.0
      %1966 = vmatprep.subr.mxu0 0.0
      %1967 = vmatpush1.msra.mxu0 0.0
      %1968 = vmatprep.subr.mxu0 0.0
      %1969 = vmatpush1.msra.mxu0 0.0
      %1970 = vmatprep.subr.mxu0 0.0
      %1971 = vmatpush1.msra.mxu0 0.0
      %1972 = vmatprep.subr.mxu0 0.0
      %1973 = vmatpush1.msra.mxu0 0.0
      %1974 = vmatprep.subr.mxu0 0.0
      %1975 = vmatpush1.msra.mxu0 0.0
      %1976 = vmatprep.subr.mxu0 0.0
      %1977 = vmatpush1.msra.mxu0 0.0
      %1978 = vmatprep.subr.mxu0 0.0
      %1979 = vmatpush1.msra.mxu0 0.0
      %1980 = vmatprep.subr.mxu0 0.0
      %1981 = vmatpush1.msra.mxu0 0.0
      %1982 = vmatprep.subr.mxu0 0.0
      %1983 = vmatpush1.msra.mxu0 0.0
      %1984 = vmatprep.subr.mxu0 0.0
      %1985 = vmatpush1.msra.mxu0 0.0
      %1986 = vmatprep.subr.mxu0 0.0
      %1987 = vmatpush1.msra.mxu0 0.0
      %1988 = vmatprep.subr.mxu0 0.0
      %1989 = vmatpush1.msra.mxu0 0.0
      %1990 = vmatprep.subr.mxu0 0.0
      %1991 = vmatpush1.msra.mxu0 0.0
      %1992 = vmatprep.subr.mxu0 0.0
      %1993 = vmatpush1.msra.mxu0 0.0
      %1994 = vmatprep.mubr.f32.mxu0 0.0
      %1995 = vmatmul.mubr.f32.gmra.mrb[0].mxu0 %v1928
      %v1996 = vpop.f32.mrb[0].mxu0
      %v1997 = vadd.f32 0.0, %v1996
      %v1998 = vpop.f32.mrb[0].mxu0
      %1999 = vdwg.mxu0
      %v2000 = vadd.f32 %v1926, %v1997
      %v2001 = vxor.u32 %v2000, 2147483648
      %v2002 = vmul.f32 %v2001, 1.442695
      %v2003 = vpow.pop %v2002
      %v2004 = vadd.f32 %v2003, 1.0
      %v2005 = vrcp.pop %v2004
      %v2006 = vmul.f32 1.0, %v2005
      %v2007 = vtanh.pop %v2000
      %v2008 = vmul.f32 %v2006, %v1838
      %2010 = vrot.lane.b32.xlu0 %v2007, 32
      %v2011 = vpop.permute.xlu0 %2010
      %v2013 = vmul.f32 %v2006, %v2011
      %2015 = vrot.lane.b32.xlu0 %v2013, 32
      %v2016 = vpop.permute.xlu0 %2015
      %v2018 = vadd.f32 %v2008, %v2016
      %v2019 = vtanh.pop %v2018
      %2021 = vrot.lane.b32.xlu0 %v2019, 32
      %v2022 = vpop.permute.xlu0 %2021
      %v2024 = vmul.f32 %v2006, %v2022
      %2026 = vrot.lane.b32.xlu0 %v2024, 64
      %v2027 = vpop.permute.xlu0 %2026
      %v2028 = vsel %vm516, %v2027, 0
      %2030 = vmatprep.subr.mxu0 0.0
      %2031 = vmatpush1.msra.mxu0 %v653
      %2032 = vmatprep.subr.mxu0 0.0
      %2033 = vmatpush1.msra.mxu0 %v654
      %2034 = vmatprep.subr.mxu0 0.0
      %2035 = vmatpush1.msra.mxu0 %v655
      %2036 = vmatprep.subr.mxu0 0.0
      %2037 = vmatpush1.msra.mxu0 %v656
      %2038 = vmatprep.subr.mxu0 0.0
      %2039 = vmatpush1.msra.mxu0 0.0
      %2040 = vmatprep.subr.mxu0 0.0
      %2041 = vmatpush1.msra.mxu0 0.0
      %2042 = vmatprep.subr.mxu0 0.0
      %2043 = vmatpush1.msra.mxu0 0.0
      %2044 = vmatprep.subr.mxu0 0.0
      %2045 = vmatpush1.msra.mxu0 0.0
      %2046 = vmatprep.subr.mxu0 0.0
      %2047 = vmatpush1.msra.mxu0 0.0
      %2048 = vmatprep.subr.mxu0 0.0
      %2049 = vmatpush1.msra.mxu0 0.0
      %2050 = vmatprep.subr.mxu0 0.0
      %2051 = vmatpush1.msra.mxu0 0.0
      %2052 = vmatprep.subr.mxu0 0.0
      %2053 = vmatpush1.msra.mxu0 0.0
      %2054 = vmatprep.subr.mxu0 0.0
      %2055 = vmatpush1.msra.mxu0 0.0
      %2056 = vmatprep.subr.mxu0 0.0
      %2057 = vmatpush1.msra.mxu0 0.0
      %2058 = vmatprep.subr.mxu0 0.0
      %2059 = vmatpush1.msra.mxu0 0.0
      %2060 = vmatprep.subr.mxu0 0.0
      %2061 = vmatpush1.msra.mxu0 0.0
      %2062 = vmatprep.subr.mxu0 0.0
      %2063 = vmatpush1.msra.mxu0 0.0
      %2064 = vmatprep.subr.mxu0 0.0
      %2065 = vmatpush1.msra.mxu0 0.0
      %2066 = vmatprep.subr.mxu0 0.0
      %2067 = vmatpush1.msra.mxu0 0.0
      %2068 = vmatprep.subr.mxu0 0.0
      %2069 = vmatpush1.msra.mxu0 0.0
      %2070 = vmatprep.subr.mxu0 0.0
      %2071 = vmatpush1.msra.mxu0 0.0
      %2072 = vmatprep.subr.mxu0 0.0
      %2073 = vmatpush1.msra.mxu0 0.0
      %2074 = vmatprep.subr.mxu0 0.0
      %2075 = vmatpush1.msra.mxu0 0.0
      %2076 = vmatprep.subr.mxu0 0.0
      %2077 = vmatpush1.msra.mxu0 0.0
      %2078 = vmatprep.subr.mxu0 0.0
      %2079 = vmatpush1.msra.mxu0 0.0
      %2080 = vmatprep.subr.mxu0 0.0
      %2081 = vmatpush1.msra.mxu0 0.0
      %2082 = vmatprep.subr.mxu0 0.0
      %2083 = vmatpush1.msra.mxu0 0.0
      %2084 = vmatprep.subr.mxu0 0.0
      %2085 = vmatpush1.msra.mxu0 0.0
      %2086 = vmatprep.subr.mxu0 0.0
      %2087 = vmatpush1.msra.mxu0 0.0
      %2088 = vmatprep.subr.mxu0 0.0
      %2089 = vmatpush1.msra.mxu0 0.0
      %2090 = vmatprep.subr.mxu0 0.0
      %2091 = vmatpush1.msra.mxu0 0.0
      %2092 = vmatprep.subr.mxu0 0.0
      %2093 = vmatpush1.msra.mxu0 0.0
      %2094 = vmatprep.mubr.f32.mxu0 0.0
      %2095 = vmatmul.mubr.f32.gmra.mrb[0].mxu0 %v2028
      %v2096 = vpop.f32.mrb[0].mxu0
      %v2097 = vadd.f32 0.0, %v2096
      %v2098 = vpop.f32.mrb[0].mxu0
      %2099 = vdwg.mxu0
      %s2100 = scalar_lea.vmem %s433, %s1924
      %2101 = vst.msk [vmem:[%s2100] sm:$0x3] %vm841, %v2097
      %2102 = vst.msk [vmem:[#allocation2] sm:$0x3] %vm841, %v2097
      %2104 = vrot.lane.b32.xlu0 %v2018, 96
      %v2105 = vpop.permute.xlu0 %2104
      %vm2107 = vcmask 254976
      %2108 = vst.msk [vmem:[#allocation3] sm:$0x3] %vm2107, %v2105
      // Predicated region
      $region45: #{audio_encoder_forward.5} parent=39 // pred_check
        %p2109 = pneg %p447
      $region46: #{audio_encoder_forward.5} parent=39 // pred_check_branch
        %2111 = sbr.rel (%p2109) target = $region48
      $region47: #{audio_encoder_forward.5} parent=39 // pred_region
        %2112 = vst.msk [vmem:[%s442] sm:$0x3] %vm841, %v2097
        %2113 = vst.msk [vmem:[%s446] sm:$0x3] %vm2107, %v2105
      $region48: #{audio_encoder_forward.5} parent=39 // pred_fallthru
        _
      %s2114 = smul.u32 %s24, 2
      %s2115 = ssub.s32 0, %s2114
      %s2116 = smul.u32 %s23, %s2115
      %s2117 = sadd.s32 %s24, %s2116
      %s2118 = smul.u32 8, %s2117
      %p2119 = scmp.lt.s32.totalorder %s23, 1
      %s2120 = scalar_select %p2119, %s23, 1
      %p2121 = scmp.lt.s32.totalorder %s2118, 7
      %s2122 = scalar_select %p2121, %s2118, 7
      %s2123 = smul.addr %s2120, 8
      %s2124 = sadd.s32 %s2122, %s2123
      %s2125 = smul.addr %s2124, 2
      %s2126 = scalar_lea.vmem %s5, %s2125
      %p2127 = scmp.lt.s32.totalorder %s23, 1
      %s2128 = scalar_select %p2127, %s23, 1
      %s2129 = smul.addr %s2128, 2
      %s2130 = scalar_lea.vmem %s6, %s2129
      %p2131 = scmp.lt.s32.totalorder %s23, 1
      %s2132 = scalar_select %p2131, %s23, 1
      %s2133 = smul.addr %s2132, 2
      %s2134 = scalar_lea.vmem %s7, %s2133
      // Predicated region
      $region49: #{audio_encoder_forward.5} parent=39 // pred_check
        %p2135 = pneg %p197
      $region50: #{audio_encoder_forward.5} parent=39 // pred_check_branch
        %2137 = sbr.rel (%p2135) target = $region52
      $region51: #{audio_encoder_forward.5} parent=39 // pred_region
        %s2138 = smul.u32 %s24, 2
        %s2139 = ssub.s32 0, %s2138
        %s2140 = smul.u32 %s23, %s2139
        %s2141 = sadd.s32 %s24, %s2140
        %s2142 = smul.u32 8, %s2141
      $region52: #{audio_encoder_forward.5} parent=39 // pred_fallthru
        _
      // Predicated region
      $region53: #{audio_encoder_forward.5} parent=39 // pred_check
        %p2143 = pneg %p223
      $region54: #{audio_encoder_forward.5} parent=39 // pred_check_branch
        %2145 = sbr.rel (%p2143) target = $region56
      $region55: #{audio_encoder_forward.5} parent=39 // pred_region
        _
      $region56: #{audio_encoder_forward.5} parent=39 // pred_fallthru
        _
      // Predicated region
      $region57: #{audio_encoder_forward.5} parent=39 // pred_check
        %p2146 = pneg %p249
      $region58: #{audio_encoder_forward.5} parent=39 // pred_check_branch
        %2148 = sbr.rel (%p2146) target = $region60
      $region59: #{audio_encoder_forward.5} parent=39 // pred_region
        _
      $region60: #{audio_encoder_forward.5} parent=39 // pred_fallthru
        _
    $region40: #{audio_encoder_forward.5} parent=5 // pred_fallthru
      _
    %p2149 = scmp.le.s32.totalorder 2, %s14
    // Predicated region
    $region61: #{audio_encoder_forward.5} parent=5 // pred_check
      %p2150 = pneg %p2149
    $region62: #{audio_encoder_forward.5} parent=5 // pred_check_branch
      %2152 = sbr.rel (%p2150) target = $region64
    $region63: #{audio_encoder_forward.5} parent=5 // pred_region
      %s2153 = ssub.s32 %s14, 2
      // Predicated region
      $region65: #{audio_encoder_forward.5} parent=63 // pred_check
        %p2154 = pneg %p203
      $region66: #{audio_encoder_forward.5} parent=63 // pred_check_branch
        %2156 = sbr.rel (%p2154) target = $region68
      $region67: #{audio_encoder_forward.5} parent=63 // pred_region
        %s2157 = smul.u32 %s26, 2
        %s2158 = ssub.s32 0, %s2157
        %s2159 = smul.u32 %s25, %s2158
        %s2160 = sadd.s32 %s26, %s2159
        %s2161 = smul.u32 8, %s2160
        %p2162 = scmp.lt.s32.totalorder %s25, 1
        %s2163 = scalar_select %p2162, %s25, 1
        %p2164 = scmp.lt.s32.totalorder %s2161, 7
        %s2165 = scalar_select %p2164, %s2161, 7
        %s2166 = smul.addr %s2163, 8
        %s2167 = sadd.s32 %s2165, %s2166
        %s2168 = smul.addr %s2167, 2
        %s2169 = scalar_lea.vmem %s5, %s2168
      $region68: #{audio_encoder_forward.5} parent=63 // pred_fallthru
        _
      // Predicated region
      $region69: #{audio_encoder_forward.5} parent=63 // pred_check
        %p2170 = pneg %p229
      $region70: #{audio_encoder_forward.5} parent=63 // pred_check_branch
        %2172 = sbr.rel (%p2170) target = $region72
      $region71: #{audio_encoder_forward.5} parent=63 // pred_region
        %p2173 = scmp.lt.s32.totalorder %s25, 1
        %s2174 = scalar_select %p2173, %s25, 1
        %s2175 = smul.addr %s2174, 2
        %s2176 = scalar_lea.vmem %s6, %s2175
      $region72: #{audio_encoder_forward.5} parent=63 // pred_fallthru
        _
      // Predicated region
      $region73: #{audio_encoder_forward.5} parent=63 // pred_check
        %p2177 = pneg %p255
      $region74: #{audio_encoder_forward.5} parent=63 // pred_check_branch
        %2179 = sbr.rel (%p2177) target = $region76
      $region75: #{audio_encoder_forward.5} parent=63 // pred_region
        %p2180 = scmp.lt.s32.totalorder %s25, 1
        %s2181 = scalar_select %p2180, %s25, 1
        %s2182 = smul.addr %s2181, 2
        %s2183 = scalar_lea.vmem %s7, %s2182
      $region76: #{audio_encoder_forward.5} parent=63 // pred_fallthru
        _
    $region64: #{audio_encoder_forward.5} parent=5 // pred_fallthru
      _
  $region6: #{audio_encoder_forward.5} parent=0 // loop_footer
    %s18 = sadd.s32 1, %s14
  $region7: #{audio_encoder_forward.5} parent=0 // loop_footer_branch
    %13 = sbr.rel target = $region3
  $region8: #{audio_encoder_forward.5} parent=0 // loop_exit
    _

</llo_original>
